<compile_context>
chip_gen: v7x
topology: tpu7x:2x2x1
jax: 0.10.0
libtpu: 0.0.40
codegen_flags: <defaults>
</compile_context>

<pallas_src>
import jax
import jax.numpy as jnp
from jax.experimental import pallas as pl
from jax.experimental.pallas import tpu as pltpu

N_HIDDEN_LAYERS = 8   # linear2 .. linear9 (all H -> H)
LANE = 128            # TPU lane width; feature dims padded to this


def _round_up(x, m):
    return ((x + m - 1) // m) * m


def mlp_kernel(x_ref, w1_ref, b1_ref, wh_ref, bh_ref, w10_ref, b10_ref, o_ref):
    """One batch tile through all 10 layers; weights stay resident in VMEM."""
    cdt = w1_ref.dtype  # MXU operand dtype (bfloat16 by default)

    # Layer 1: D_in -> H, bias + ReLU (dropout = identity in eval mode).
    h = jnp.dot(x_ref[...], w1_ref[...], preferred_element_type=jnp.float32)
    h = jnp.maximum(h + b1_ref[...], 0.0).astype(cdt)

    # Layers 2..9: H -> H, bias + ReLU.  Static unroll -> 8 MXU calls.
    for i in range(N_HIDDEN_LAYERS):
        h = jnp.dot(h, wh_ref[i], preferred_element_type=jnp.float32)
        h = jnp.maximum(h + bh_ref[i], 0.0).astype(cdt)

    # Layer 10: H -> D_out, no activation.  Output store is lane-dense (D_out padded).
    y = jnp.dot(h, w10_ref[...], preferred_element_type=jnp.float32)
    o_ref[...] = (y + b10_ref[...]).astype(o_ref.dtype)


def ten_layer_net(x, params, *, tile_b=256, compute_dtype=jnp.bfloat16):
    """x: [B, D_in] float32.  params: dict of transposed weights [in, out] and biases [1, out]."""
    B, D_in = x.shape
    H = params["w1"].shape[1]
    D_out = params["w10"].shape[1]

    # Lane-dense padding of every feature dim, batch padded to the tile.
    D_in_p = _round_up(D_in, LANE)
    H_p = _round_up(H, LANE)
    D_out_p = _round_up(D_out, LANE)
    B_p = _round_up(B, tile_b)

    def pad_to(a, shape):
        return jnp.pad(a, [(0, t - s) for s, t in zip(a.shape, shape)])

    x_p = pad_to(x, (B_p, D_in_p)).astype(compute_dtype)
    w1 = pad_to(params["w1"], (D_in_p, H_p)).astype(compute_dtype)
    b1 = pad_to(params["b1"], (1, H_p)).astype(jnp.float32)
    wh = pad_to(params["wh"], (N_HIDDEN_LAYERS, H_p, H_p)).astype(compute_dtype)
    bh = pad_to(params["bh"], (N_HIDDEN_LAYERS, 1, H_p)).astype(jnp.float32)
    w10 = pad_to(params["w10"], (H_p, D_out_p)).astype(compute_dtype)
    b10 = pad_to(params["b10"], (1, D_out_p)).astype(jnp.float32)

    # VMEM budget: weights single-buffered (Buffered(1)), x/out tiles double-buffered,
    # plus f32 hidden-activation temporaries.
    itemsize_c = jnp.dtype(compute_dtype).itemsize
    weight_bytes = ((D_in_p * H_p + N_HIDDEN_LAYERS * H_p * H_p + H_p * D_out_p) * itemsize_c
                    + ((1 + N_HIDDEN_LAYERS) * H_p + D_out_p) * 4)
    io_bytes = 2 * tile_b * D_in_p * itemsize_c + 2 * tile_b * D_out_p * 4
    act_bytes = 2 * tile_b * H_p * 4
    vmem_est = weight_bytes + io_bytes + act_bytes
    vmem_limit = int(min(64 * 2**20, max(32 * 2**20, 2 * vmem_est)))

    flops = 2 * B_p * (D_in_p * H_p + N_HIDDEN_LAYERS * H_p * H_p + H_p * D_out_p)
    bytes_accessed = int(x_p.size * itemsize_c + weight_bytes + B_p * D_out_p * 4)
    cost = pl.CostEstimate(flops=flops, transcendentals=0, bytes_accessed=bytes_accessed)

    # Constant-index (resident) operands: no double-buffering needed.
    resident = dict(pipeline_mode=pl.Buffered(1))

    grid = (B_p // tile_b,)
    out_p = pl.pallas_call(
        mlp_kernel,
        out_shape=jax.ShapeDtypeStruct((B_p, D_out_p), jnp.float32),
        grid_spec=pltpu.PrefetchScalarGridSpec(
            num_scalar_prefetch=0,
            grid=grid,
            in_specs=[
                pl.BlockSpec((tile_b, D_in_p), lambda i: (i, 0)),                             # x tile
                pl.BlockSpec((D_in_p, H_p), lambda i: (0, 0), **resident),                    # w1
                pl.BlockSpec((1, H_p), lambda i: (0, 0), **resident),                         # b1
                pl.BlockSpec((N_HIDDEN_LAYERS, H_p, H_p), lambda i: (0, 0, 0), **resident),   # w2..w9
                pl.BlockSpec((N_HIDDEN_LAYERS, 1, H_p), lambda i: (0, 0, 0), **resident),     # b2..b9
                pl.BlockSpec((H_p, D_out_p), lambda i: (0, 0), **resident),                   # w10
                pl.BlockSpec((1, D_out_p), lambda i: (0, 0), **resident),                     # b10
            ],
            out_specs=pl.BlockSpec((tile_b, D_out_p), lambda i: (i, 0)),
        ),
        compiler_params=pltpu.CompilerParams(
            dimension_semantics=("parallel",),
            vmem_limit_bytes=vmem_limit,
        ),
        cost_estimate=cost,
    )(x_p, w1, b1, wh, bh, w10, b10)

    # Strip batch and lane padding.
    return out_p[:B, :D_out]


def init_params(key, D_in, H, D_out):
    """Deterministic PyTorch-Linear-style init: U(-1/sqrt(fan_in), 1/sqrt(fan_in))."""
    ks = jax.random.split(key, 6)

    def u(k, shape, fan_in):
        bound = 1.0 / jnp.sqrt(jnp.float32(fan_in))
        return jax.random.uniform(k, shape, jnp.float32, -bound, bound)

    return {
        "w1":  u(ks[0], (D_in, H), D_in),
        "b1":  u(ks[1], (1, H), D_in),
        "wh":  u(ks[2], (N_HIDDEN_LAYERS, H, H), H),
        "bh":  u(ks[3], (N_HIDDEN_LAYERS, 1, H), H),
        "w10": u(ks[4], (H, D_out), H),
        "b10": u(ks[5], (1, D_out), H),
    }


def reference_forward(x, p, compute_dtype=jnp.bfloat16):
    """Pure-JAX reference with the same bf16-operand / f32-accumulate math as the kernel."""
    cdt = compute_dtype
    h = jnp.dot(x.astype(cdt), p["w1"].astype(cdt), preferred_element_type=jnp.float32)
    h = jnp.maximum(h + p["b1"], 0.0)
    for i in range(N_HIDDEN_LAYERS):
        h = jnp.dot(h.astype(cdt), p["wh"][i].astype(cdt), preferred_element_type=jnp.float32)
        h = jnp.maximum(h + p["bh"][i], 0.0)
    y = jnp.dot(h.astype(cdt), p["w10"].astype(cdt), preferred_element_type=jnp.float32)
    return y + p["b10"]


if __name__ == "__main__":
    # Small shapes consistent with the module (D_in features -> H hidden -> D_out classes).
    B, D_in, H, D_out = 8, 16, 32, 4

    key = jax.random.PRNGKey(0)
    kx, kp = jax.random.split(key)
    x = jax.random.normal(kx, (B, D_in), jnp.float32)
    params = init_params(kp, D_in, H, D_out)

    y = ten_layer_net(x, params)
    y = jax.block_until_ready(y)

    y_ref = reference_forward(x, params)
    assert y.shape == (B, D_out)
    assert jnp.allclose(y, y_ref, atol=1e-2, rtol=1e-2), "mismatch vs JAX reference"

    print("KERNEL_OK")
</pallas_src>

<mosaic_0001>
module attributes {stable_mosaic.version = 11 : i64} {
  func.func @mlp_kernel(%arg0: i32, %arg1: memref<256x128xbf16, #tpu.memory_space<vmem>>, %arg2: memref<128x128xbf16, #tpu.memory_space<vmem>>, %arg3: memref<1x128xf32, #tpu.memory_space<vmem>>, %arg4: memref<8x128x128xbf16, #tpu.memory_space<vmem>>, %arg5: memref<8x1x128xf32, #tpu.memory_space<vmem>>, %arg6: memref<128x128xbf16, #tpu.memory_space<vmem>>, %arg7: memref<1x128xf32, #tpu.memory_space<vmem>>, %arg8: memref<256x128xf32, #tpu.memory_space<vmem>>) attributes {dimension_semantics = [#tpu.dimension_semantics<parallel>], iteration_bounds = array<i64: 1>, scalar_prefetch = 0 : i64, scratch_operands = 0 : i64, tpu.core_type = #tpu.core_type<tc>, window_params = [{transform_indices = @transform_0, window_bounds = array<i64: 256, 128>}, {pipeline_mode = #tpu.pipeline_mode<synchronous>, transform_indices = @transform_1, window_bounds = array<i64: 128, 128>}, {pipeline_mode = #tpu.pipeline_mode<synchronous>, transform_indices = @transform_2, window_bounds = array<i64: 1, 128>}, {pipeline_mode = #tpu.pipeline_mode<synchronous>, transform_indices = @transform_3, window_bounds = array<i64: 8, 128, 128>}, {pipeline_mode = #tpu.pipeline_mode<synchronous>, transform_indices = @transform_4, window_bounds = array<i64: 8, 1, 128>}, {pipeline_mode = #tpu.pipeline_mode<synchronous>, transform_indices = @transform_5, window_bounds = array<i64: 128, 128>}, {pipeline_mode = #tpu.pipeline_mode<synchronous>, transform_indices = @transform_6, window_bounds = array<i64: 1, 128>}, {transform_indices = @transform_7, window_bounds = array<i64: 256, 128>}]} {
    %c0 = arith.constant 0 : index
    %c0_0 = arith.constant 0 : index
    %0 = vector.load %arg1[%c0, %c0_0] : memref<256x128xbf16, #tpu.memory_space<vmem>>, vector<256x128xbf16>
    %c0_1 = arith.constant 0 : index
    %c0_2 = arith.constant 0 : index
    %1 = vector.load %arg2[%c0_1, %c0_2] : memref<128x128xbf16, #tpu.memory_space<vmem>>, vector<128x128xbf16>
    %cst = arith.constant dense<0.000000e+00> : vector<256x128xf32>
    %2 = tpu.matmul %0, %1, %cst {dimension_numbers = #tpu.dot_dimension_numbers<[1], [0], [0], [1], [0, 0, 1, 1], [], []>} : vector<256x128xbf16>, vector<128x128xbf16>, vector<256x128xf32> -> vector<256x128xf32>
    %c0_3 = arith.constant 0 : index
    %c0_4 = arith.constant 0 : index
    %3 = vector.load %arg3[%c0_3, %c0_4] : memref<1x128xf32, #tpu.memory_space<vmem>>, vector<1x128xf32>
    %4 = vector.broadcast %3 : vector<1x128xf32> to vector<256x128xf32>
    %5 = arith.addf %2, %4 : vector<256x128xf32>
    %cst_5 = arith.constant 0.000000e+00 : f32
    %6 = vector.broadcast %cst_5 : f32 to vector<256x128xf32>
    %7 = arith.maximumf %5, %6 : vector<256x128xf32>
    %8 = arith.truncf %7 : vector<256x128xf32> to vector<256x128xbf16>
    %c0_6 = arith.constant 0 : index
    %c0_7 = arith.constant 0 : index
    %c0_8 = arith.constant 0 : index
    %9 = vector.load %arg4[%c0_6, %c0_7, %c0_8] : memref<8x128x128xbf16, #tpu.memory_space<vmem>>, vector<1x128x128xbf16>
    %10 = vector.shape_cast %9 : vector<1x128x128xbf16> to vector<128x128xbf16>
    %cst_9 = arith.constant dense<0.000000e+00> : vector<256x128xf32>
    %11 = tpu.matmul %8, %10, %cst_9 {dimension_numbers = #tpu.dot_dimension_numbers<[1], [0], [0], [1], [0, 0, 1, 1], [], []>} : vector<256x128xbf16>, vector<128x128xbf16>, vector<256x128xf32> -> vector<256x128xf32>
    %c0_10 = arith.constant 0 : index
    %c0_11 = arith.constant 0 : index
    %c0_12 = arith.constant 0 : index
    %12 = vector.load %arg5[%c0_10, %c0_11, %c0_12] : memref<8x1x128xf32, #tpu.memory_space<vmem>>, vector<1x1x128xf32>
    %13 = vector.shape_cast %12 : vector<1x1x128xf32> to vector<1x128xf32>
    %14 = vector.broadcast %13 : vector<1x128xf32> to vector<256x128xf32>
    %15 = arith.addf %11, %14 : vector<256x128xf32>
    %cst_13 = arith.constant 0.000000e+00 : f32
    %16 = vector.broadcast %cst_13 : f32 to vector<256x128xf32>
    %17 = arith.maximumf %15, %16 : vector<256x128xf32>
    %18 = arith.truncf %17 : vector<256x128xf32> to vector<256x128xbf16>
    %c1 = arith.constant 1 : index
    %c0_14 = arith.constant 0 : index
    %c0_15 = arith.constant 0 : index
    %19 = vector.load %arg4[%c1, %c0_14, %c0_15] : memref<8x128x128xbf16, #tpu.memory_space<vmem>>, vector<1x128x128xbf16>
    %20 = vector.shape_cast %19 : vector<1x128x128xbf16> to vector<128x128xbf16>
    %cst_16 = arith.constant dense<0.000000e+00> : vector<256x128xf32>
    %21 = tpu.matmul %18, %20, %cst_16 {dimension_numbers = #tpu.dot_dimension_numbers<[1], [0], [0], [1], [0, 0, 1, 1], [], []>} : vector<256x128xbf16>, vector<128x128xbf16>, vector<256x128xf32> -> vector<256x128xf32>
    %c1_17 = arith.constant 1 : index
    %c0_18 = arith.constant 0 : index
    %c0_19 = arith.constant 0 : index
    %22 = vector.load %arg5[%c1_17, %c0_18, %c0_19] : memref<8x1x128xf32, #tpu.memory_space<vmem>>, vector<1x1x128xf32>
    %23 = vector.shape_cast %22 : vector<1x1x128xf32> to vector<1x128xf32>
    %24 = vector.broadcast %23 : vector<1x128xf32> to vector<256x128xf32>
    %25 = arith.addf %21, %24 : vector<256x128xf32>
    %cst_20 = arith.constant 0.000000e+00 : f32
    %26 = vector.broadcast %cst_20 : f32 to vector<256x128xf32>
    %27 = arith.maximumf %25, %26 : vector<256x128xf32>
    %28 = arith.truncf %27 : vector<256x128xf32> to vector<256x128xbf16>
    %c2 = arith.constant 2 : index
    %c0_21 = arith.constant 0 : index
    %c0_22 = arith.constant 0 : index
    %29 = vector.load %arg4[%c2, %c0_21, %c0_22] : memref<8x128x128xbf16, #tpu.memory_space<vmem>>, vector<1x128x128xbf16>
    %30 = vector.shape_cast %29 : vector<1x128x128xbf16> to vector<128x128xbf16>
    %cst_23 = arith.constant dense<0.000000e+00> : vector<256x128xf32>
    %31 = tpu.matmul %28, %30, %cst_23 {dimension_numbers = #tpu.dot_dimension_numbers<[1], [0], [0], [1], [0, 0, 1, 1], [], []>} : vector<256x128xbf16>, vector<128x128xbf16>, vector<256x128xf32> -> vector<256x128xf32>
    %c2_24 = arith.constant 2 : index
    %c0_25 = arith.constant 0 : index
    %c0_26 = arith.constant 0 : index
    %32 = vector.load %arg5[%c2_24, %c0_25, %c0_26] : memref<8x1x128xf32, #tpu.memory_space<vmem>>, vector<1x1x128xf32>
    %33 = vector.shape_cast %32 : vector<1x1x128xf32> to vector<1x128xf32>
    %34 = vector.broadcast %33 : vector<1x128xf32> to vector<256x128xf32>
    %35 = arith.addf %31, %34 : vector<256x128xf32>
    %cst_27 = arith.constant 0.000000e+00 : f32
    %36 = vector.broadcast %cst_27 : f32 to vector<256x128xf32>
    %37 = arith.maximumf %35, %36 : vector<256x128xf32>
    %38 = arith.truncf %37 : vector<256x128xf32> to vector<256x128xbf16>
    %c3 = arith.constant 3 : index
    %c0_28 = arith.constant 0 : index
    %c0_29 = arith.constant 0 : index
    %39 = vector.load %arg4[%c3, %c0_28, %c0_29] : memref<8x128x128xbf16, #tpu.memory_space<vmem>>, vector<1x128x128xbf16>
    %40 = vector.shape_cast %39 : vector<1x128x128xbf16> to vector<128x128xbf16>
    %cst_30 = arith.constant dense<0.000000e+00> : vector<256x128xf32>
    %41 = tpu.matmul %38, %40, %cst_30 {dimension_numbers = #tpu.dot_dimension_numbers<[1], [0], [0], [1], [0, 0, 1, 1], [], []>} : vector<256x128xbf16>, vector<128x128xbf16>, vector<256x128xf32> -> vector<256x128xf32>
    %c3_31 = arith.constant 3 : index
    %c0_32 = arith.constant 0 : index
    %c0_33 = arith.constant 0 : index
    %42 = vector.load %arg5[%c3_31, %c0_32, %c0_33] : memref<8x1x128xf32, #tpu.memory_space<vmem>>, vector<1x1x128xf32>
    %43 = vector.shape_cast %42 : vector<1x1x128xf32> to vector<1x128xf32>
    %44 = vector.broadcast %43 : vector<1x128xf32> to vector<256x128xf32>
    %45 = arith.addf %41, %44 : vector<256x128xf32>
    %cst_34 = arith.constant 0.000000e+00 : f32
    %46 = vector.broadcast %cst_34 : f32 to vector<256x128xf32>
    %47 = arith.maximumf %45, %46 : vector<256x128xf32>
    %48 = arith.truncf %47 : vector<256x128xf32> to vector<256x128xbf16>
    %c4 = arith.constant 4 : index
    %c0_35 = arith.constant 0 : index
    %c0_36 = arith.constant 0 : index
    %49 = vector.load %arg4[%c4, %c0_35, %c0_36] : memref<8x128x128xbf16, #tpu.memory_space<vmem>>, vector<1x128x128xbf16>
    %50 = vector.shape_cast %49 : vector<1x128x128xbf16> to vector<128x128xbf16>
    %cst_37 = arith.constant dense<0.000000e+00> : vector<256x128xf32>
    %51 = tpu.matmul %48, %50, %cst_37 {dimension_numbers = #tpu.dot_dimension_numbers<[1], [0], [0], [1], [0, 0, 1, 1], [], []>} : vector<256x128xbf16>, vector<128x128xbf16>, vector<256x128xf32> -> vector<256x128xf32>
    %c4_38 = arith.constant 4 : index
    %c0_39 = arith.constant 0 : index
    %c0_40 = arith.constant 0 : index
    %52 = vector.load %arg5[%c4_38, %c0_39, %c0_40] : memref<8x1x128xf32, #tpu.memory_space<vmem>>, vector<1x1x128xf32>
    %53 = vector.shape_cast %52 : vector<1x1x128xf32> to vector<1x128xf32>
    %54 = vector.broadcast %53 : vector<1x128xf32> to vector<256x128xf32>
    %55 = arith.addf %51, %54 : vector<256x128xf32>
    %cst_41 = arith.constant 0.000000e+00 : f32
    %56 = vector.broadcast %cst_41 : f32 to vector<256x128xf32>
    %57 = arith.maximumf %55, %56 : vector<256x128xf32>
    %58 = arith.truncf %57 : vector<256x128xf32> to vector<256x128xbf16>
    %c5 = arith.constant 5 : index
    %c0_42 = arith.constant 0 : index
    %c0_43 = arith.constant 0 : index
    %59 = vector.load %arg4[%c5, %c0_42, %c0_43] : memref<8x128x128xbf16, #tpu.memory_space<vmem>>, vector<1x128x128xbf16>
    %60 = vector.shape_cast %59 : vector<1x128x128xbf16> to vector<128x128xbf16>
    %cst_44 = arith.constant dense<0.000000e+00> : vector<256x128xf32>
    %61 = tpu.matmul %58, %60, %cst_44 {dimension_numbers = #tpu.dot_dimension_numbers<[1], [0], [0], [1], [0, 0, 1, 1], [], []>} : vector<256x128xbf16>, vector<128x128xbf16>, vector<256x128xf32> -> vector<256x128xf32>
    %c5_45 = arith.constant 5 : index
    %c0_46 = arith.constant 0 : index
    %c0_47 = arith.constant 0 : index
    %62 = vector.load %arg5[%c5_45, %c0_46, %c0_47] : memref<8x1x128xf32, #tpu.memory_space<vmem>>, vector<1x1x128xf32>
    %63 = vector.shape_cast %62 : vector<1x1x128xf32> to vector<1x128xf32>
    %64 = vector.broadcast %63 : vector<1x128xf32> to vector<256x128xf32>
    %65 = arith.addf %61, %64 : vector<256x128xf32>
    %cst_48 = arith.constant 0.000000e+00 : f32
    %66 = vector.broadcast %cst_48 : f32 to vector<256x128xf32>
    %67 = arith.maximumf %65, %66 : vector<256x128xf32>
    %68 = arith.truncf %67 : vector<256x128xf32> to vector<256x128xbf16>
    %c6 = arith.constant 6 : index
    %c0_49 = arith.constant 0 : index
    %c0_50 = arith.constant 0 : index
    %69 = vector.load %arg4[%c6, %c0_49, %c0_50] : memref<8x128x128xbf16, #tpu.memory_space<vmem>>, vector<1x128x128xbf16>
    %70 = vector.shape_cast %69 : vector<1x128x128xbf16> to vector<128x128xbf16>
    %cst_51 = arith.constant dense<0.000000e+00> : vector<256x128xf32>
    %71 = tpu.matmul %68, %70, %cst_51 {dimension_numbers = #tpu.dot_dimension_numbers<[1], [0], [0], [1], [0, 0, 1, 1], [], []>} : vector<256x128xbf16>, vector<128x128xbf16>, vector<256x128xf32> -> vector<256x128xf32>
    %c6_52 = arith.constant 6 : index
    %c0_53 = arith.constant 0 : index
    %c0_54 = arith.constant 0 : index
    %72 = vector.load %arg5[%c6_52, %c0_53, %c0_54] : memref<8x1x128xf32, #tpu.memory_space<vmem>>, vector<1x1x128xf32>
    %73 = vector.shape_cast %72 : vector<1x1x128xf32> to vector<1x128xf32>
    %74 = vector.broadcast %73 : vector<1x128xf32> to vector<256x128xf32>
    %75 = arith.addf %71, %74 : vector<256x128xf32>
    %cst_55 = arith.constant 0.000000e+00 : f32
    %76 = vector.broadcast %cst_55 : f32 to vector<256x128xf32>
    %77 = arith.maximumf %75, %76 : vector<256x128xf32>
    %78 = arith.truncf %77 : vector<256x128xf32> to vector<256x128xbf16>
    %c7 = arith.constant 7 : index
    %c0_56 = arith.constant 0 : index
    %c0_57 = arith.constant 0 : index
    %79 = vector.load %arg4[%c7, %c0_56, %c0_57] : memref<8x128x128xbf16, #tpu.memory_space<vmem>>, vector<1x128x128xbf16>
    %80 = vector.shape_cast %79 : vector<1x128x128xbf16> to vector<128x128xbf16>
    %cst_58 = arith.constant dense<0.000000e+00> : vector<256x128xf32>
    %81 = tpu.matmul %78, %80, %cst_58 {dimension_numbers = #tpu.dot_dimension_numbers<[1], [0], [0], [1], [0, 0, 1, 1], [], []>} : vector<256x128xbf16>, vector<128x128xbf16>, vector<256x128xf32> -> vector<256x128xf32>
    %c7_59 = arith.constant 7 : index
    %c0_60 = arith.constant 0 : index
    %c0_61 = arith.constant 0 : index
    %82 = vector.load %arg5[%c7_59, %c0_60, %c0_61] : memref<8x1x128xf32, #tpu.memory_space<vmem>>, vector<1x1x128xf32>
    %83 = vector.shape_cast %82 : vector<1x1x128xf32> to vector<1x128xf32>
    %84 = vector.broadcast %83 : vector<1x128xf32> to vector<256x128xf32>
    %85 = arith.addf %81, %84 : vector<256x128xf32>
    %cst_62 = arith.constant 0.000000e+00 : f32
    %86 = vector.broadcast %cst_62 : f32 to vector<256x128xf32>
    %87 = arith.maximumf %85, %86 : vector<256x128xf32>
    %88 = arith.truncf %87 : vector<256x128xf32> to vector<256x128xbf16>
    %c0_63 = arith.constant 0 : index
    %c0_64 = arith.constant 0 : index
    %89 = vector.load %arg6[%c0_63, %c0_64] : memref<128x128xbf16, #tpu.memory_space<vmem>>, vector<128x128xbf16>
    %cst_65 = arith.constant dense<0.000000e+00> : vector<256x128xf32>
    %90 = tpu.matmul %88, %89, %cst_65 {dimension_numbers = #tpu.dot_dimension_numbers<[1], [0], [0], [1], [0, 0, 1, 1], [], []>} : vector<256x128xbf16>, vector<128x128xbf16>, vector<256x128xf32> -> vector<256x128xf32>
    %c0_66 = arith.constant 0 : index
    %c0_67 = arith.constant 0 : index
    %91 = vector.load %arg7[%c0_66, %c0_67] : memref<1x128xf32, #tpu.memory_space<vmem>>, vector<1x128xf32>
    %92 = vector.broadcast %91 : vector<1x128xf32> to vector<256x128xf32>
    %93 = arith.addf %90, %92 : vector<256x128xf32>
    %c0_68 = arith.constant 0 : index
    %c0_69 = arith.constant 0 : index
    %94 = vector.load %arg8[%c0_68, %c0_69] : memref<256x128xf32, #tpu.memory_space<vmem>>, vector<256x128xf32>
    tpu.vector_store %arg8[%c0_68, %c0_69], %93 {strides = array<i32>} : memref<256x128xf32, #tpu.memory_space<vmem>>, vector<256x128xf32>,
    return
  }
  func.func @transform_0(%arg0: i32) -> (i32, i32) {
    %c0_i32 = arith.constant 0 : i32
    %c0_i32_0 = arith.constant 0 : i32
    return %arg0, %c0_i32 : i32, i32
  }
  func.func @transform_1(%arg0: i32) -> (i32, i32) {
    %c0_i32 = arith.constant 0 : i32
    %c0_i32_0 = arith.constant 0 : i32
    %c0_i32_1 = arith.constant 0 : i32
    return %c0_i32, %c0_i32_0 : i32, i32
  }
  func.func @transform_2(%arg0: i32) -> (i32, i32) {
    %c0_i32 = arith.constant 0 : i32
    %c0_i32_0 = arith.constant 0 : i32
    %c0_i32_1 = arith.constant 0 : i32
    return %c0_i32, %c0_i32_0 : i32, i32
  }
  func.func @transform_3(%arg0: i32) -> (i32, i32, i32) {
    %c0_i32 = arith.constant 0 : i32
    %c0_i32_0 = arith.constant 0 : i32
    %c0_i32_1 = arith.constant 0 : i32
    %c0_i32_2 = arith.constant 0 : i32
    return %c0_i32, %c0_i32_0, %c0_i32_1 : i32, i32, i32
  }
  func.func @transform_4(%arg0: i32) -> (i32, i32, i32) {
    %c0_i32 = arith.constant 0 : i32
    %c0_i32_0 = arith.constant 0 : i32
    %c0_i32_1 = arith.constant 0 : i32
    %c0_i32_2 = arith.constant 0 : i32
    return %c0_i32, %c0_i32_0, %c0_i32_1 : i32, i32, i32
  }
  func.func @transform_5(%arg0: i32) -> (i32, i32) {
    %c0_i32 = arith.constant 0 : i32
    %c0_i32_0 = arith.constant 0 : i32
    %c0_i32_1 = arith.constant 0 : i32
    return %c0_i32, %c0_i32_0 : i32, i32
  }
  func.func @transform_6(%arg0: i32) -> (i32, i32) {
    %c0_i32 = arith.constant 0 : i32
    %c0_i32_0 = arith.constant 0 : i32
    %c0_i32_1 = arith.constant 0 : i32
    return %c0_i32, %c0_i32_0 : i32, i32
  }
  func.func @transform_7(%arg0: i32) -> (i32, i32) {
    %c0_i32 = arith.constant 0 : i32
    %c0_i32_0 = arith.constant 0 : i32
    return %arg0, %c0_i32 : i32, i32
  }
}

</mosaic_0001>

<llo_original>
// kernel: tpu_custom_call.1
$region0: #{tpu_custom_call.1}
  #allocation0 [shape = 'u32[]', space=smem, size = 0x4, offset = 0x4, fixed_abs, tag = 'smem constant byte address 0x4 - core index']
  #allocation1 [shape = 'u32[144,128]{1,0:T(1,128)}', space=vmem, size = 0x12000, scoped, tag = 'internal scratch']
  %s0 = inlined_call_operand.hbm [shape: bf16[256,128], index: 0, kind: input, shape index: {}]
  %s1 = inlined_call_operand.hbm [shape: bf16[128,128], index: 1, kind: input, shape index: {}]
  %s2 = inlined_call_operand.vmem [shape: f32[1,128], index: 2, kind: input, shape index: {}]
  %s3 = inlined_call_operand.hbm [shape: bf16[8,128,128], index: 3, kind: input, shape index: {}]
  %s4 = inlined_call_operand.vmem [shape: f32[8,1,128], index: 4, kind: input, shape index: {}]
  %s5 = inlined_call_operand.hbm [shape: bf16[128,128], index: 5, kind: input, shape index: {}]
  %s6 = inlined_call_operand.vmem [shape: f32[1,128], index: 6, kind: input, shape index: {}]
  %s7 = inlined_call_operand.hbm [shape: f32[256,128], index: 7, kind: output, shape index: {}]
  %s8 = sld [smem:[#allocation0]]
  $region54: #{tpu_custom_call.1} parent=0
    _
  %s10 = ssub.s32 1, %s8
  %s11 = scalar_select 0, %s10, %s8
  $region1: #{tpu_custom_call.1} parent=0
    #allocation2 [shape = 'u8[65536]{0}', space=vmem, size = 0x10000, scoped, tag = 'input window, operand 0, single buffered']
    #allocation3 [shape = 's32[1]{0}', space=sflag, size = 0x4, scoped, tag = 'scoped memory for tpu_custom_call.1']
    #allocation4 [shape = 's32[1]{0}', space=sflag, size = 0x4, scoped, tag = 'scoped memory for tpu_custom_call.1']
    #allocation5 [shape = 'u8[32768]{0}', space=vmem, size = 0x8000, scoped, tag = 'input window, operand 1, single buffered']
    #allocation6 [shape = 's32[1]{0}', space=sflag, size = 0x4, scoped, tag = 'scoped memory for tpu_custom_call.1']
    #allocation7 [shape = 'u8[262144]{0}', space=vmem, size = 0x40000, scoped, tag = 'input window, operand 3, single buffered']
    #allocation8 [shape = 'u8[32768]{0}', space=vmem, size = 0x8000, scoped, tag = 'input window, operand 5, single buffered']
    #allocation9 [shape = 's32[1]{0}', space=sflag, size = 0x4, scoped, tag = 'scoped memory for tpu_custom_call.1']
    #allocation10 [shape = 'u8[131072]{0}', space=vmem, size = 0x20000, scoped, tag = 'output window, operand 0, single buffered']
    %12 = vsyncpa [#allocation3], 0
    %13 = vsyncpa [#allocation6], 0
    %14 = vsyncpa [#allocation9], 0
    %15 = vsyncpa [#allocation4], 0
    // Predicated region
    $region2: #{tpu_custom_call.1} parent=1 // pred_check
      _
    $region3: #{tpu_custom_call.1} parent=1 // pred_check_branch
      %17 = sbr.rel (0) target = $region5
    $region4: #{tpu_custom_call.1} parent=1 // pred_region
      %s19 = ssub.s32 2048, 2048
      %20 = vsyncadd [#allocation3], %s19
      %s21 = sshll.u32 [#allocation2], 4
      %s22 = int_to_ptr.vmem [resolvable:$true] %s21
      %27 = dma.hbm_to_vmem [thread:$0]  %s0, 2048, %s22, [#allocation3], 64, 64, 4
    $region5: #{tpu_custom_call.1} parent=1 // pred_fallthru
      _
    // Predicated region
    $region6: #{tpu_custom_call.1} parent=1 // pred_check
      _
    $region7: #{tpu_custom_call.1} parent=1 // pred_check_branch
      %29 = sbr.rel (0) target = $region9
    $region8: #{tpu_custom_call.1} parent=1 // pred_region
      %s31 = ssub.s32 1024, 1024
      %32 = vsyncadd [#allocation6], %s31
      %s33 = sshll.u32 [#allocation5], 4
      %s34 = int_to_ptr.vmem [resolvable:$true] %s33
      %39 = dma.hbm_to_vmem [thread:$0]  %s1, 1024, %s34, [#allocation6], 64, 64, 4
    $region9: #{tpu_custom_call.1} parent=1 // pred_fallthru
      _
    // Predicated region
    $region10: #{tpu_custom_call.1} parent=1 // pred_check
      _
    $region11: #{tpu_custom_call.1} parent=1 // pred_check_branch
      %41 = sbr.rel (0) target = $region13
    $region12: #{tpu_custom_call.1} parent=1 // pred_region
      _
    $region13: #{tpu_custom_call.1} parent=1 // pred_fallthru
      _
    // Predicated region
    $region14: #{tpu_custom_call.1} parent=1 // pred_check
      _
    $region15: #{tpu_custom_call.1} parent=1 // pred_check_branch
      %43 = sbr.rel (0) target = $region17
    $region16: #{tpu_custom_call.1} parent=1 // pred_region
      %s45 = ssub.s32 8192, 8192
      %46 = vsyncadd [#allocation6], %s45
      %s47 = sshll.u32 [#allocation7], 4
      %s48 = int_to_ptr.vmem [resolvable:$true] %s47
      %53 = dma.hbm_to_vmem [thread:$0]  %s3, 8192, %s48, [#allocation6], 64, 64, 4
    $region17: #{tpu_custom_call.1} parent=1 // pred_fallthru
      _
    // Predicated region
    $region18: #{tpu_custom_call.1} parent=1 // pred_check
      _
    $region19: #{tpu_custom_call.1} parent=1 // pred_check_branch
      %55 = sbr.rel (0) target = $region21
    $region20: #{tpu_custom_call.1} parent=1 // pred_region
      _
    $region21: #{tpu_custom_call.1} parent=1 // pred_fallthru
      _
    // Predicated region
    $region22: #{tpu_custom_call.1} parent=1 // pred_check
      _
    $region23: #{tpu_custom_call.1} parent=1 // pred_check_branch
      %57 = sbr.rel (0) target = $region25
    $region24: #{tpu_custom_call.1} parent=1 // pred_region
      %s59 = ssub.s32 1024, 1024
      %60 = vsyncadd [#allocation9], %s59
      %s61 = sshll.u32 [#allocation8], 4
      %s62 = int_to_ptr.vmem [resolvable:$true] %s61
      %67 = dma.hbm_to_vmem [thread:$0]  %s5, 1024, %s62, [#allocation9], 64, 64, 4
    $region25: #{tpu_custom_call.1} parent=1 // pred_fallthru
      _
    // Predicated region
    $region26: #{tpu_custom_call.1} parent=1 // pred_check
      _
    $region27: #{tpu_custom_call.1} parent=1 // pred_check_branch
      %69 = sbr.rel (0) target = $region29
    $region28: #{tpu_custom_call.1} parent=1 // pred_region
      _
    $region29: #{tpu_custom_call.1} parent=1 // pred_fallthru
      _
    // Predicated region
    $region30: #{tpu_custom_call.1} parent=1 // pred_check
      _
    $region31: #{tpu_custom_call.1} parent=1 // pred_check_branch
      %71 = sbr.rel (0) target = $region33
    $region32: #{tpu_custom_call.1} parent=1 // pred_region
      %72 = dma.done [#allocation3], 2048
    $region33: #{tpu_custom_call.1} parent=1 // pred_fallthru
      _
    // Predicated region
    $region34: #{tpu_custom_call.1} parent=1 // pred_check
      _
    $region35: #{tpu_custom_call.1} parent=1 // pred_check_branch
      %74 = sbr.rel (0) target = $region37
    $region36: #{tpu_custom_call.1} parent=1 // pred_region
      %75 = dma.done [#allocation6], 1024
    $region37: #{tpu_custom_call.1} parent=1 // pred_fallthru
      _
    // Predicated region
    $region38: #{tpu_custom_call.1} parent=1 // pred_check
      _
    $region39: #{tpu_custom_call.1} parent=1 // pred_check_branch
      %77 = sbr.rel (0) target = $region41
    $region40: #{tpu_custom_call.1} parent=1 // pred_region
      %78 = dma.done [#allocation6], 8192
    $region41: #{tpu_custom_call.1} parent=1 // pred_fallthru
      _
    // Predicated region
    $region42: #{tpu_custom_call.1} parent=1 // pred_check
      _
    $region43: #{tpu_custom_call.1} parent=1 // pred_check_branch
      %80 = sbr.rel (0) target = $region45
    $region44: #{tpu_custom_call.1} parent=1 // pred_region
      %81 = dma.done [#allocation9], 1024
    $region45: #{tpu_custom_call.1} parent=1 // pred_fallthru
      _
    %v83 = vld [vmem:[#allocation2] sm:$0xf]
    %v84 = vld [vmem:[#allocation2 + $0x4] sm:$0xf]
    %v85 = vld [vmem:[#allocation2 + $0x8] sm:$0xf]
    %v86 = vld [vmem:[#allocation2 + $0xc] sm:$0xf]
    %v87 = vld [vmem:[#allocation2 + $0x10] sm:$0xf]
    %v88 = vld [vmem:[#allocation2 + $0x14] sm:$0xf]
    %v89 = vld [vmem:[#allocation2 + $0x18] sm:$0xf]
    %v90 = vld [vmem:[#allocation2 + $0x1c] sm:$0xf]
    %v91 = vld [vmem:[#allocation2 + $0x20] sm:$0xf]
    %v92 = vld [vmem:[#allocation2 + $0x24] sm:$0xf]
    %v93 = vld [vmem:[#allocation2 + $0x28] sm:$0xf]
    %v94 = vld [vmem:[#allocation2 + $0x2c] sm:$0xf]
    %v95 = vld [vmem:[#allocation2 + $0x30] sm:$0xf]
    %v96 = vld [vmem:[#allocation2 + $0x34] sm:$0xf]
    %v97 = vld [vmem:[#allocation2 + $0x38] sm:$0xf]
    %v98 = vld [vmem:[#allocation2 + $0x3c] sm:$0xf]
    %v99 = vld [vmem:[#allocation2 + $0x40] sm:$0xf]
    %v100 = vld [vmem:[#allocation2 + $0x44] sm:$0xf]
    %v101 = vld [vmem:[#allocation2 + $0x48] sm:$0xf]
    %v102 = vld [vmem:[#allocation2 + $0x4c] sm:$0xf]
    %v103 = vld [vmem:[#allocation2 + $0x50] sm:$0xf]
    %v104 = vld [vmem:[#allocation2 + $0x54] sm:$0xf]
    %v105 = vld [vmem:[#allocation2 + $0x58] sm:$0xf]
    %v106 = vld [vmem:[#allocation2 + $0x5c] sm:$0xf]
    %v107 = vld [vmem:[#allocation2 + $0x60] sm:$0xf]
    %v108 = vld [vmem:[#allocation2 + $0x64] sm:$0xf]
    %v109 = vld [vmem:[#allocation2 + $0x68] sm:$0xf]
    %v110 = vld [vmem:[#allocation2 + $0x6c] sm:$0xf]
    %v111 = vld [vmem:[#allocation2 + $0x70] sm:$0xf]
    %v112 = vld [vmem:[#allocation2 + $0x74] sm:$0xf]
    %v113 = vld [vmem:[#allocation2 + $0x78] sm:$0xf]
    %v114 = vld [vmem:[#allocation2 + $0x7c] sm:$0xf]
    %v115 = vld [vmem:[#allocation5] sm:$0xf]
    %v116 = vld [vmem:[#allocation5 + $0x4] sm:$0xf]
    %v117 = vld [vmem:[#allocation5 + $0x8] sm:$0xf]
    %v118 = vld [vmem:[#allocation5 + $0xc] sm:$0xf]
    %v119 = vld [vmem:[#allocation5 + $0x10] sm:$0xf]
    %v120 = vld [vmem:[#allocation5 + $0x14] sm:$0xf]
    %v121 = vld [vmem:[#allocation5 + $0x18] sm:$0xf]
    %v122 = vld [vmem:[#allocation5 + $0x1c] sm:$0xf]
    %v123 = vld [vmem:[#allocation5 + $0x20] sm:$0xf]
    %v124 = vld [vmem:[#allocation5 + $0x24] sm:$0xf]
    %v125 = vld [vmem:[#allocation5 + $0x28] sm:$0xf]
    %v126 = vld [vmem:[#allocation5 + $0x2c] sm:$0xf]
    %v127 = vld [vmem:[#allocation5 + $0x30] sm:$0xf]
    %v128 = vld [vmem:[#allocation5 + $0x34] sm:$0xf]
    %v129 = vld [vmem:[#allocation5 + $0x38] sm:$0xf]
    %v130 = vld [vmem:[#allocation5 + $0x3c] sm:$0xf]
    %v131 = vld [vmem:[%s2] sm:$0x1]
    %v133 = vlaneseq
    %v134 = vshrl.u32 %v133, 7
    %v135 = vsub.s32 0, %v134
    %v136 = vrot.slane %v131, %v135
    %v170 = vunpack.c.l.b16 %v83
    %v171 = vunpack.c.l.b16 %v84
    %v172 = vunpack.c.l.b16 %v85
    %v173 = vunpack.c.l.b16 %v86
    %v174 = vunpack.c.l.b16 %v87
    %v175 = vunpack.c.l.b16 %v88
    %v176 = vunpack.c.l.b16 %v89
    %v177 = vunpack.c.l.b16 %v90
    %v178 = vunpack.c.l.b16 %v91
    %v179 = vunpack.c.l.b16 %v92
    %v180 = vunpack.c.l.b16 %v93
    %v181 = vunpack.c.l.b16 %v94
    %v182 = vunpack.c.l.b16 %v95
    %v183 = vunpack.c.l.b16 %v96
    %v184 = vunpack.c.l.b16 %v97
    %v185 = vunpack.c.l.b16 %v98
    %v186 = vunpack.c.l.b16 %v99
    %v187 = vunpack.c.l.b16 %v100
    %v188 = vunpack.c.l.b16 %v101
    %v189 = vunpack.c.l.b16 %v102
    %v190 = vunpack.c.l.b16 %v103
    %v191 = vunpack.c.l.b16 %v104
    %v192 = vunpack.c.l.b16 %v105
    %v193 = vunpack.c.l.b16 %v106
    %v194 = vunpack.c.l.b16 %v107
    %v195 = vunpack.c.l.b16 %v108
    %v196 = vunpack.c.l.b16 %v109
    %v197 = vunpack.c.l.b16 %v110
    %v198 = vunpack.c.l.b16 %v111
    %v199 = vunpack.c.l.b16 %v112
    %v200 = vunpack.c.l.b16 %v113
    %v201 = vunpack.c.l.b16 %v114
    %v202 = vpack.c.b16 %v171, %v170
    %v203 = vpack.c.b16 %v173, %v172
    %v204 = vpack.c.b16 %v175, %v174
    %v205 = vpack.c.b16 %v177, %v176
    %v206 = vpack.c.b16 %v179, %v178
    %v207 = vpack.c.b16 %v181, %v180
    %v208 = vpack.c.b16 %v183, %v182
    %v209 = vpack.c.b16 %v185, %v184
    %v210 = vpack.c.b16 %v187, %v186
    %v211 = vpack.c.b16 %v189, %v188
    %v212 = vpack.c.b16 %v191, %v190
    %v213 = vpack.c.b16 %v193, %v192
    %v214 = vpack.c.b16 %v195, %v194
    %v215 = vpack.c.b16 %v197, %v196
    %v216 = vpack.c.b16 %v199, %v198
    %v217 = vpack.c.b16 %v201, %v200
    %v250 = vunpack.c.l.b16 %v115
    %v251 = vunpack.c.l.b16 %v116
    %v252 = vunpack.c.l.b16 %v117
    %v253 = vunpack.c.l.b16 %v118
    %v254 = vunpack.c.l.b16 %v119
    %v255 = vunpack.c.l.b16 %v120
    %v256 = vunpack.c.l.b16 %v121
    %v257 = vunpack.c.l.b16 %v122
    %v258 = vunpack.c.l.b16 %v123
    %v259 = vunpack.c.l.b16 %v124
    %v260 = vunpack.c.l.b16 %v125
    %v261 = vunpack.c.l.b16 %v126
    %v262 = vunpack.c.l.b16 %v127
    %v263 = vunpack.c.l.b16 %v128
    %v264 = vunpack.c.l.b16 %v129
    %v265 = vunpack.c.l.b16 %v130
    %v266 = vpack.c.b16 %v251, %v250
    %v267 = vpack.c.b16 %v253, %v252
    %v268 = vpack.c.b16 %v255, %v254
    %v269 = vpack.c.b16 %v257, %v256
    %v270 = vpack.c.b16 %v259, %v258
    %v271 = vpack.c.b16 %v261, %v260
    %v272 = vpack.c.b16 %v263, %v262
    %v273 = vpack.c.b16 %v265, %v264
    %282 = vmatprep.subr.bf16.mxu0 0
    %283 = vmatpush1.bf16.msra.mxu0 %v266
    %284 = vmatprep.subr.bf16.mxu0 0
    %285 = vmatpush1.bf16.msra.mxu0 %v267
    %286 = vmatprep.subr.bf16.mxu0 0
    %287 = vmatpush1.bf16.msra.mxu0 %v268
    %288 = vmatprep.subr.bf16.mxu0 0
    %289 = vmatpush1.bf16.msra.mxu0 %v269
    %290 = vmatprep.subr.bf16.mxu0 0
    %291 = vmatpush1.bf16.msra.mxu0 %v270
    %292 = vmatprep.subr.bf16.mxu0 0
    %293 = vmatpush1.bf16.msra.mxu0 %v271
    %294 = vmatprep.subr.bf16.mxu0 0
    %295 = vmatpush1.bf16.msra.mxu0 %v272
    %296 = vmatprep.subr.bf16.mxu0 0
    %297 = vmatpush1.bf16.msra.mxu0 %v273
    %298 = vmatprep.subr.bf16.mxu0 0
    %299 = vmatpush1.bf16.msra.mxu0 0
    %300 = vmatprep.subr.bf16.mxu0 0
    %301 = vmatpush1.bf16.msra.mxu0 0
    %302 = vmatprep.subr.bf16.mxu0 0
    %303 = vmatpush1.bf16.msra.mxu0 0
    %304 = vmatprep.subr.bf16.mxu0 0
    %305 = vmatpush1.bf16.msra.mxu0 0
    %306 = vmatprep.subr.bf16.mxu0 0
    %307 = vmatpush1.bf16.msra.mxu0 0
    %308 = vmatprep.subr.bf16.mxu0 0
    %309 = vmatpush1.bf16.msra.mxu0 0
    %310 = vmatprep.subr.bf16.mxu0 0
    %311 = vmatpush1.bf16.msra.mxu0 0
    %312 = vmatprep.subr.bf16.mxu0 0
    %313 = vmatpush1.bf16.msra.mxu0 0
    %314 = vmatprep.mubr.bf16.mxu0 0
    %315 = vmatmul.mubr.bf16.gmra.mrb[0].mxu0 %v202
    %v316 = vpop.f32.mrb[0].mxu0
    %v317 = vadd.f32 %v136, %v316
    %v318 = vpop.f32.mrb[0].mxu0
    %v319 = vpop.f32.mrb[0].mxu0
    %v320 = vadd.f32 %v136, %v319
    %v321 = vpop.f32.mrb[0].mxu0
    %322 = vmatprep.mubr.bf16.mxu0 0
    %323 = vmatmul.mubr.bf16.gmra.mrb[0].mxu0 %v203
    %v324 = vpop.f32.mrb[0].mxu0
    %v325 = vadd.f32 %v136, %v324
    %v326 = vpop.f32.mrb[0].mxu0
    %v327 = vpop.f32.mrb[0].mxu0
    %v328 = vadd.f32 %v136, %v327
    %v329 = vpop.f32.mrb[0].mxu0
    %330 = vmatprep.mubr.bf16.mxu0 0
    %331 = vmatmul.mubr.bf16.gmra.mrb[0].mxu0 %v204
    %v332 = vpop.f32.mrb[0].mxu0
    %v333 = vadd.f32 %v136, %v332
    %v334 = vpop.f32.mrb[0].mxu0
    %v335 = vpop.f32.mrb[0].mxu0
    %v336 = vadd.f32 %v136, %v335
    %v337 = vpop.f32.mrb[0].mxu0
    %338 = vmatprep.mubr.bf16.mxu0 0
    %339 = vmatmul.mubr.bf16.gmra.mrb[0].mxu0 %v205
    %v340 = vpop.f32.mrb[0].mxu0
    %v341 = vadd.f32 %v136, %v340
    %v342 = vpop.f32.mrb[0].mxu0
    %v343 = vpop.f32.mrb[0].mxu0
    %v344 = vadd.f32 %v136, %v343
    %v345 = vpop.f32.mrb[0].mxu0
    %346 = vmatprep.mubr.bf16.mxu0 0
    %347 = vmatmul.mubr.bf16.gmra.mrb[0].mxu0 %v206
    %v348 = vpop.f32.mrb[0].mxu0
    %v349 = vadd.f32 %v136, %v348
    %v350 = vpop.f32.mrb[0].mxu0
    %v351 = vpop.f32.mrb[0].mxu0
    %v352 = vadd.f32 %v136, %v351
    %v353 = vpop.f32.mrb[0].mxu0
    %354 = vmatprep.mubr.bf16.mxu0 0
    %355 = vmatmul.mubr.bf16.gmra.mrb[0].mxu0 %v207
    %v356 = vpop.f32.mrb[0].mxu0
    %v357 = vadd.f32 %v136, %v356
    %v358 = vpop.f32.mrb[0].mxu0
    %v359 = vpop.f32.mrb[0].mxu0
    %v360 = vadd.f32 %v136, %v359
    %v361 = vpop.f32.mrb[0].mxu0
    %362 = vmatprep.mubr.bf16.mxu0 0
    %363 = vmatmul.mubr.bf16.gmra.mrb[0].mxu0 %v208
    %v364 = vpop.f32.mrb[0].mxu0
    %v365 = vadd.f32 %v136, %v364
    %v366 = vpop.f32.mrb[0].mxu0
    %v367 = vpop.f32.mrb[0].mxu0
    %v368 = vadd.f32 %v136, %v367
    %v369 = vpop.f32.mrb[0].mxu0
    %370 = vmatprep.mubr.bf16.mxu0 0
    %371 = vmatmul.mubr.bf16.gmra.mrb[0].mxu0 %v209
    %v372 = vpop.f32.mrb[0].mxu0
    %v373 = vadd.f32 %v136, %v372
    %v374 = vpop.f32.mrb[0].mxu0
    %v375 = vpop.f32.mrb[0].mxu0
    %v376 = vadd.f32 %v136, %v375
    %v377 = vpop.f32.mrb[0].mxu0
    %378 = vmatprep.mubr.bf16.mxu0 0
    %379 = vmatmul.mubr.bf16.gmra.mrb[0].mxu0 %v210
    %v380 = vpop.f32.mrb[0].mxu0
    %v381 = vadd.f32 %v136, %v380
    %v382 = vpop.f32.mrb[0].mxu0
    %v383 = vpop.f32.mrb[0].mxu0
    %v384 = vadd.f32 %v136, %v383
    %v385 = vpop.f32.mrb[0].mxu0
    %386 = vmatprep.mubr.bf16.mxu0 0
    %387 = vmatmul.mubr.bf16.gmra.mrb[0].mxu0 %v211
    %v388 = vpop.f32.mrb[0].mxu0
    %v389 = vadd.f32 %v136, %v388
    %v390 = vpop.f32.mrb[0].mxu0
    %v391 = vpop.f32.mrb[0].mxu0
    %v392 = vadd.f32 %v136, %v391
    %v393 = vpop.f32.mrb[0].mxu0
    %394 = vmatprep.mubr.bf16.mxu0 0
    %395 = vmatmul.mubr.bf16.gmra.mrb[0].mxu0 %v212
    %v396 = vpop.f32.mrb[0].mxu0
    %v397 = vadd.f32 %v136, %v396
    %v398 = vpop.f32.mrb[0].mxu0
    %v399 = vpop.f32.mrb[0].mxu0
    %v400 = vadd.f32 %v136, %v399
    %v401 = vpop.f32.mrb[0].mxu0
    %402 = vmatprep.mubr.bf16.mxu0 0
    %403 = vmatmul.mubr.bf16.gmra.mrb[0].mxu0 %v213
    %v404 = vpop.f32.mrb[0].mxu0
    %v405 = vadd.f32 %v136, %v404
    %v406 = vpop.f32.mrb[0].mxu0
    %v407 = vpop.f32.mrb[0].mxu0
    %v408 = vadd.f32 %v136, %v407
    %v409 = vpop.f32.mrb[0].mxu0
    %410 = vmatprep.mubr.bf16.mxu0 0
    %411 = vmatmul.mubr.bf16.gmra.mrb[0].mxu0 %v214
    %v412 = vpop.f32.mrb[0].mxu0
    %v413 = vadd.f32 %v136, %v412
    %v414 = vpop.f32.mrb[0].mxu0
    %v415 = vpop.f32.mrb[0].mxu0
    %v416 = vadd.f32 %v136, %v415
    %v417 = vpop.f32.mrb[0].mxu0
    %418 = vmatprep.mubr.bf16.mxu0 0
    %419 = vmatmul.mubr.bf16.gmra.mrb[0].mxu0 %v215
    %v420 = vpop.f32.mrb[0].mxu0
    %v421 = vadd.f32 %v136, %v420
    %v422 = vpop.f32.mrb[0].mxu0
    %v423 = vpop.f32.mrb[0].mxu0
    %v424 = vadd.f32 %v136, %v423
    %v425 = vpop.f32.mrb[0].mxu0
    %426 = vmatprep.mubr.bf16.mxu0 0
    %427 = vmatmul.mubr.bf16.gmra.mrb[0].mxu0 %v216
    %v428 = vpop.f32.mrb[0].mxu0
    %v429 = vadd.f32 %v136, %v428
    %v430 = vpop.f32.mrb[0].mxu0
    %v431 = vpop.f32.mrb[0].mxu0
    %v432 = vadd.f32 %v136, %v431
    %v433 = vpop.f32.mrb[0].mxu0
    %434 = vmatprep.mubr.bf16.mxu0 0
    %435 = vmatmul.mubr.bf16.gmra.mrb[0].mxu0 %v217
    %v436 = vpop.f32.mrb[0].mxu0
    %v437 = vadd.f32 %v136, %v436
    %v438 = vpop.f32.mrb[0].mxu0
    %v439 = vpop.f32.mrb[0].mxu0
    %v440 = vadd.f32 %v136, %v439
    %v441 = vpop.f32.mrb[0].mxu0
    %442 = vdwg.mxu0
    %v443 = vmax.f32 %v317, 0.0
    %v444 = vmax.f32 %v320, 0.0
    %v445 = vmax.f32 %v325, 0.0
    %v446 = vmax.f32 %v328, 0.0
    %v447 = vmax.f32 %v333, 0.0
    %v448 = vmax.f32 %v336, 0.0
    %v449 = vmax.f32 %v341, 0.0
    %v450 = vmax.f32 %v344, 0.0
    %v451 = vmax.f32 %v349, 0.0
    %v452 = vmax.f32 %v352, 0.0
    %v453 = vmax.f32 %v357, 0.0
    %v454 = vmax.f32 %v360, 0.0
    %v455 = vmax.f32 %v365, 0.0
    %v456 = vmax.f32 %v368, 0.0
    %v457 = vmax.f32 %v373, 0.0
    %v458 = vmax.f32 %v376, 0.0
    %v459 = vmax.f32 %v381, 0.0
    %v460 = vmax.f32 %v384, 0.0
    %v461 = vmax.f32 %v389, 0.0
    %v462 = vmax.f32 %v392, 0.0
    %v463 = vmax.f32 %v397, 0.0
    %v464 = vmax.f32 %v400, 0.0
    %v465 = vmax.f32 %v405, 0.0
    %v466 = vmax.f32 %v408, 0.0
    %v467 = vmax.f32 %v413, 0.0
    %v468 = vmax.f32 %v416, 0.0
    %v469 = vmax.f32 %v421, 0.0
    %v470 = vmax.f32 %v424, 0.0
    %v471 = vmax.f32 %v429, 0.0
    %v472 = vmax.f32 %v432, 0.0
    %v473 = vmax.f32 %v437, 0.0
    %v474 = vmax.f32 %v440, 0.0
    %v475 = vpack.c.bf16 %v444, %v443
    %v476 = vpack.c.bf16 %v446, %v445
    %v477 = vpack.c.bf16 %v448, %v447
    %v478 = vpack.c.bf16 %v450, %v449
    %v479 = vpack.c.bf16 %v452, %v451
    %v480 = vpack.c.bf16 %v454, %v453
    %v481 = vpack.c.bf16 %v456, %v455
    %v482 = vpack.c.bf16 %v458, %v457
    %v483 = vpack.c.bf16 %v460, %v459
    %v484 = vpack.c.bf16 %v462, %v461
    %v485 = vpack.c.bf16 %v464, %v463
    %v486 = vpack.c.bf16 %v466, %v465
    %v487 = vpack.c.bf16 %v468, %v467
    %v488 = vpack.c.bf16 %v470, %v469
    %v489 = vpack.c.bf16 %v472, %v471
    %v490 = vpack.c.bf16 %v474, %v473
    %v491 = vld [vmem:[#allocation7] sm:$0xf]
    %v492 = vld [vmem:[#allocation7 + $0x4] sm:$0xf]
    %v493 = vld [vmem:[#allocation7 + $0x8] sm:$0xf]
    %v494 = vld [vmem:[#allocation7 + $0xc] sm:$0xf]
    %v495 = vld [vmem:[#allocation7 + $0x10] sm:$0xf]
    %v496 = vld [vmem:[#allocation7 + $0x14] sm:$0xf]
    %v497 = vld [vmem:[#allocation7 + $0x18] sm:$0xf]
    %v498 = vld [vmem:[#allocation7 + $0x1c] sm:$0xf]
    %v499 = vld [vmem:[#allocation7 + $0x20] sm:$0xf]
    %v500 = vld [vmem:[#allocation7 + $0x24] sm:$0xf]
    %v501 = vld [vmem:[#allocation7 + $0x28] sm:$0xf]
    %v502 = vld [vmem:[#allocation7 + $0x2c] sm:$0xf]
    %v503 = vld [vmem:[#allocation7 + $0x30] sm:$0xf]
    %v504 = vld [vmem:[#allocation7 + $0x34] sm:$0xf]
    %v505 = vld [vmem:[#allocation7 + $0x38] sm:$0xf]
    %v506 = vld [vmem:[#allocation7 + $0x3c] sm:$0xf]
    %v507 = vld [vmem:[%s4] sm:$0x1]
    %v509 = vlaneseq
    %v510 = vshrl.u32 %v509, 7
    %v511 = vsub.s32 0, %v510
    %v512 = vrot.slane %v507, %v511
    %v530 = vunpack.c.l.b16 %v491
    %v531 = vunpack.c.l.b16 %v492
    %v532 = vunpack.c.l.b16 %v493
    %v533 = vunpack.c.l.b16 %v494
    %v534 = vunpack.c.l.b16 %v495
    %v535 = vunpack.c.l.b16 %v496
    %v536 = vunpack.c.l.b16 %v497
    %v537 = vunpack.c.l.b16 %v498
    %v538 = vunpack.c.l.b16 %v499
    %v539 = vunpack.c.l.b16 %v500
    %v540 = vunpack.c.l.b16 %v501
    %v541 = vunpack.c.l.b16 %v502
    %v542 = vunpack.c.l.b16 %v503
    %v543 = vunpack.c.l.b16 %v504
    %v544 = vunpack.c.l.b16 %v505
    %v545 = vunpack.c.l.b16 %v506
    %v546 = vpack.c.b16 %v531, %v530
    %v547 = vpack.c.b16 %v533, %v532
    %v548 = vpack.c.b16 %v535, %v534
    %v549 = vpack.c.b16 %v537, %v536
    %v550 = vpack.c.b16 %v539, %v538
    %v551 = vpack.c.b16 %v541, %v540
    %v552 = vpack.c.b16 %v543, %v542
    %v553 = vpack.c.b16 %v545, %v544
    %562 = vmatprep.subr.bf16.mxu0 0
    %563 = vmatpush1.bf16.msra.mxu0 %v546
    %564 = vmatprep.subr.bf16.mxu0 0
    %565 = vmatpush1.bf16.msra.mxu0 %v547
    %566 = vmatprep.subr.bf16.mxu0 0
    %567 = vmatpush1.bf16.msra.mxu0 %v548
    %568 = vmatprep.subr.bf16.mxu0 0
    %569 = vmatpush1.bf16.msra.mxu0 %v549
    %570 = vmatprep.subr.bf16.mxu0 0
    %571 = vmatpush1.bf16.msra.mxu0 %v550
    %572 = vmatprep.subr.bf16.mxu0 0
    %573 = vmatpush1.bf16.msra.mxu0 %v551
    %574 = vmatprep.subr.bf16.mxu0 0
    %575 = vmatpush1.bf16.msra.mxu0 %v552
    %576 = vmatprep.subr.bf16.mxu0 0
    %577 = vmatpush1.bf16.msra.mxu0 %v553
    %578 = vmatprep.subr.bf16.mxu0 0
    %579 = vmatpush1.bf16.msra.mxu0 0
    %580 = vmatprep.subr.bf16.mxu0 0
    %581 = vmatpush1.bf16.msra.mxu0 0
    %582 = vmatprep.subr.bf16.mxu0 0
    %583 = vmatpush1.bf16.msra.mxu0 0
    %584 = vmatprep.subr.bf16.mxu0 0
    %585 = vmatpush1.bf16.msra.mxu0 0
    %586 = vmatprep.subr.bf16.mxu0 0
    %587 = vmatpush1.bf16.msra.mxu0 0
    %588 = vmatprep.subr.bf16.mxu0 0
    %589 = vmatpush1.bf16.msra.mxu0 0
    %590 = vmatprep.subr.bf16.mxu0 0
    %591 = vmatpush1.bf16.msra.mxu0 0
    %592 = vmatprep.subr.bf16.mxu0 0
    %593 = vmatpush1.bf16.msra.mxu0 0
    %594 = vmatprep.mubr.bf16.mxu0 0
    %595 = vmatmul.mubr.bf16.gmra.mrb[0].mxu0 %v475
    %v596 = vpop.f32.mrb[0].mxu0
    %v597 = vadd.f32 %v512, %v596
    %v598 = vpop.f32.mrb[0].mxu0
    %v599 = vpop.f32.mrb[0].mxu0
    %v600 = vadd.f32 %v512, %v599
    %v601 = vpop.f32.mrb[0].mxu0
    %602 = vmatprep.mubr.bf16.mxu0 0
    %603 = vmatmul.mubr.bf16.gmra.mrb[0].mxu0 %v476
    %v604 = vpop.f32.mrb[0].mxu0
    %v605 = vadd.f32 %v512, %v604
    %v606 = vpop.f32.mrb[0].mxu0
    %v607 = vpop.f32.mrb[0].mxu0
    %v608 = vadd.f32 %v512, %v607
    %v609 = vpop.f32.mrb[0].mxu0
    %610 = vmatprep.mubr.bf16.mxu0 0
    %611 = vmatmul.mubr.bf16.gmra.mrb[0].mxu0 %v477
    %v612 = vpop.f32.mrb[0].mxu0
    %v613 = vadd.f32 %v512, %v612
    %v614 = vpop.f32.mrb[0].mxu0
    %v615 = vpop.f32.mrb[0].mxu0
    %v616 = vadd.f32 %v512, %v615
    %v617 = vpop.f32.mrb[0].mxu0
    %618 = vmatprep.mubr.bf16.mxu0 0
    %619 = vmatmul.mubr.bf16.gmra.mrb[0].mxu0 %v478
    %v620 = vpop.f32.mrb[0].mxu0
    %v621 = vadd.f32 %v512, %v620
    %v622 = vpop.f32.mrb[0].mxu0
    %v623 = vpop.f32.mrb[0].mxu0
    %v624 = vadd.f32 %v512, %v623
    %v625 = vpop.f32.mrb[0].mxu0
    %626 = vmatprep.mubr.bf16.mxu0 0
    %627 = vmatmul.mubr.bf16.gmra.mrb[0].mxu0 %v479
    %v628 = vpop.f32.mrb[0].mxu0
    %v629 = vadd.f32 %v512, %v628
    %v630 = vpop.f32.mrb[0].mxu0
    %v631 = vpop.f32.mrb[0].mxu0
    %v632 = vadd.f32 %v512, %v631
    %v633 = vpop.f32.mrb[0].mxu0
    %634 = vmatprep.mubr.bf16.mxu0 0
    %635 = vmatmul.mubr.bf16.gmra.mrb[0].mxu0 %v480
    %v636 = vpop.f32.mrb[0].mxu0
    %v637 = vadd.f32 %v512, %v636
    %v638 = vpop.f32.mrb[0].mxu0
    %v639 = vpop.f32.mrb[0].mxu0
    %v640 = vadd.f32 %v512, %v639
    %v641 = vpop.f32.mrb[0].mxu0
    %642 = vmatprep.mubr.bf16.mxu0 0
    %643 = vmatmul.mubr.bf16.gmra.mrb[0].mxu0 %v481
    %v644 = vpop.f32.mrb[0].mxu0
    %v645 = vadd.f32 %v512, %v644
    %v646 = vpop.f32.mrb[0].mxu0
    %v647 = vpop.f32.mrb[0].mxu0
    %v648 = vadd.f32 %v512, %v647
    %v649 = vpop.f32.mrb[0].mxu0
    %650 = vmatprep.mubr.bf16.mxu0 0
    %651 = vmatmul.mubr.bf16.gmra.mrb[0].mxu0 %v482
    %v652 = vpop.f32.mrb[0].mxu0
    %v653 = vadd.f32 %v512, %v652
    %v654 = vpop.f32.mrb[0].mxu0
    %v655 = vpop.f32.mrb[0].mxu0
    %v656 = vadd.f32 %v512, %v655
    %v657 = vpop.f32.mrb[0].mxu0
    %658 = vmatprep.mubr.bf16.mxu0 0
    %659 = vmatmul.mubr.bf16.gmra.mrb[0].mxu0 %v483
    %v660 = vpop.f32.mrb[0].mxu0
    %v661 = vadd.f32 %v512, %v660
    %v662 = vpop.f32.mrb[0].mxu0
    %v663 = vpop.f32.mrb[0].mxu0
    %v664 = vadd.f32 %v512, %v663
    %v665 = vpop.f32.mrb[0].mxu0
    %666 = vmatprep.mubr.bf16.mxu0 0
    %667 = vmatmul.mubr.bf16.gmra.mrb[0].mxu0 %v484
    %v668 = vpop.f32.mrb[0].mxu0
    %v669 = vadd.f32 %v512, %v668
    %v670 = vpop.f32.mrb[0].mxu0
    %v671 = vpop.f32.mrb[0].mxu0
    %v672 = vadd.f32 %v512, %v671
    %v673 = vpop.f32.mrb[0].mxu0
    %674 = vmatprep.mubr.bf16.mxu0 0
    %675 = vmatmul.mubr.bf16.gmra.mrb[0].mxu0 %v485
    %v676 = vpop.f32.mrb[0].mxu0
    %v677 = vadd.f32 %v512, %v676
    %v678 = vpop.f32.mrb[0].mxu0
    %v679 = vpop.f32.mrb[0].mxu0
    %v680 = vadd.f32 %v512, %v679
    %v681 = vpop.f32.mrb[0].mxu0
    %682 = vmatprep.mubr.bf16.mxu0 0
    %683 = vmatmul.mubr.bf16.gmra.mrb[0].mxu0 %v486
    %v684 = vpop.f32.mrb[0].mxu0
    %v685 = vadd.f32 %v512, %v684
    %v686 = vpop.f32.mrb[0].mxu0
    %v687 = vpop.f32.mrb[0].mxu0
    %v688 = vadd.f32 %v512, %v687
    %v689 = vpop.f32.mrb[0].mxu0
    %690 = vmatprep.mubr.bf16.mxu0 0
    %691 = vmatmul.mubr.bf16.gmra.mrb[0].mxu0 %v487
    %v692 = vpop.f32.mrb[0].mxu0
    %v693 = vadd.f32 %v512, %v692
    %v694 = vpop.f32.mrb[0].mxu0
    %v695 = vpop.f32.mrb[0].mxu0
    %v696 = vadd.f32 %v512, %v695
    %v697 = vpop.f32.mrb[0].mxu0
    %698 = vmatprep.mubr.bf16.mxu0 0
    %699 = vmatmul.mubr.bf16.gmra.mrb[0].mxu0 %v488
    %v700 = vpop.f32.mrb[0].mxu0
    %v701 = vadd.f32 %v512, %v700
    %v702 = vpop.f32.mrb[0].mxu0
    %v703 = vpop.f32.mrb[0].mxu0
    %v704 = vadd.f32 %v512, %v703
    %v705 = vpop.f32.mrb[0].mxu0
    %706 = vmatprep.mubr.bf16.mxu0 0
    %707 = vmatmul.mubr.bf16.gmra.mrb[0].mxu0 %v489
    %v708 = vpop.f32.mrb[0].mxu0
    %v709 = vadd.f32 %v512, %v708
    %v710 = vpop.f32.mrb[0].mxu0
    %v711 = vpop.f32.mrb[0].mxu0
    %v712 = vadd.f32 %v512, %v711
    %v713 = vpop.f32.mrb[0].mxu0
    %714 = vmatprep.mubr.bf16.mxu0 0
    %715 = vmatmul.mubr.bf16.gmra.mrb[0].mxu0 %v490
    %v716 = vpop.f32.mrb[0].mxu0
    %v717 = vadd.f32 %v512, %v716
    %v718 = vpop.f32.mrb[0].mxu0
    %v719 = vpop.f32.mrb[0].mxu0
    %v720 = vadd.f32 %v512, %v719
    %v721 = vpop.f32.mrb[0].mxu0
    %722 = vdwg.mxu0
    %v723 = vmax.f32 %v597, 0.0
    %v724 = vmax.f32 %v600, 0.0
    %v725 = vmax.f32 %v605, 0.0
    %v726 = vmax.f32 %v608, 0.0
    %v727 = vmax.f32 %v613, 0.0
    %v728 = vmax.f32 %v616, 0.0
    %v729 = vmax.f32 %v621, 0.0
    %v730 = vmax.f32 %v624, 0.0
    %v731 = vmax.f32 %v629, 0.0
    %v732 = vmax.f32 %v632, 0.0
    %v733 = vmax.f32 %v637, 0.0
    %v734 = vmax.f32 %v640, 0.0
    %v735 = vmax.f32 %v645, 0.0
    %v736 = vmax.f32 %v648, 0.0
    %v737 = vmax.f32 %v653, 0.0
    %v738 = vmax.f32 %v656, 0.0
    %v739 = vmax.f32 %v661, 0.0
    %v740 = vmax.f32 %v664, 0.0
    %v741 = vmax.f32 %v669, 0.0
    %v742 = vmax.f32 %v672, 0.0
    %v743 = vmax.f32 %v677, 0.0
    %v744 = vmax.f32 %v680, 0.0
    %v745 = vmax.f32 %v685, 0.0
    %v746 = vmax.f32 %v688, 0.0
    %v747 = vmax.f32 %v693, 0.0
    %v748 = vmax.f32 %v696, 0.0
    %v749 = vmax.f32 %v701, 0.0
    %v750 = vmax.f32 %v704, 0.0
    %v751 = vmax.f32 %v709, 0.0
    %v752 = vmax.f32 %v712, 0.0
    %v753 = vmax.f32 %v717, 0.0
    %v754 = vmax.f32 %v720, 0.0
    %v755 = vpack.c.bf16 %v724, %v723
    %v756 = vpack.c.bf16 %v726, %v725
    %v757 = vpack.c.bf16 %v728, %v727
    %v758 = vpack.c.bf16 %v730, %v729
    %v759 = vpack.c.bf16 %v732, %v731
    %v760 = vpack.c.bf16 %v734, %v733
    %v761 = vpack.c.bf16 %v736, %v735
    %v762 = vpack.c.bf16 %v738, %v737
    %v763 = vpack.c.bf16 %v740, %v739
    %v764 = vpack.c.bf16 %v742, %v741
    %v765 = vpack.c.bf16 %v744, %v743
    %v766 = vpack.c.bf16 %v746, %v745
    %v767 = vpack.c.bf16 %v748, %v747
    %v768 = vpack.c.bf16 %v750, %v749
    %v769 = vpack.c.bf16 %v752, %v751
    %v770 = vpack.c.bf16 %v754, %v753
    %s771 = scalar_lea.vmem [#allocation7], 64
    %v772 = vld [vmem:[%s771] sm:$0xf]
    %v773 = vld [vmem:[%s771 + $0x4] sm:$0xf]
    %v774 = vld [vmem:[%s771 + $0x8] sm:$0xf]
    %v775 = vld [vmem:[%s771 + $0xc] sm:$0xf]
    %v776 = vld [vmem:[%s771 + $0x10] sm:$0xf]
    %v777 = vld [vmem:[%s771 + $0x14] sm:$0xf]
    %v778 = vld [vmem:[%s771 + $0x18] sm:$0xf]
    %v779 = vld [vmem:[%s771 + $0x1c] sm:$0xf]
    %v780 = vld [vmem:[%s771 + $0x20] sm:$0xf]
    %v781 = vld [vmem:[%s771 + $0x24] sm:$0xf]
    %v782 = vld [vmem:[%s771 + $0x28] sm:$0xf]
    %v783 = vld [vmem:[%s771 + $0x2c] sm:$0xf]
    %v784 = vld [vmem:[%s771 + $0x30] sm:$0xf]
    %v785 = vld [vmem:[%s771 + $0x34] sm:$0xf]
    %v786 = vld [vmem:[%s771 + $0x38] sm:$0xf]
    %v787 = vld [vmem:[%s771 + $0x3c] sm:$0xf]
    %s788 = scalar_lea.vmem %s4, 1
    %v789 = vld [vmem:[%s788] sm:$0x1]
    %v791 = vlaneseq
    %v792 = vshrl.u32 %v791, 7
    %v793 = vsub.s32 0, %v792
    %v794 = vrot.slane %v789, %v793
    %v812 = vunpack.c.l.b16 %v772
    %v813 = vunpack.c.l.b16 %v773
    %v814 = vunpack.c.l.b16 %v774
    %v815 = vunpack.c.l.b16 %v775
    %v816 = vunpack.c.l.b16 %v776
    %v817 = vunpack.c.l.b16 %v777
    %v818 = vunpack.c.l.b16 %v778
    %v819 = vunpack.c.l.b16 %v779
    %v820 = vunpack.c.l.b16 %v780
    %v821 = vunpack.c.l.b16 %v781
    %v822 = vunpack.c.l.b16 %v782
    %v823 = vunpack.c.l.b16 %v783
    %v824 = vunpack.c.l.b16 %v784
    %v825 = vunpack.c.l.b16 %v785
    %v826 = vunpack.c.l.b16 %v786
    %v827 = vunpack.c.l.b16 %v787
    %v828 = vpack.c.b16 %v813, %v812
    %v829 = vpack.c.b16 %v815, %v814
    %v830 = vpack.c.b16 %v817, %v816
    %v831 = vpack.c.b16 %v819, %v818
    %v832 = vpack.c.b16 %v821, %v820
    %v833 = vpack.c.b16 %v823, %v822
    %v834 = vpack.c.b16 %v825, %v824
    %v835 = vpack.c.b16 %v827, %v826
    %844 = vmatprep.subr.bf16.mxu0 0
    %845 = vmatpush1.bf16.msra.mxu0 %v828
    %846 = vmatprep.subr.bf16.mxu0 0
    %847 = vmatpush1.bf16.msra.mxu0 %v829
    %848 = vmatprep.subr.bf16.mxu0 0
    %849 = vmatpush1.bf16.msra.mxu0 %v830
    %850 = vmatprep.subr.bf16.mxu0 0
    %851 = vmatpush1.bf16.msra.mxu0 %v831
    %852 = vmatprep.subr.bf16.mxu0 0
    %853 = vmatpush1.bf16.msra.mxu0 %v832
    %854 = vmatprep.subr.bf16.mxu0 0
    %855 = vmatpush1.bf16.msra.mxu0 %v833
    %856 = vmatprep.subr.bf16.mxu0 0
    %857 = vmatpush1.bf16.msra.mxu0 %v834
    %858 = vmatprep.subr.bf16.mxu0 0
    %859 = vmatpush1.bf16.msra.mxu0 %v835
    %860 = vmatprep.subr.bf16.mxu0 0
    %861 = vmatpush1.bf16.msra.mxu0 0
    %862 = vmatprep.subr.bf16.mxu0 0
    %863 = vmatpush1.bf16.msra.mxu0 0
    %864 = vmatprep.subr.bf16.mxu0 0
    %865 = vmatpush1.bf16.msra.mxu0 0
    %866 = vmatprep.subr.bf16.mxu0 0
    %867 = vmatpush1.bf16.msra.mxu0 0
    %868 = vmatprep.subr.bf16.mxu0 0
    %869 = vmatpush1.bf16.msra.mxu0 0
    %870 = vmatprep.subr.bf16.mxu0 0
    %871 = vmatpush1.bf16.msra.mxu0 0
    %872 = vmatprep.subr.bf16.mxu0 0
    %873 = vmatpush1.bf16.msra.mxu0 0
    %874 = vmatprep.subr.bf16.mxu0 0
    %875 = vmatpush1.bf16.msra.mxu0 0
    %876 = vmatprep.mubr.bf16.mxu0 0
    %877 = vmatmul.mubr.bf16.gmra.mrb[0].mxu0 %v755
    %v878 = vpop.f32.mrb[0].mxu0
    %v879 = vadd.f32 %v794, %v878
    %v880 = vpop.f32.mrb[0].mxu0
    %v881 = vpop.f32.mrb[0].mxu0
    %v882 = vadd.f32 %v794, %v881
    %v883 = vpop.f32.mrb[0].mxu0
    %884 = vmatprep.mubr.bf16.mxu0 0
    %885 = vmatmul.mubr.bf16.gmra.mrb[0].mxu0 %v756
    %v886 = vpop.f32.mrb[0].mxu0
    %v887 = vadd.f32 %v794, %v886
    %v888 = vpop.f32.mrb[0].mxu0
    %v889 = vpop.f32.mrb[0].mxu0
    %v890 = vadd.f32 %v794, %v889
    %v891 = vpop.f32.mrb[0].mxu0
    %892 = vmatprep.mubr.bf16.mxu0 0
    %893 = vmatmul.mubr.bf16.gmra.mrb[0].mxu0 %v757
    %v894 = vpop.f32.mrb[0].mxu0
    %v895 = vadd.f32 %v794, %v894
    %v896 = vpop.f32.mrb[0].mxu0
    %v897 = vpop.f32.mrb[0].mxu0
    %v898 = vadd.f32 %v794, %v897
    %v899 = vpop.f32.mrb[0].mxu0
    %900 = vmatprep.mubr.bf16.mxu0 0
    %901 = vmatmul.mubr.bf16.gmra.mrb[0].mxu0 %v758
    %v902 = vpop.f32.mrb[0].mxu0
    %v903 = vadd.f32 %v794, %v902
    %v904 = vpop.f32.mrb[0].mxu0
    %v905 = vpop.f32.mrb[0].mxu0
    %v906 = vadd.f32 %v794, %v905
    %v907 = vpop.f32.mrb[0].mxu0
    %908 = vmatprep.mubr.bf16.mxu0 0
    %909 = vmatmul.mubr.bf16.gmra.mrb[0].mxu0 %v759
    %v910 = vpop.f32.mrb[0].mxu0
    %v911 = vadd.f32 %v794, %v910
    %v912 = vpop.f32.mrb[0].mxu0
    %v913 = vpop.f32.mrb[0].mxu0
    %v914 = vadd.f32 %v794, %v913
    %v915 = vpop.f32.mrb[0].mxu0
    %916 = vmatprep.mubr.bf16.mxu0 0
    %917 = vmatmul.mubr.bf16.gmra.mrb[0].mxu0 %v760
    %v918 = vpop.f32.mrb[0].mxu0
    %v919 = vadd.f32 %v794, %v918
    %v920 = vpop.f32.mrb[0].mxu0
    %v921 = vpop.f32.mrb[0].mxu0
    %v922 = vadd.f32 %v794, %v921
    %v923 = vpop.f32.mrb[0].mxu0
    %924 = vmatprep.mubr.bf16.mxu0 0
    %925 = vmatmul.mubr.bf16.gmra.mrb[0].mxu0 %v761
    %v926 = vpop.f32.mrb[0].mxu0
    %v927 = vadd.f32 %v794, %v926
    %v928 = vpop.f32.mrb[0].mxu0
    %v929 = vpop.f32.mrb[0].mxu0
    %v930 = vadd.f32 %v794, %v929
    %v931 = vpop.f32.mrb[0].mxu0
    %932 = vmatprep.mubr.bf16.mxu0 0
    %933 = vmatmul.mubr.bf16.gmra.mrb[0].mxu0 %v762
    %v934 = vpop.f32.mrb[0].mxu0
    %v935 = vadd.f32 %v794, %v934
    %v936 = vpop.f32.mrb[0].mxu0
    %v937 = vpop.f32.mrb[0].mxu0
    %v938 = vadd.f32 %v794, %v937
    %v939 = vpop.f32.mrb[0].mxu0
    %940 = vmatprep.mubr.bf16.mxu0 0
    %941 = vmatmul.mubr.bf16.gmra.mrb[0].mxu0 %v763
    %v942 = vpop.f32.mrb[0].mxu0
    %v943 = vadd.f32 %v794, %v942
    %v944 = vpop.f32.mrb[0].mxu0
    %v945 = vpop.f32.mrb[0].mxu0
    %v946 = vadd.f32 %v794, %v945
    %v947 = vpop.f32.mrb[0].mxu0
    %948 = vmatprep.mubr.bf16.mxu0 0
    %949 = vmatmul.mubr.bf16.gmra.mrb[0].mxu0 %v764
    %v950 = vpop.f32.mrb[0].mxu0
    %v951 = vadd.f32 %v794, %v950
    %v952 = vpop.f32.mrb[0].mxu0
    %v953 = vpop.f32.mrb[0].mxu0
    %v954 = vadd.f32 %v794, %v953
    %v955 = vpop.f32.mrb[0].mxu0
    %956 = vmatprep.mubr.bf16.mxu0 0
    %957 = vmatmul.mubr.bf16.gmra.mrb[0].mxu0 %v765
    %v958 = vpop.f32.mrb[0].mxu0
    %v959 = vadd.f32 %v794, %v958
    %v960 = vpop.f32.mrb[0].mxu0
    %v961 = vpop.f32.mrb[0].mxu0
    %v962 = vadd.f32 %v794, %v961
    %v963 = vpop.f32.mrb[0].mxu0
    %964 = vmatprep.mubr.bf16.mxu0 0
    %965 = vmatmul.mubr.bf16.gmra.mrb[0].mxu0 %v766
    %v966 = vpop.f32.mrb[0].mxu0
    %v967 = vadd.f32 %v794, %v966
    %v968 = vpop.f32.mrb[0].mxu0
    %v969 = vpop.f32.mrb[0].mxu0
    %v970 = vadd.f32 %v794, %v969
    %v971 = vpop.f32.mrb[0].mxu0
    %972 = vmatprep.mubr.bf16.mxu0 0
    %973 = vmatmul.mubr.bf16.gmra.mrb[0].mxu0 %v767
    %v974 = vpop.f32.mrb[0].mxu0
    %v975 = vadd.f32 %v794, %v974
    %v976 = vpop.f32.mrb[0].mxu0
    %v977 = vpop.f32.mrb[0].mxu0
    %v978 = vadd.f32 %v794, %v977
    %v979 = vpop.f32.mrb[0].mxu0
    %980 = vmatprep.mubr.bf16.mxu0 0
    %981 = vmatmul.mubr.bf16.gmra.mrb[0].mxu0 %v768
    %v982 = vpop.f32.mrb[0].mxu0
    %v983 = vadd.f32 %v794, %v982
    %v984 = vpop.f32.mrb[0].mxu0
    %v985 = vpop.f32.mrb[0].mxu0
    %v986 = vadd.f32 %v794, %v985
    %v987 = vpop.f32.mrb[0].mxu0
    %988 = vmatprep.mubr.bf16.mxu0 0
    %989 = vmatmul.mubr.bf16.gmra.mrb[0].mxu0 %v769
    %v990 = vpop.f32.mrb[0].mxu0
    %v991 = vadd.f32 %v794, %v990
    %v992 = vpop.f32.mrb[0].mxu0
    %v993 = vpop.f32.mrb[0].mxu0
    %v994 = vadd.f32 %v794, %v993
    %v995 = vpop.f32.mrb[0].mxu0
    %996 = vmatprep.mubr.bf16.mxu0 0
    %997 = vmatmul.mubr.bf16.gmra.mrb[0].mxu0 %v770
    %v998 = vpop.f32.mrb[0].mxu0
    %v999 = vadd.f32 %v794, %v998
    %v1000 = vpop.f32.mrb[0].mxu0
    %v1001 = vpop.f32.mrb[0].mxu0
    %v1002 = vadd.f32 %v794, %v1001
    %v1003 = vpop.f32.mrb[0].mxu0
    %1004 = vdwg.mxu0
    %v1005 = vmax.f32 %v879, 0.0
    %v1006 = vmax.f32 %v882, 0.0
    %v1007 = vmax.f32 %v887, 0.0
    %v1008 = vmax.f32 %v890, 0.0
    %v1009 = vmax.f32 %v895, 0.0
    %v1010 = vmax.f32 %v898, 0.0
    %v1011 = vmax.f32 %v903, 0.0
    %v1012 = vmax.f32 %v906, 0.0
    %v1013 = vmax.f32 %v911, 0.0
    %v1014 = vmax.f32 %v914, 0.0
    %v1015 = vmax.f32 %v919, 0.0
    %v1016 = vmax.f32 %v922, 0.0
    %v1017 = vmax.f32 %v927, 0.0
    %v1018 = vmax.f32 %v930, 0.0
    %v1019 = vmax.f32 %v935, 0.0
    %v1020 = vmax.f32 %v938, 0.0
    %v1021 = vmax.f32 %v943, 0.0
    %v1022 = vmax.f32 %v946, 0.0
    %v1023 = vmax.f32 %v951, 0.0
    %v1024 = vmax.f32 %v954, 0.0
    %v1025 = vmax.f32 %v959, 0.0
    %v1026 = vmax.f32 %v962, 0.0
    %v1027 = vmax.f32 %v967, 0.0
    %v1028 = vmax.f32 %v970, 0.0
    %v1029 = vmax.f32 %v975, 0.0
    %v1030 = vmax.f32 %v978, 0.0
    %v1031 = vmax.f32 %v983, 0.0
    %v1032 = vmax.f32 %v986, 0.0
    %v1033 = vmax.f32 %v991, 0.0
    %v1034 = vmax.f32 %v994, 0.0
    %v1035 = vmax.f32 %v999, 0.0
    %v1036 = vmax.f32 %v1002, 0.0
    %v1037 = vpack.c.bf16 %v1006, %v1005
    %v1038 = vpack.c.bf16 %v1008, %v1007
    %v1039 = vpack.c.bf16 %v1010, %v1009
    %v1040 = vpack.c.bf16 %v1012, %v1011
    %v1041 = vpack.c.bf16 %v1014, %v1013
    %v1042 = vpack.c.bf16 %v1016, %v1015
    %v1043 = vpack.c.bf16 %v1018, %v1017
    %v1044 = vpack.c.bf16 %v1020, %v1019
    %v1045 = vpack.c.bf16 %v1022, %v1021
    %v1046 = vpack.c.bf16 %v1024, %v1023
    %v1047 = vpack.c.bf16 %v1026, %v1025
    %v1048 = vpack.c.bf16 %v1028, %v1027
    %v1049 = vpack.c.bf16 %v1030, %v1029
    %v1050 = vpack.c.bf16 %v1032, %v1031
    %v1051 = vpack.c.bf16 %v1034, %v1033
    %v1052 = vpack.c.bf16 %v1036, %v1035
    %s1053 = scalar_lea.vmem [#allocation7], 128
    %v1054 = vld [vmem:[%s1053] sm:$0xf]
    %v1055 = vld [vmem:[%s1053 + $0x4] sm:$0xf]
    %v1056 = vld [vmem:[%s1053 + $0x8] sm:$0xf]
    %v1057 = vld [vmem:[%s1053 + $0xc] sm:$0xf]
    %v1058 = vld [vmem:[%s1053 + $0x10] sm:$0xf]
    %v1059 = vld [vmem:[%s1053 + $0x14] sm:$0xf]
    %v1060 = vld [vmem:[%s1053 + $0x18] sm:$0xf]
    %v1061 = vld [vmem:[%s1053 + $0x1c] sm:$0xf]
    %v1062 = vld [vmem:[%s1053 + $0x20] sm:$0xf]
    %v1063 = vld [vmem:[%s1053 + $0x24] sm:$0xf]
    %v1064 = vld [vmem:[%s1053 + $0x28] sm:$0xf]
    %v1065 = vld [vmem:[%s1053 + $0x2c] sm:$0xf]
    %v1066 = vld [vmem:[%s1053 + $0x30] sm:$0xf]
    %v1067 = vld [vmem:[%s1053 + $0x34] sm:$0xf]
    %v1068 = vld [vmem:[%s1053 + $0x38] sm:$0xf]
    %v1069 = vld [vmem:[%s1053 + $0x3c] sm:$0xf]
    %s1070 = scalar_lea.vmem %s4, 2
    %v1071 = vld [vmem:[%s1070] sm:$0x1]
    %v1073 = vlaneseq
    %v1074 = vshrl.u32 %v1073, 7
    %v1075 = vsub.s32 0, %v1074
    %v1076 = vrot.slane %v1071, %v1075
    %v1094 = vunpack.c.l.b16 %v1054
    %v1095 = vunpack.c.l.b16 %v1055
    %v1096 = vunpack.c.l.b16 %v1056
    %v1097 = vunpack.c.l.b16 %v1057
    %v1098 = vunpack.c.l.b16 %v1058
    %v1099 = vunpack.c.l.b16 %v1059
    %v1100 = vunpack.c.l.b16 %v1060
    %v1101 = vunpack.c.l.b16 %v1061
    %v1102 = vunpack.c.l.b16 %v1062
    %v1103 = vunpack.c.l.b16 %v1063
    %v1104 = vunpack.c.l.b16 %v1064
    %v1105 = vunpack.c.l.b16 %v1065
    %v1106 = vunpack.c.l.b16 %v1066
    %v1107 = vunpack.c.l.b16 %v1067
    %v1108 = vunpack.c.l.b16 %v1068
    %v1109 = vunpack.c.l.b16 %v1069
    %v1110 = vpack.c.b16 %v1095, %v1094
    %v1111 = vpack.c.b16 %v1097, %v1096
    %v1112 = vpack.c.b16 %v1099, %v1098
    %v1113 = vpack.c.b16 %v1101, %v1100
    %v1114 = vpack.c.b16 %v1103, %v1102
    %v1115 = vpack.c.b16 %v1105, %v1104
    %v1116 = vpack.c.b16 %v1107, %v1106
    %v1117 = vpack.c.b16 %v1109, %v1108
    %1126 = vmatprep.subr.bf16.mxu0 0
    %1127 = vmatpush1.bf16.msra.mxu0 %v1110
    %1128 = vmatprep.subr.bf16.mxu0 0
    %1129 = vmatpush1.bf16.msra.mxu0 %v1111
    %1130 = vmatprep.subr.bf16.mxu0 0
    %1131 = vmatpush1.bf16.msra.mxu0 %v1112
    %1132 = vmatprep.subr.bf16.mxu0 0
    %1133 = vmatpush1.bf16.msra.mxu0 %v1113
    %1134 = vmatprep.subr.bf16.mxu0 0
    %1135 = vmatpush1.bf16.msra.mxu0 %v1114
    %1136 = vmatprep.subr.bf16.mxu0 0
    %1137 = vmatpush1.bf16.msra.mxu0 %v1115
    %1138 = vmatprep.subr.bf16.mxu0 0
    %1139 = vmatpush1.bf16.msra.mxu0 %v1116
    %1140 = vmatprep.subr.bf16.mxu0 0
    %1141 = vmatpush1.bf16.msra.mxu0 %v1117
    %1142 = vmatprep.subr.bf16.mxu0 0
    %1143 = vmatpush1.bf16.msra.mxu0 0
    %1144 = vmatprep.subr.bf16.mxu0 0
    %1145 = vmatpush1.bf16.msra.mxu0 0
    %1146 = vmatprep.subr.bf16.mxu0 0
    %1147 = vmatpush1.bf16.msra.mxu0 0
    %1148 = vmatprep.subr.bf16.mxu0 0
    %1149 = vmatpush1.bf16.msra.mxu0 0
    %1150 = vmatprep.subr.bf16.mxu0 0
    %1151 = vmatpush1.bf16.msra.mxu0 0
    %1152 = vmatprep.subr.bf16.mxu0 0
    %1153 = vmatpush1.bf16.msra.mxu0 0
    %1154 = vmatprep.subr.bf16.mxu0 0
    %1155 = vmatpush1.bf16.msra.mxu0 0
    %1156 = vmatprep.subr.bf16.mxu0 0
    %1157 = vmatpush1.bf16.msra.mxu0 0
    %1158 = vmatprep.mubr.bf16.mxu0 0
    %1159 = vmatmul.mubr.bf16.gmra.mrb[0].mxu0 %v1037
    %v1160 = vpop.f32.mrb[0].mxu0
    %v1161 = vadd.f32 %v1076, %v1160
    %v1162 = vpop.f32.mrb[0].mxu0
    %v1163 = vpop.f32.mrb[0].mxu0
    %v1164 = vadd.f32 %v1076, %v1163
    %v1165 = vpop.f32.mrb[0].mxu0
    %1166 = vmatprep.mubr.bf16.mxu0 0
    %1167 = vmatmul.mubr.bf16.gmra.mrb[0].mxu0 %v1038
    %v1168 = vpop.f32.mrb[0].mxu0
    %v1169 = vadd.f32 %v1076, %v1168
    %v1170 = vpop.f32.mrb[0].mxu0
    %v1171 = vpop.f32.mrb[0].mxu0
    %v1172 = vadd.f32 %v1076, %v1171
    %v1173 = vpop.f32.mrb[0].mxu0
    %1174 = vmatprep.mubr.bf16.mxu0 0
    %1175 = vmatmul.mubr.bf16.gmra.mrb[0].mxu0 %v1039
    %v1176 = vpop.f32.mrb[0].mxu0
    %v1177 = vadd.f32 %v1076, %v1176
    %v1178 = vpop.f32.mrb[0].mxu0
    %v1179 = vpop.f32.mrb[0].mxu0
    %v1180 = vadd.f32 %v1076, %v1179
    %v1181 = vpop.f32.mrb[0].mxu0
    %1182 = vmatprep.mubr.bf16.mxu0 0
    %1183 = vmatmul.mubr.bf16.gmra.mrb[0].mxu0 %v1040
    %v1184 = vpop.f32.mrb[0].mxu0
    %v1185 = vadd.f32 %v1076, %v1184
    %v1186 = vpop.f32.mrb[0].mxu0
    %v1187 = vpop.f32.mrb[0].mxu0
    %v1188 = vadd.f32 %v1076, %v1187
    %v1189 = vpop.f32.mrb[0].mxu0
    %1190 = vmatprep.mubr.bf16.mxu0 0
    %1191 = vmatmul.mubr.bf16.gmra.mrb[0].mxu0 %v1041
    %v1192 = vpop.f32.mrb[0].mxu0
    %v1193 = vadd.f32 %v1076, %v1192
    %v1194 = vpop.f32.mrb[0].mxu0
    %v1195 = vpop.f32.mrb[0].mxu0
    %v1196 = vadd.f32 %v1076, %v1195
    %v1197 = vpop.f32.mrb[0].mxu0
    %1198 = vmatprep.mubr.bf16.mxu0 0
    %1199 = vmatmul.mubr.bf16.gmra.mrb[0].mxu0 %v1042
    %v1200 = vpop.f32.mrb[0].mxu0
    %v1201 = vadd.f32 %v1076, %v1200
    %v1202 = vpop.f32.mrb[0].mxu0
    %v1203 = vpop.f32.mrb[0].mxu0
    %v1204 = vadd.f32 %v1076, %v1203
    %v1205 = vpop.f32.mrb[0].mxu0
    %1206 = vmatprep.mubr.bf16.mxu0 0
    %1207 = vmatmul.mubr.bf16.gmra.mrb[0].mxu0 %v1043
    %v1208 = vpop.f32.mrb[0].mxu0
    %v1209 = vadd.f32 %v1076, %v1208
    %v1210 = vpop.f32.mrb[0].mxu0
    %v1211 = vpop.f32.mrb[0].mxu0
    %v1212 = vadd.f32 %v1076, %v1211
    %v1213 = vpop.f32.mrb[0].mxu0
    %1214 = vmatprep.mubr.bf16.mxu0 0
    %1215 = vmatmul.mubr.bf16.gmra.mrb[0].mxu0 %v1044
    %v1216 = vpop.f32.mrb[0].mxu0
    %v1217 = vadd.f32 %v1076, %v1216
    %v1218 = vpop.f32.mrb[0].mxu0
    %v1219 = vpop.f32.mrb[0].mxu0
    %v1220 = vadd.f32 %v1076, %v1219
    %v1221 = vpop.f32.mrb[0].mxu0
    %1222 = vmatprep.mubr.bf16.mxu0 0
    %1223 = vmatmul.mubr.bf16.gmra.mrb[0].mxu0 %v1045
    %v1224 = vpop.f32.mrb[0].mxu0
    %v1225 = vadd.f32 %v1076, %v1224
    %v1226 = vpop.f32.mrb[0].mxu0
    %v1227 = vpop.f32.mrb[0].mxu0
    %v1228 = vadd.f32 %v1076, %v1227
    %v1229 = vpop.f32.mrb[0].mxu0
    %1230 = vmatprep.mubr.bf16.mxu0 0
    %1231 = vmatmul.mubr.bf16.gmra.mrb[0].mxu0 %v1046
    %v1232 = vpop.f32.mrb[0].mxu0
    %v1233 = vadd.f32 %v1076, %v1232
    %v1234 = vpop.f32.mrb[0].mxu0
    %v1235 = vpop.f32.mrb[0].mxu0
    %v1236 = vadd.f32 %v1076, %v1235
    %v1237 = vpop.f32.mrb[0].mxu0
    %1238 = vmatprep.mubr.bf16.mxu0 0
    %1239 = vmatmul.mubr.bf16.gmra.mrb[0].mxu0 %v1047
    %v1240 = vpop.f32.mrb[0].mxu0
    %v1241 = vadd.f32 %v1076, %v1240
    %v1242 = vpop.f32.mrb[0].mxu0
    %v1243 = vpop.f32.mrb[0].mxu0
    %v1244 = vadd.f32 %v1076, %v1243
    %v1245 = vpop.f32.mrb[0].mxu0
    %1246 = vmatprep.mubr.bf16.mxu0 0
    %1247 = vmatmul.mubr.bf16.gmra.mrb[0].mxu0 %v1048
    %v1248 = vpop.f32.mrb[0].mxu0
    %v1249 = vadd.f32 %v1076, %v1248
    %v1250 = vpop.f32.mrb[0].mxu0
    %v1251 = vpop.f32.mrb[0].mxu0
    %v1252 = vadd.f32 %v1076, %v1251
    %v1253 = vpop.f32.mrb[0].mxu0
    %1254 = vmatprep.mubr.bf16.mxu0 0
    %1255 = vmatmul.mubr.bf16.gmra.mrb[0].mxu0 %v1049
    %v1256 = vpop.f32.mrb[0].mxu0
    %v1257 = vadd.f32 %v1076, %v1256
    %v1258 = vpop.f32.mrb[0].mxu0
    %v1259 = vpop.f32.mrb[0].mxu0
    %v1260 = vadd.f32 %v1076, %v1259
    %v1261 = vpop.f32.mrb[0].mxu0
    %1262 = vmatprep.mubr.bf16.mxu0 0
    %1263 = vmatmul.mubr.bf16.gmra.mrb[0].mxu0 %v1050
    %v1264 = vpop.f32.mrb[0].mxu0
    %v1265 = vadd.f32 %v1076, %v1264
    %v1266 = vpop.f32.mrb[0].mxu0
    %v1267 = vpop.f32.mrb[0].mxu0
    %v1268 = vadd.f32 %v1076, %v1267
    %v1269 = vpop.f32.mrb[0].mxu0
    %1270 = vmatprep.mubr.bf16.mxu0 0
    %1271 = vmatmul.mubr.bf16.gmra.mrb[0].mxu0 %v1051
    %v1272 = vpop.f32.mrb[0].mxu0
    %v1273 = vadd.f32 %v1076, %v1272
    %v1274 = vpop.f32.mrb[0].mxu0
    %v1275 = vpop.f32.mrb[0].mxu0
    %v1276 = vadd.f32 %v1076, %v1275
    %v1277 = vpop.f32.mrb[0].mxu0
    %1278 = vmatprep.mubr.bf16.mxu0 0
    %1279 = vmatmul.mubr.bf16.gmra.mrb[0].mxu0 %v1052
    %v1280 = vpop.f32.mrb[0].mxu0
    %v1281 = vadd.f32 %v1076, %v1280
    %v1282 = vpop.f32.mrb[0].mxu0
    %v1283 = vpop.f32.mrb[0].mxu0
    %v1284 = vadd.f32 %v1076, %v1283
    %v1285 = vpop.f32.mrb[0].mxu0
    %1286 = vdwg.mxu0
    %v1287 = vmax.f32 %v1161, 0.0
    %v1288 = vmax.f32 %v1164, 0.0
    %v1289 = vmax.f32 %v1169, 0.0
    %v1290 = vmax.f32 %v1172, 0.0
    %v1291 = vmax.f32 %v1177, 0.0
    %v1292 = vmax.f32 %v1180, 0.0
    %v1293 = vmax.f32 %v1185, 0.0
    %v1294 = vmax.f32 %v1188, 0.0
    %v1295 = vmax.f32 %v1193, 0.0
    %v1296 = vmax.f32 %v1196, 0.0
    %v1297 = vmax.f32 %v1201, 0.0
    %v1298 = vmax.f32 %v1204, 0.0
    %v1299 = vmax.f32 %v1209, 0.0
    %v1300 = vmax.f32 %v1212, 0.0
    %v1301 = vmax.f32 %v1217, 0.0
    %v1302 = vmax.f32 %v1220, 0.0
    %v1303 = vmax.f32 %v1225, 0.0
    %v1304 = vmax.f32 %v1228, 0.0
    %v1305 = vmax.f32 %v1233, 0.0
    %v1306 = vmax.f32 %v1236, 0.0
    %v1307 = vmax.f32 %v1241, 0.0
    %v1308 = vmax.f32 %v1244, 0.0
    %v1309 = vmax.f32 %v1249, 0.0
    %v1310 = vmax.f32 %v1252, 0.0
    %v1311 = vmax.f32 %v1257, 0.0
    %v1312 = vmax.f32 %v1260, 0.0
    %v1313 = vmax.f32 %v1265, 0.0
    %v1314 = vmax.f32 %v1268, 0.0
    %v1315 = vmax.f32 %v1273, 0.0
    %v1316 = vmax.f32 %v1276, 0.0
    %v1317 = vmax.f32 %v1281, 0.0
    %v1318 = vmax.f32 %v1284, 0.0
    %v1319 = vpack.c.bf16 %v1288, %v1287
    %v1320 = vpack.c.bf16 %v1290, %v1289
    %v1321 = vpack.c.bf16 %v1292, %v1291
    %v1322 = vpack.c.bf16 %v1294, %v1293
    %v1323 = vpack.c.bf16 %v1296, %v1295
    %v1324 = vpack.c.bf16 %v1298, %v1297
    %v1325 = vpack.c.bf16 %v1300, %v1299
    %v1326 = vpack.c.bf16 %v1302, %v1301
    %v1327 = vpack.c.bf16 %v1304, %v1303
    %v1328 = vpack.c.bf16 %v1306, %v1305
    %v1329 = vpack.c.bf16 %v1308, %v1307
    %v1330 = vpack.c.bf16 %v1310, %v1309
    %v1331 = vpack.c.bf16 %v1312, %v1311
    %v1332 = vpack.c.bf16 %v1314, %v1313
    %v1333 = vpack.c.bf16 %v1316, %v1315
    %v1334 = vpack.c.bf16 %v1318, %v1317
    %s1335 = scalar_lea.vmem [#allocation7], 192
    %v1336 = vld [vmem:[%s1335] sm:$0xf]
    %v1337 = vld [vmem:[%s1335 + $0x4] sm:$0xf]
    %v1338 = vld [vmem:[%s1335 + $0x8] sm:$0xf]
    %v1339 = vld [vmem:[%s1335 + $0xc] sm:$0xf]
    %v1340 = vld [vmem:[%s1335 + $0x10] sm:$0xf]
    %v1341 = vld [vmem:[%s1335 + $0x14] sm:$0xf]
    %v1342 = vld [vmem:[%s1335 + $0x18] sm:$0xf]
    %v1343 = vld [vmem:[%s1335 + $0x1c] sm:$0xf]
    %v1344 = vld [vmem:[%s1335 + $0x20] sm:$0xf]
    %v1345 = vld [vmem:[%s1335 + $0x24] sm:$0xf]
    %v1346 = vld [vmem:[%s1335 + $0x28] sm:$0xf]
    %v1347 = vld [vmem:[%s1335 + $0x2c] sm:$0xf]
    %v1348 = vld [vmem:[%s1335 + $0x30] sm:$0xf]
    %v1349 = vld [vmem:[%s1335 + $0x34] sm:$0xf]
    %v1350 = vld [vmem:[%s1335 + $0x38] sm:$0xf]
    %v1351 = vld [vmem:[%s1335 + $0x3c] sm:$0xf]
    %s1352 = scalar_lea.vmem %s4, 3
    %v1353 = vld [vmem:[%s1352] sm:$0x1]
    %v1355 = vlaneseq
    %v1356 = vshrl.u32 %v1355, 7
    %v1357 = vsub.s32 0, %v1356
    %v1358 = vrot.slane %v1353, %v1357
    %v1376 = vunpack.c.l.b16 %v1336
    %v1377 = vunpack.c.l.b16 %v1337
    %v1378 = vunpack.c.l.b16 %v1338
    %v1379 = vunpack.c.l.b16 %v1339
    %v1380 = vunpack.c.l.b16 %v1340
    %v1381 = vunpack.c.l.b16 %v1341
    %v1382 = vunpack.c.l.b16 %v1342
    %v1383 = vunpack.c.l.b16 %v1343
    %v1384 = vunpack.c.l.b16 %v1344
    %v1385 = vunpack.c.l.b16 %v1345
    %v1386 = vunpack.c.l.b16 %v1346
    %v1387 = vunpack.c.l.b16 %v1347
    %v1388 = vunpack.c.l.b16 %v1348
    %v1389 = vunpack.c.l.b16 %v1349
    %v1390 = vunpack.c.l.b16 %v1350
    %v1391 = vunpack.c.l.b16 %v1351
    %v1392 = vpack.c.b16 %v1377, %v1376
    %v1393 = vpack.c.b16 %v1379, %v1378
    %v1394 = vpack.c.b16 %v1381, %v1380
    %v1395 = vpack.c.b16 %v1383, %v1382
    %v1396 = vpack.c.b16 %v1385, %v1384
    %v1397 = vpack.c.b16 %v1387, %v1386
    %v1398 = vpack.c.b16 %v1389, %v1388
    %v1399 = vpack.c.b16 %v1391, %v1390
    %1408 = vmatprep.subr.bf16.mxu0 0
    %1409 = vmatpush1.bf16.msra.mxu0 %v1392
    %1410 = vmatprep.subr.bf16.mxu0 0
    %1411 = vmatpush1.bf16.msra.mxu0 %v1393
    %1412 = vmatprep.subr.bf16.mxu0 0
    %1413 = vmatpush1.bf16.msra.mxu0 %v1394
    %1414 = vmatprep.subr.bf16.mxu0 0
    %1415 = vmatpush1.bf16.msra.mxu0 %v1395
    %1416 = vmatprep.subr.bf16.mxu0 0
    %1417 = vmatpush1.bf16.msra.mxu0 %v1396
    %1418 = vmatprep.subr.bf16.mxu0 0
    %1419 = vmatpush1.bf16.msra.mxu0 %v1397
    %1420 = vmatprep.subr.bf16.mxu0 0
    %1421 = vmatpush1.bf16.msra.mxu0 %v1398
    %1422 = vmatprep.subr.bf16.mxu0 0
    %1423 = vmatpush1.bf16.msra.mxu0 %v1399
    %1424 = vmatprep.subr.bf16.mxu0 0
    %1425 = vmatpush1.bf16.msra.mxu0 0
    %1426 = vmatprep.subr.bf16.mxu0 0
    %1427 = vmatpush1.bf16.msra.mxu0 0
    %1428 = vmatprep.subr.bf16.mxu0 0
    %1429 = vmatpush1.bf16.msra.mxu0 0
    %1430 = vmatprep.subr.bf16.mxu0 0
    %1431 = vmatpush1.bf16.msra.mxu0 0
    %1432 = vmatprep.subr.bf16.mxu0 0
    %1433 = vmatpush1.bf16.msra.mxu0 0
    %1434 = vmatprep.subr.bf16.mxu0 0
    %1435 = vmatpush1.bf16.msra.mxu0 0
    %1436 = vmatprep.subr.bf16.mxu0 0
    %1437 = vmatpush1.bf16.msra.mxu0 0
    %1438 = vmatprep.subr.bf16.mxu0 0
    %1439 = vmatpush1.bf16.msra.mxu0 0
    %1440 = vmatprep.mubr.bf16.mxu0 0
    %1441 = vmatmul.mubr.bf16.gmra.mrb[0].mxu0 %v1319
    %v1442 = vpop.f32.mrb[0].mxu0
    %v1443 = vadd.f32 %v1358, %v1442
    %v1444 = vpop.f32.mrb[0].mxu0
    %v1445 = vpop.f32.mrb[0].mxu0
    %v1446 = vadd.f32 %v1358, %v1445
    %v1447 = vpop.f32.mrb[0].mxu0
    %1448 = vmatprep.mubr.bf16.mxu0 0
    %1449 = vmatmul.mubr.bf16.gmra.mrb[0].mxu0 %v1320
    %v1450 = vpop.f32.mrb[0].mxu0
    %v1451 = vadd.f32 %v1358, %v1450
    %v1452 = vpop.f32.mrb[0].mxu0
    %v1453 = vpop.f32.mrb[0].mxu0
    %v1454 = vadd.f32 %v1358, %v1453
    %v1455 = vpop.f32.mrb[0].mxu0
    %1456 = vmatprep.mubr.bf16.mxu0 0
    %1457 = vmatmul.mubr.bf16.gmra.mrb[0].mxu0 %v1321
    %v1458 = vpop.f32.mrb[0].mxu0
    %v1459 = vadd.f32 %v1358, %v1458
    %v1460 = vpop.f32.mrb[0].mxu0
    %v1461 = vpop.f32.mrb[0].mxu0
    %v1462 = vadd.f32 %v1358, %v1461
    %v1463 = vpop.f32.mrb[0].mxu0
    %1464 = vmatprep.mubr.bf16.mxu0 0
    %1465 = vmatmul.mubr.bf16.gmra.mrb[0].mxu0 %v1322
    %v1466 = vpop.f32.mrb[0].mxu0
    %v1467 = vadd.f32 %v1358, %v1466
    %v1468 = vpop.f32.mrb[0].mxu0
    %v1469 = vpop.f32.mrb[0].mxu0
    %v1470 = vadd.f32 %v1358, %v1469
    %v1471 = vpop.f32.mrb[0].mxu0
    %1472 = vmatprep.mubr.bf16.mxu0 0
    %1473 = vmatmul.mubr.bf16.gmra.mrb[0].mxu0 %v1323
    %v1474 = vpop.f32.mrb[0].mxu0
    %v1475 = vadd.f32 %v1358, %v1474
    %v1476 = vpop.f32.mrb[0].mxu0
    %v1477 = vpop.f32.mrb[0].mxu0
    %v1478 = vadd.f32 %v1358, %v1477
    %v1479 = vpop.f32.mrb[0].mxu0
    %1480 = vmatprep.mubr.bf16.mxu0 0
    %1481 = vmatmul.mubr.bf16.gmra.mrb[0].mxu0 %v1324
    %v1482 = vpop.f32.mrb[0].mxu0
    %v1483 = vadd.f32 %v1358, %v1482
    %v1484 = vpop.f32.mrb[0].mxu0
    %v1485 = vpop.f32.mrb[0].mxu0
    %v1486 = vadd.f32 %v1358, %v1485
    %v1487 = vpop.f32.mrb[0].mxu0
    %1488 = vmatprep.mubr.bf16.mxu0 0
    %1489 = vmatmul.mubr.bf16.gmra.mrb[0].mxu0 %v1325
    %v1490 = vpop.f32.mrb[0].mxu0
    %v1491 = vadd.f32 %v1358, %v1490
    %v1492 = vpop.f32.mrb[0].mxu0
    %v1493 = vpop.f32.mrb[0].mxu0
    %v1494 = vadd.f32 %v1358, %v1493
    %v1495 = vpop.f32.mrb[0].mxu0
    %1496 = vmatprep.mubr.bf16.mxu0 0
    %1497 = vmatmul.mubr.bf16.gmra.mrb[0].mxu0 %v1326
    %v1498 = vpop.f32.mrb[0].mxu0
    %v1499 = vadd.f32 %v1358, %v1498
    %v1500 = vpop.f32.mrb[0].mxu0
    %v1501 = vpop.f32.mrb[0].mxu0
    %v1502 = vadd.f32 %v1358, %v1501
    %v1503 = vpop.f32.mrb[0].mxu0
    %1504 = vmatprep.mubr.bf16.mxu0 0
    %1505 = vmatmul.mubr.bf16.gmra.mrb[0].mxu0 %v1327
    %v1506 = vpop.f32.mrb[0].mxu0
    %v1507 = vadd.f32 %v1358, %v1506
    %v1508 = vpop.f32.mrb[0].mxu0
    %v1509 = vpop.f32.mrb[0].mxu0
    %v1510 = vadd.f32 %v1358, %v1509
    %v1511 = vpop.f32.mrb[0].mxu0
    %1512 = vmatprep.mubr.bf16.mxu0 0
    %1513 = vmatmul.mubr.bf16.gmra.mrb[0].mxu0 %v1328
    %v1514 = vpop.f32.mrb[0].mxu0
    %v1515 = vadd.f32 %v1358, %v1514
    %v1516 = vpop.f32.mrb[0].mxu0
    %v1517 = vpop.f32.mrb[0].mxu0
    %v1518 = vadd.f32 %v1358, %v1517
    %v1519 = vpop.f32.mrb[0].mxu0
    %1520 = vmatprep.mubr.bf16.mxu0 0
    %1521 = vmatmul.mubr.bf16.gmra.mrb[0].mxu0 %v1329
    %v1522 = vpop.f32.mrb[0].mxu0
    %v1523 = vadd.f32 %v1358, %v1522
    %v1524 = vpop.f32.mrb[0].mxu0
    %v1525 = vpop.f32.mrb[0].mxu0
    %v1526 = vadd.f32 %v1358, %v1525
    %v1527 = vpop.f32.mrb[0].mxu0
    %1528 = vmatprep.mubr.bf16.mxu0 0
    %1529 = vmatmul.mubr.bf16.gmra.mrb[0].mxu0 %v1330
    %v1530 = vpop.f32.mrb[0].mxu0
    %v1531 = vadd.f32 %v1358, %v1530
    %v1532 = vpop.f32.mrb[0].mxu0
    %v1533 = vpop.f32.mrb[0].mxu0
    %v1534 = vadd.f32 %v1358, %v1533
    %v1535 = vpop.f32.mrb[0].mxu0
    %1536 = vmatprep.mubr.bf16.mxu0 0
    %1537 = vmatmul.mubr.bf16.gmra.mrb[0].mxu0 %v1331
    %v1538 = vpop.f32.mrb[0].mxu0
    %v1539 = vadd.f32 %v1358, %v1538
    %v1540 = vpop.f32.mrb[0].mxu0
    %v1541 = vpop.f32.mrb[0].mxu0
    %v1542 = vadd.f32 %v1358, %v1541
    %v1543 = vpop.f32.mrb[0].mxu0
    %1544 = vmatprep.mubr.bf16.mxu0 0
    %1545 = vmatmul.mubr.bf16.gmra.mrb[0].mxu0 %v1332
    %v1546 = vpop.f32.mrb[0].mxu0
    %v1547 = vadd.f32 %v1358, %v1546
    %v1548 = vpop.f32.mrb[0].mxu0
    %v1549 = vpop.f32.mrb[0].mxu0
    %v1550 = vadd.f32 %v1358, %v1549
    %v1551 = vpop.f32.mrb[0].mxu0
    %1552 = vmatprep.mubr.bf16.mxu0 0
    %1553 = vmatmul.mubr.bf16.gmra.mrb[0].mxu0 %v1333
    %v1554 = vpop.f32.mrb[0].mxu0
    %v1555 = vadd.f32 %v1358, %v1554
    %v1556 = vpop.f32.mrb[0].mxu0
    %v1557 = vpop.f32.mrb[0].mxu0
    %v1558 = vadd.f32 %v1358, %v1557
    %v1559 = vpop.f32.mrb[0].mxu0
    %1560 = vmatprep.mubr.bf16.mxu0 0
    %1561 = vmatmul.mubr.bf16.gmra.mrb[0].mxu0 %v1334
    %v1562 = vpop.f32.mrb[0].mxu0
    %v1563 = vadd.f32 %v1358, %v1562
    %v1564 = vpop.f32.mrb[0].mxu0
    %v1565 = vpop.f32.mrb[0].mxu0
    %v1566 = vadd.f32 %v1358, %v1565
    %v1567 = vpop.f32.mrb[0].mxu0
    %1568 = vdwg.mxu0
    %v1569 = vmax.f32 %v1443, 0.0
    %v1570 = vmax.f32 %v1446, 0.0
    %v1571 = vmax.f32 %v1451, 0.0
    %v1572 = vmax.f32 %v1454, 0.0
    %v1573 = vmax.f32 %v1459, 0.0
    %v1574 = vmax.f32 %v1462, 0.0
    %v1575 = vmax.f32 %v1467, 0.0
    %v1576 = vmax.f32 %v1470, 0.0
    %v1577 = vmax.f32 %v1475, 0.0
    %v1578 = vmax.f32 %v1478, 0.0
    %v1579 = vmax.f32 %v1483, 0.0
    %v1580 = vmax.f32 %v1486, 0.0
    %v1581 = vmax.f32 %v1491, 0.0
    %v1582 = vmax.f32 %v1494, 0.0
    %v1583 = vmax.f32 %v1499, 0.0
    %v1584 = vmax.f32 %v1502, 0.0
    %v1585 = vmax.f32 %v1507, 0.0
    %v1586 = vmax.f32 %v1510, 0.0
    %v1587 = vmax.f32 %v1515, 0.0
    %v1588 = vmax.f32 %v1518, 0.0
    %v1589 = vmax.f32 %v1523, 0.0
    %v1590 = vmax.f32 %v1526, 0.0
    %v1591 = vmax.f32 %v1531, 0.0
    %v1592 = vmax.f32 %v1534, 0.0
    %v1593 = vmax.f32 %v1539, 0.0
    %v1594 = vmax.f32 %v1542, 0.0
    %v1595 = vmax.f32 %v1547, 0.0
    %v1596 = vmax.f32 %v1550, 0.0
    %v1597 = vmax.f32 %v1555, 0.0
    %v1598 = vmax.f32 %v1558, 0.0
    %v1599 = vmax.f32 %v1563, 0.0
    %v1600 = vmax.f32 %v1566, 0.0
    %v1601 = vpack.c.bf16 %v1570, %v1569
    %v1602 = vpack.c.bf16 %v1572, %v1571
    %v1603 = vpack.c.bf16 %v1574, %v1573
    %v1604 = vpack.c.bf16 %v1576, %v1575
    %v1605 = vpack.c.bf16 %v1578, %v1577
    %v1606 = vpack.c.bf16 %v1580, %v1579
    %v1607 = vpack.c.bf16 %v1582, %v1581
    %v1608 = vpack.c.bf16 %v1584, %v1583
    %v1609 = vpack.c.bf16 %v1586, %v1585
    %v1610 = vpack.c.bf16 %v1588, %v1587
    %v1611 = vpack.c.bf16 %v1590, %v1589
    %v1612 = vpack.c.bf16 %v1592, %v1591
    %v1613 = vpack.c.bf16 %v1594, %v1593
    %v1614 = vpack.c.bf16 %v1596, %v1595
    %v1615 = vpack.c.bf16 %v1598, %v1597
    %v1616 = vpack.c.bf16 %v1600, %v1599
    %s1617 = scalar_lea.vmem [#allocation7], 256
    %v1618 = vld [vmem:[%s1617] sm:$0xf]
    %v1619 = vld [vmem:[%s1617 + $0x4] sm:$0xf]
    %v1620 = vld [vmem:[%s1617 + $0x8] sm:$0xf]
    %v1621 = vld [vmem:[%s1617 + $0xc] sm:$0xf]
    %v1622 = vld [vmem:[%s1617 + $0x10] sm:$0xf]
    %v1623 = vld [vmem:[%s1617 + $0x14] sm:$0xf]
    %v1624 = vld [vmem:[%s1617 + $0x18] sm:$0xf]
    %v1625 = vld [vmem:[%s1617 + $0x1c] sm:$0xf]
    %v1626 = vld [vmem:[%s1617 + $0x20] sm:$0xf]
    %v1627 = vld [vmem:[%s1617 + $0x24] sm:$0xf]
    %v1628 = vld [vmem:[%s1617 + $0x28] sm:$0xf]
    %v1629 = vld [vmem:[%s1617 + $0x2c] sm:$0xf]
    %v1630 = vld [vmem:[%s1617 + $0x30] sm:$0xf]
    %v1631 = vld [vmem:[%s1617 + $0x34] sm:$0xf]
    %v1632 = vld [vmem:[%s1617 + $0x38] sm:$0xf]
    %v1633 = vld [vmem:[%s1617 + $0x3c] sm:$0xf]
    %s1634 = scalar_lea.vmem %s4, 4
    %v1635 = vld [vmem:[%s1634] sm:$0x1]
    %v1637 = vlaneseq
    %v1638 = vshrl.u32 %v1637, 7
    %v1639 = vsub.s32 0, %v1638
    %v1640 = vrot.slane %v1635, %v1639
    %v1658 = vunpack.c.l.b16 %v1618
    %v1659 = vunpack.c.l.b16 %v1619
    %v1660 = vunpack.c.l.b16 %v1620
    %v1661 = vunpack.c.l.b16 %v1621
    %v1662 = vunpack.c.l.b16 %v1622
    %v1663 = vunpack.c.l.b16 %v1623
    %v1664 = vunpack.c.l.b16 %v1624
    %v1665 = vunpack.c.l.b16 %v1625
    %v1666 = vunpack.c.l.b16 %v1626
    %v1667 = vunpack.c.l.b16 %v1627
    %v1668 = vunpack.c.l.b16 %v1628
    %v1669 = vunpack.c.l.b16 %v1629
    %v1670 = vunpack.c.l.b16 %v1630
    %v1671 = vunpack.c.l.b16 %v1631
    %v1672 = vunpack.c.l.b16 %v1632
    %v1673 = vunpack.c.l.b16 %v1633
    %v1674 = vpack.c.b16 %v1659, %v1658
    %v1675 = vpack.c.b16 %v1661, %v1660
    %v1676 = vpack.c.b16 %v1663, %v1662
    %v1677 = vpack.c.b16 %v1665, %v1664
    %v1678 = vpack.c.b16 %v1667, %v1666
    %v1679 = vpack.c.b16 %v1669, %v1668
    %v1680 = vpack.c.b16 %v1671, %v1670
    %v1681 = vpack.c.b16 %v1673, %v1672
    %1690 = vmatprep.subr.bf16.mxu0 0
    %1691 = vmatpush1.bf16.msra.mxu0 %v1674
    %1692 = vmatprep.subr.bf16.mxu0 0
    %1693 = vmatpush1.bf16.msra.mxu0 %v1675
    %1694 = vmatprep.subr.bf16.mxu0 0
    %1695 = vmatpush1.bf16.msra.mxu0 %v1676
    %1696 = vmatprep.subr.bf16.mxu0 0
    %1697 = vmatpush1.bf16.msra.mxu0 %v1677
    %1698 = vmatprep.subr.bf16.mxu0 0
    %1699 = vmatpush1.bf16.msra.mxu0 %v1678
    %1700 = vmatprep.subr.bf16.mxu0 0
    %1701 = vmatpush1.bf16.msra.mxu0 %v1679
    %1702 = vmatprep.subr.bf16.mxu0 0
    %1703 = vmatpush1.bf16.msra.mxu0 %v1680
    %1704 = vmatprep.subr.bf16.mxu0 0
    %1705 = vmatpush1.bf16.msra.mxu0 %v1681
    %1706 = vmatprep.subr.bf16.mxu0 0
    %1707 = vmatpush1.bf16.msra.mxu0 0
    %1708 = vmatprep.subr.bf16.mxu0 0
    %1709 = vmatpush1.bf16.msra.mxu0 0
    %1710 = vmatprep.subr.bf16.mxu0 0
    %1711 = vmatpush1.bf16.msra.mxu0 0
    %1712 = vmatprep.subr.bf16.mxu0 0
    %1713 = vmatpush1.bf16.msra.mxu0 0
    %1714 = vmatprep.subr.bf16.mxu0 0
    %1715 = vmatpush1.bf16.msra.mxu0 0
    %1716 = vmatprep.subr.bf16.mxu0 0
    %1717 = vmatpush1.bf16.msra.mxu0 0
    %1718 = vmatprep.subr.bf16.mxu0 0
    %1719 = vmatpush1.bf16.msra.mxu0 0
    %1720 = vmatprep.subr.bf16.mxu0 0
    %1721 = vmatpush1.bf16.msra.mxu0 0
    %1722 = vmatprep.mubr.bf16.mxu0 0
    %1723 = vmatmul.mubr.bf16.gmra.mrb[0].mxu0 %v1601
    %v1724 = vpop.f32.mrb[0].mxu0
    %v1725 = vadd.f32 %v1640, %v1724
    %v1726 = vpop.f32.mrb[0].mxu0
    %v1727 = vpop.f32.mrb[0].mxu0
    %v1728 = vadd.f32 %v1640, %v1727
    %v1729 = vpop.f32.mrb[0].mxu0
    %1730 = vmatprep.mubr.bf16.mxu0 0
    %1731 = vmatmul.mubr.bf16.gmra.mrb[0].mxu0 %v1602
    %v1732 = vpop.f32.mrb[0].mxu0
    %v1733 = vadd.f32 %v1640, %v1732
    %v1734 = vpop.f32.mrb[0].mxu0
    %v1735 = vpop.f32.mrb[0].mxu0
    %v1736 = vadd.f32 %v1640, %v1735
    %v1737 = vpop.f32.mrb[0].mxu0
    %1738 = vmatprep.mubr.bf16.mxu0 0
    %1739 = vmatmul.mubr.bf16.gmra.mrb[0].mxu0 %v1603
    %v1740 = vpop.f32.mrb[0].mxu0
    %v1741 = vadd.f32 %v1640, %v1740
    %v1742 = vpop.f32.mrb[0].mxu0
    %v1743 = vpop.f32.mrb[0].mxu0
    %v1744 = vadd.f32 %v1640, %v1743
    %v1745 = vpop.f32.mrb[0].mxu0
    %1746 = vmatprep.mubr.bf16.mxu0 0
    %1747 = vmatmul.mubr.bf16.gmra.mrb[0].mxu0 %v1604
    %v1748 = vpop.f32.mrb[0].mxu0
    %v1749 = vadd.f32 %v1640, %v1748
    %v1750 = vpop.f32.mrb[0].mxu0
    %v1751 = vpop.f32.mrb[0].mxu0
    %v1752 = vadd.f32 %v1640, %v1751
    %v1753 = vpop.f32.mrb[0].mxu0
    %1754 = vmatprep.mubr.bf16.mxu0 0
    %1755 = vmatmul.mubr.bf16.gmra.mrb[0].mxu0 %v1605
    %v1756 = vpop.f32.mrb[0].mxu0
    %v1757 = vadd.f32 %v1640, %v1756
    %v1758 = vpop.f32.mrb[0].mxu0
    %v1759 = vpop.f32.mrb[0].mxu0
    %v1760 = vadd.f32 %v1640, %v1759
    %v1761 = vpop.f32.mrb[0].mxu0
    %1762 = vmatprep.mubr.bf16.mxu0 0
    %1763 = vmatmul.mubr.bf16.gmra.mrb[0].mxu0 %v1606
    %v1764 = vpop.f32.mrb[0].mxu0
    %v1765 = vadd.f32 %v1640, %v1764
    %v1766 = vpop.f32.mrb[0].mxu0
    %v1767 = vpop.f32.mrb[0].mxu0
    %v1768 = vadd.f32 %v1640, %v1767
    %v1769 = vpop.f32.mrb[0].mxu0
    %1770 = vmatprep.mubr.bf16.mxu0 0
    %1771 = vmatmul.mubr.bf16.gmra.mrb[0].mxu0 %v1607
    %v1772 = vpop.f32.mrb[0].mxu0
    %v1773 = vadd.f32 %v1640, %v1772
    %v1774 = vpop.f32.mrb[0].mxu0
    %v1775 = vpop.f32.mrb[0].mxu0
    %v1776 = vadd.f32 %v1640, %v1775
    %v1777 = vpop.f32.mrb[0].mxu0
    %1778 = vmatprep.mubr.bf16.mxu0 0
    %1779 = vmatmul.mubr.bf16.gmra.mrb[0].mxu0 %v1608
    %v1780 = vpop.f32.mrb[0].mxu0
    %v1781 = vadd.f32 %v1640, %v1780
    %v1782 = vpop.f32.mrb[0].mxu0
    %v1783 = vpop.f32.mrb[0].mxu0
    %v1784 = vadd.f32 %v1640, %v1783
    %v1785 = vpop.f32.mrb[0].mxu0
    %1786 = vmatprep.mubr.bf16.mxu0 0
    %1787 = vmatmul.mubr.bf16.gmra.mrb[0].mxu0 %v1609
    %v1788 = vpop.f32.mrb[0].mxu0
    %v1789 = vadd.f32 %v1640, %v1788
    %v1790 = vpop.f32.mrb[0].mxu0
    %v1791 = vpop.f32.mrb[0].mxu0
    %v1792 = vadd.f32 %v1640, %v1791
    %v1793 = vpop.f32.mrb[0].mxu0
    %1794 = vmatprep.mubr.bf16.mxu0 0
    %1795 = vmatmul.mubr.bf16.gmra.mrb[0].mxu0 %v1610
    %v1796 = vpop.f32.mrb[0].mxu0
    %v1797 = vadd.f32 %v1640, %v1796
    %v1798 = vpop.f32.mrb[0].mxu0
    %v1799 = vpop.f32.mrb[0].mxu0
    %v1800 = vadd.f32 %v1640, %v1799
    %v1801 = vpop.f32.mrb[0].mxu0
    %1802 = vmatprep.mubr.bf16.mxu0 0
    %1803 = vmatmul.mubr.bf16.gmra.mrb[0].mxu0 %v1611
    %v1804 = vpop.f32.mrb[0].mxu0
    %v1805 = vadd.f32 %v1640, %v1804
    %v1806 = vpop.f32.mrb[0].mxu0
    %v1807 = vpop.f32.mrb[0].mxu0
    %v1808 = vadd.f32 %v1640, %v1807
    %v1809 = vpop.f32.mrb[0].mxu0
    %1810 = vmatprep.mubr.bf16.mxu0 0
    %1811 = vmatmul.mubr.bf16.gmra.mrb[0].mxu0 %v1612
    %v1812 = vpop.f32.mrb[0].mxu0
    %v1813 = vadd.f32 %v1640, %v1812
    %v1814 = vpop.f32.mrb[0].mxu0
    %v1815 = vpop.f32.mrb[0].mxu0
    %v1816 = vadd.f32 %v1640, %v1815
    %v1817 = vpop.f32.mrb[0].mxu0
    %1818 = vmatprep.mubr.bf16.mxu0 0
    %1819 = vmatmul.mubr.bf16.gmra.mrb[0].mxu0 %v1613
    %v1820 = vpop.f32.mrb[0].mxu0
    %v1821 = vadd.f32 %v1640, %v1820
    %v1822 = vpop.f32.mrb[0].mxu0
    %v1823 = vpop.f32.mrb[0].mxu0
    %v1824 = vadd.f32 %v1640, %v1823
    %v1825 = vpop.f32.mrb[0].mxu0
    %1826 = vmatprep.mubr.bf16.mxu0 0
    %1827 = vmatmul.mubr.bf16.gmra.mrb[0].mxu0 %v1614
    %v1828 = vpop.f32.mrb[0].mxu0
    %v1829 = vadd.f32 %v1640, %v1828
    %v1830 = vpop.f32.mrb[0].mxu0
    %v1831 = vpop.f32.mrb[0].mxu0
    %v1832 = vadd.f32 %v1640, %v1831
    %v1833 = vpop.f32.mrb[0].mxu0
    %1834 = vmatprep.mubr.bf16.mxu0 0
    %1835 = vmatmul.mubr.bf16.gmra.mrb[0].mxu0 %v1615
    %v1836 = vpop.f32.mrb[0].mxu0
    %v1837 = vadd.f32 %v1640, %v1836
    %v1838 = vpop.f32.mrb[0].mxu0
    %v1839 = vpop.f32.mrb[0].mxu0
    %v1840 = vadd.f32 %v1640, %v1839
    %v1841 = vpop.f32.mrb[0].mxu0
    %1842 = vmatprep.mubr.bf16.mxu0 0
    %1843 = vmatmul.mubr.bf16.gmra.mrb[0].mxu0 %v1616
    %v1844 = vpop.f32.mrb[0].mxu0
    %v1845 = vadd.f32 %v1640, %v1844
    %v1846 = vpop.f32.mrb[0].mxu0
    %v1847 = vpop.f32.mrb[0].mxu0
    %v1848 = vadd.f32 %v1640, %v1847
    %v1849 = vpop.f32.mrb[0].mxu0
    %1850 = vdwg.mxu0
    %v1851 = vmax.f32 %v1725, 0.0
    %v1852 = vmax.f32 %v1728, 0.0
    %v1853 = vmax.f32 %v1733, 0.0
    %v1854 = vmax.f32 %v1736, 0.0
    %v1855 = vmax.f32 %v1741, 0.0
    %v1856 = vmax.f32 %v1744, 0.0
    %v1857 = vmax.f32 %v1749, 0.0
    %v1858 = vmax.f32 %v1752, 0.0
    %v1859 = vmax.f32 %v1757, 0.0
    %v1860 = vmax.f32 %v1760, 0.0
    %v1861 = vmax.f32 %v1765, 0.0
    %v1862 = vmax.f32 %v1768, 0.0
    %v1863 = vmax.f32 %v1773, 0.0
    %v1864 = vmax.f32 %v1776, 0.0
    %v1865 = vmax.f32 %v1781, 0.0
    %v1866 = vmax.f32 %v1784, 0.0
    %v1867 = vmax.f32 %v1789, 0.0
    %v1868 = vmax.f32 %v1792, 0.0
    %v1869 = vmax.f32 %v1797, 0.0
    %v1870 = vmax.f32 %v1800, 0.0
    %v1871 = vmax.f32 %v1805, 0.0
    %v1872 = vmax.f32 %v1808, 0.0
    %v1873 = vmax.f32 %v1813, 0.0
    %v1874 = vmax.f32 %v1816, 0.0
    %v1875 = vmax.f32 %v1821, 0.0
    %v1876 = vmax.f32 %v1824, 0.0
    %v1877 = vmax.f32 %v1829, 0.0
    %v1878 = vmax.f32 %v1832, 0.0
    %v1879 = vmax.f32 %v1837, 0.0
    %v1880 = vmax.f32 %v1840, 0.0
    %v1881 = vmax.f32 %v1845, 0.0
    %v1882 = vmax.f32 %v1848, 0.0
    %v1883 = vpack.c.bf16 %v1852, %v1851
    %v1884 = vpack.c.bf16 %v1854, %v1853
    %v1885 = vpack.c.bf16 %v1856, %v1855
    %v1886 = vpack.c.bf16 %v1858, %v1857
    %v1887 = vpack.c.bf16 %v1860, %v1859
    %v1888 = vpack.c.bf16 %v1862, %v1861
    %v1889 = vpack.c.bf16 %v1864, %v1863
    %v1890 = vpack.c.bf16 %v1866, %v1865
    %v1891 = vpack.c.bf16 %v1868, %v1867
    %v1892 = vpack.c.bf16 %v1870, %v1869
    %v1893 = vpack.c.bf16 %v1872, %v1871
    %v1894 = vpack.c.bf16 %v1874, %v1873
    %v1895 = vpack.c.bf16 %v1876, %v1875
    %v1896 = vpack.c.bf16 %v1878, %v1877
    %v1897 = vpack.c.bf16 %v1880, %v1879
    %v1898 = vpack.c.bf16 %v1882, %v1881
    %s1899 = scalar_lea.vmem [#allocation7], 320
    %v1900 = vld [vmem:[%s1899] sm:$0xf]
    %v1901 = vld [vmem:[%s1899 + $0x4] sm:$0xf]
    %v1902 = vld [vmem:[%s1899 + $0x8] sm:$0xf]
    %v1903 = vld [vmem:[%s1899 + $0xc] sm:$0xf]
    %v1904 = vld [vmem:[%s1899 + $0x10] sm:$0xf]
    %v1905 = vld [vmem:[%s1899 + $0x14] sm:$0xf]
    %v1906 = vld [vmem:[%s1899 + $0x18] sm:$0xf]
    %v1907 = vld [vmem:[%s1899 + $0x1c] sm:$0xf]
    %v1908 = vld [vmem:[%s1899 + $0x20] sm:$0xf]
    %v1909 = vld [vmem:[%s1899 + $0x24] sm:$0xf]
    %v1910 = vld [vmem:[%s1899 + $0x28] sm:$0xf]
    %v1911 = vld [vmem:[%s1899 + $0x2c] sm:$0xf]
    %v1912 = vld [vmem:[%s1899 + $0x30] sm:$0xf]
    %v1913 = vld [vmem:[%s1899 + $0x34] sm:$0xf]
    %v1914 = vld [vmem:[%s1899 + $0x38] sm:$0xf]
    %v1915 = vld [vmem:[%s1899 + $0x3c] sm:$0xf]
    %s1916 = scalar_lea.vmem %s4, 5
    %v1917 = vld [vmem:[%s1916] sm:$0x1]
    %v1919 = vlaneseq
    %v1920 = vshrl.u32 %v1919, 7
    %v1921 = vsub.s32 0, %v1920
    %v1922 = vrot.slane %v1917, %v1921
    %v1940 = vunpack.c.l.b16 %v1900
    %v1941 = vunpack.c.l.b16 %v1901
    %v1942 = vunpack.c.l.b16 %v1902
    %v1943 = vunpack.c.l.b16 %v1903
    %v1944 = vunpack.c.l.b16 %v1904
    %v1945 = vunpack.c.l.b16 %v1905
    %v1946 = vunpack.c.l.b16 %v1906
    %v1947 = vunpack.c.l.b16 %v1907
    %v1948 = vunpack.c.l.b16 %v1908
    %v1949 = vunpack.c.l.b16 %v1909
    %v1950 = vunpack.c.l.b16 %v1910
    %v1951 = vunpack.c.l.b16 %v1911
    %v1952 = vunpack.c.l.b16 %v1912
    %v1953 = vunpack.c.l.b16 %v1913
    %v1954 = vunpack.c.l.b16 %v1914
    %v1955 = vunpack.c.l.b16 %v1915
    %v1956 = vpack.c.b16 %v1941, %v1940
    %v1957 = vpack.c.b16 %v1943, %v1942
    %v1958 = vpack.c.b16 %v1945, %v1944
    %v1959 = vpack.c.b16 %v1947, %v1946
    %v1960 = vpack.c.b16 %v1949, %v1948
    %v1961 = vpack.c.b16 %v1951, %v1950
    %v1962 = vpack.c.b16 %v1953, %v1952
    %v1963 = vpack.c.b16 %v1955, %v1954
    %1972 = vmatprep.subr.bf16.mxu0 0
    %1973 = vmatpush1.bf16.msra.mxu0 %v1956
    %1974 = vmatprep.subr.bf16.mxu0 0
    %1975 = vmatpush1.bf16.msra.mxu0 %v1957
    %1976 = vmatprep.subr.bf16.mxu0 0
    %1977 = vmatpush1.bf16.msra.mxu0 %v1958
    %1978 = vmatprep.subr.bf16.mxu0 0
    %1979 = vmatpush1.bf16.msra.mxu0 %v1959
    %1980 = vmatprep.subr.bf16.mxu0 0
    %1981 = vmatpush1.bf16.msra.mxu0 %v1960
    %1982 = vmatprep.subr.bf16.mxu0 0
    %1983 = vmatpush1.bf16.msra.mxu0 %v1961
    %1984 = vmatprep.subr.bf16.mxu0 0
    %1985 = vmatpush1.bf16.msra.mxu0 %v1962
    %1986 = vmatprep.subr.bf16.mxu0 0
    %1987 = vmatpush1.bf16.msra.mxu0 %v1963
    %1988 = vmatprep.subr.bf16.mxu0 0
    %1989 = vmatpush1.bf16.msra.mxu0 0
    %1990 = vmatprep.subr.bf16.mxu0 0
    %1991 = vmatpush1.bf16.msra.mxu0 0
    %1992 = vmatprep.subr.bf16.mxu0 0
    %1993 = vmatpush1.bf16.msra.mxu0 0
    %1994 = vmatprep.subr.bf16.mxu0 0
    %1995 = vmatpush1.bf16.msra.mxu0 0
    %1996 = vmatprep.subr.bf16.mxu0 0
    %1997 = vmatpush1.bf16.msra.mxu0 0
    %1998 = vmatprep.subr.bf16.mxu0 0
    %1999 = vmatpush1.bf16.msra.mxu0 0
    %2000 = vmatprep.subr.bf16.mxu0 0
    %2001 = vmatpush1.bf16.msra.mxu0 0
    %2002 = vmatprep.subr.bf16.mxu0 0
    %2003 = vmatpush1.bf16.msra.mxu0 0
    %2004 = vmatprep.mubr.bf16.mxu0 0
    %2005 = vmatmul.mubr.bf16.gmra.mrb[0].mxu0 %v1883
    %v2006 = vpop.f32.mrb[0].mxu0
    %v2007 = vadd.f32 %v1922, %v2006
    %v2008 = vpop.f32.mrb[0].mxu0
    %v2009 = vpop.f32.mrb[0].mxu0
    %v2010 = vadd.f32 %v1922, %v2009
    %v2011 = vpop.f32.mrb[0].mxu0
    %2012 = vmatprep.mubr.bf16.mxu0 0
    %2013 = vmatmul.mubr.bf16.gmra.mrb[0].mxu0 %v1884
    %v2014 = vpop.f32.mrb[0].mxu0
    %v2015 = vadd.f32 %v1922, %v2014
    %v2016 = vpop.f32.mrb[0].mxu0
    %v2017 = vpop.f32.mrb[0].mxu0
    %v2018 = vadd.f32 %v1922, %v2017
    %v2019 = vpop.f32.mrb[0].mxu0
    %2020 = vmatprep.mubr.bf16.mxu0 0
    %2021 = vmatmul.mubr.bf16.gmra.mrb[0].mxu0 %v1885
    %v2022 = vpop.f32.mrb[0].mxu0
    %v2023 = vadd.f32 %v1922, %v2022
    %v2024 = vpop.f32.mrb[0].mxu0
    %v2025 = vpop.f32.mrb[0].mxu0
    %v2026 = vadd.f32 %v1922, %v2025
    %v2027 = vpop.f32.mrb[0].mxu0
    %2028 = vmatprep.mubr.bf16.mxu0 0
    %2029 = vmatmul.mubr.bf16.gmra.mrb[0].mxu0 %v1886
    %v2030 = vpop.f32.mrb[0].mxu0
    %v2031 = vadd.f32 %v1922, %v2030
    %v2032 = vpop.f32.mrb[0].mxu0
    %v2033 = vpop.f32.mrb[0].mxu0
    %v2034 = vadd.f32 %v1922, %v2033
    %v2035 = vpop.f32.mrb[0].mxu0
    %2036 = vmatprep.mubr.bf16.mxu0 0
    %2037 = vmatmul.mubr.bf16.gmra.mrb[0].mxu0 %v1887
    %v2038 = vpop.f32.mrb[0].mxu0
    %v2039 = vadd.f32 %v1922, %v2038
    %v2040 = vpop.f32.mrb[0].mxu0
    %v2041 = vpop.f32.mrb[0].mxu0
    %v2042 = vadd.f32 %v1922, %v2041
    %v2043 = vpop.f32.mrb[0].mxu0
    %2044 = vmatprep.mubr.bf16.mxu0 0
    %2045 = vmatmul.mubr.bf16.gmra.mrb[0].mxu0 %v1888
    %v2046 = vpop.f32.mrb[0].mxu0
    %v2047 = vadd.f32 %v1922, %v2046
    %v2048 = vpop.f32.mrb[0].mxu0
    %v2049 = vpop.f32.mrb[0].mxu0
    %v2050 = vadd.f32 %v1922, %v2049
    %v2051 = vpop.f32.mrb[0].mxu0
    %2052 = vmatprep.mubr.bf16.mxu0 0
    %2053 = vmatmul.mubr.bf16.gmra.mrb[0].mxu0 %v1889
    %v2054 = vpop.f32.mrb[0].mxu0
    %v2055 = vadd.f32 %v1922, %v2054
    %v2056 = vpop.f32.mrb[0].mxu0
    %v2057 = vpop.f32.mrb[0].mxu0
    %v2058 = vadd.f32 %v1922, %v2057
    %v2059 = vpop.f32.mrb[0].mxu0
    %2060 = vmatprep.mubr.bf16.mxu0 0
    %2061 = vmatmul.mubr.bf16.gmra.mrb[0].mxu0 %v1890
    %v2062 = vpop.f32.mrb[0].mxu0
    %v2063 = vadd.f32 %v1922, %v2062
    %v2064 = vpop.f32.mrb[0].mxu0
    %v2065 = vpop.f32.mrb[0].mxu0
    %v2066 = vadd.f32 %v1922, %v2065
    %v2067 = vpop.f32.mrb[0].mxu0
    %2068 = vmatprep.mubr.bf16.mxu0 0
    %2069 = vmatmul.mubr.bf16.gmra.mrb[0].mxu0 %v1891
    %v2070 = vpop.f32.mrb[0].mxu0
    %v2071 = vadd.f32 %v1922, %v2070
    %v2072 = vpop.f32.mrb[0].mxu0
    %v2073 = vpop.f32.mrb[0].mxu0
    %v2074 = vadd.f32 %v1922, %v2073
    %v2075 = vpop.f32.mrb[0].mxu0
    %2076 = vmatprep.mubr.bf16.mxu0 0
    %2077 = vmatmul.mubr.bf16.gmra.mrb[0].mxu0 %v1892
    %v2078 = vpop.f32.mrb[0].mxu0
    %v2079 = vadd.f32 %v1922, %v2078
    %v2080 = vpop.f32.mrb[0].mxu0
    %v2081 = vpop.f32.mrb[0].mxu0
    %v2082 = vadd.f32 %v1922, %v2081
    %v2083 = vpop.f32.mrb[0].mxu0
    %2084 = vmatprep.mubr.bf16.mxu0 0
    %2085 = vmatmul.mubr.bf16.gmra.mrb[0].mxu0 %v1893
    %v2086 = vpop.f32.mrb[0].mxu0
    %v2087 = vadd.f32 %v1922, %v2086
    %v2088 = vpop.f32.mrb[0].mxu0
    %v2089 = vpop.f32.mrb[0].mxu0
    %v2090 = vadd.f32 %v1922, %v2089
    %v2091 = vpop.f32.mrb[0].mxu0
    %2092 = vmatprep.mubr.bf16.mxu0 0
    %2093 = vmatmul.mubr.bf16.gmra.mrb[0].mxu0 %v1894
    %v2094 = vpop.f32.mrb[0].mxu0
    %v2095 = vadd.f32 %v1922, %v2094
    %v2096 = vpop.f32.mrb[0].mxu0
    %v2097 = vpop.f32.mrb[0].mxu0
    %v2098 = vadd.f32 %v1922, %v2097
    %v2099 = vpop.f32.mrb[0].mxu0
    %2100 = vmatprep.mubr.bf16.mxu0 0
    %2101 = vmatmul.mubr.bf16.gmra.mrb[0].mxu0 %v1895
    %v2102 = vpop.f32.mrb[0].mxu0
    %v2103 = vadd.f32 %v1922, %v2102
    %v2104 = vpop.f32.mrb[0].mxu0
    %v2105 = vpop.f32.mrb[0].mxu0
    %v2106 = vadd.f32 %v1922, %v2105
    %v2107 = vpop.f32.mrb[0].mxu0
    %2108 = vmatprep.mubr.bf16.mxu0 0
    %2109 = vmatmul.mubr.bf16.gmra.mrb[0].mxu0 %v1896
    %v2110 = vpop.f32.mrb[0].mxu0
    %v2111 = vadd.f32 %v1922, %v2110
    %v2112 = vpop.f32.mrb[0].mxu0
    %v2113 = vpop.f32.mrb[0].mxu0
    %v2114 = vadd.f32 %v1922, %v2113
    %v2115 = vpop.f32.mrb[0].mxu0
    %2116 = vmatprep.mubr.bf16.mxu0 0
    %2117 = vmatmul.mubr.bf16.gmra.mrb[0].mxu0 %v1897
    %v2118 = vpop.f32.mrb[0].mxu0
    %v2119 = vadd.f32 %v1922, %v2118
    %v2120 = vpop.f32.mrb[0].mxu0
    %v2121 = vpop.f32.mrb[0].mxu0
    %v2122 = vadd.f32 %v1922, %v2121
    %v2123 = vpop.f32.mrb[0].mxu0
    %2124 = vmatprep.mubr.bf16.mxu0 0
    %2125 = vmatmul.mubr.bf16.gmra.mrb[0].mxu0 %v1898
    %v2126 = vpop.f32.mrb[0].mxu0
    %v2127 = vadd.f32 %v1922, %v2126
    %v2128 = vpop.f32.mrb[0].mxu0
    %v2129 = vpop.f32.mrb[0].mxu0
    %v2130 = vadd.f32 %v1922, %v2129
    %v2131 = vpop.f32.mrb[0].mxu0
    %2132 = vdwg.mxu0
    %v2133 = vmax.f32 %v2007, 0.0
    %v2134 = vmax.f32 %v2010, 0.0
    %v2135 = vmax.f32 %v2015, 0.0
    %v2136 = vmax.f32 %v2018, 0.0
    %v2137 = vmax.f32 %v2023, 0.0
    %v2138 = vmax.f32 %v2026, 0.0
    %v2139 = vmax.f32 %v2031, 0.0
    %v2140 = vmax.f32 %v2034, 0.0
    %v2141 = vmax.f32 %v2039, 0.0
    %v2142 = vmax.f32 %v2042, 0.0
    %v2143 = vmax.f32 %v2047, 0.0
    %v2144 = vmax.f32 %v2050, 0.0
    %v2145 = vmax.f32 %v2055, 0.0
    %v2146 = vmax.f32 %v2058, 0.0
    %v2147 = vmax.f32 %v2063, 0.0
    %v2148 = vmax.f32 %v2066, 0.0
    %v2149 = vmax.f32 %v2071, 0.0
    %v2150 = vmax.f32 %v2074, 0.0
    %v2151 = vmax.f32 %v2079, 0.0
    %v2152 = vmax.f32 %v2082, 0.0
    %v2153 = vmax.f32 %v2087, 0.0
    %v2154 = vmax.f32 %v2090, 0.0
    %v2155 = vmax.f32 %v2095, 0.0
    %v2156 = vmax.f32 %v2098, 0.0
    %v2157 = vmax.f32 %v2103, 0.0
    %v2158 = vmax.f32 %v2106, 0.0
    %v2159 = vmax.f32 %v2111, 0.0
    %v2160 = vmax.f32 %v2114, 0.0
    %v2161 = vmax.f32 %v2119, 0.0
    %v2162 = vmax.f32 %v2122, 0.0
    %v2163 = vmax.f32 %v2127, 0.0
    %v2164 = vmax.f32 %v2130, 0.0
    %v2165 = vpack.c.bf16 %v2134, %v2133
    %v2166 = vpack.c.bf16 %v2136, %v2135
    %v2167 = vpack.c.bf16 %v2138, %v2137
    %v2168 = vpack.c.bf16 %v2140, %v2139
    %v2169 = vpack.c.bf16 %v2142, %v2141
    %v2170 = vpack.c.bf16 %v2144, %v2143
    %v2171 = vpack.c.bf16 %v2146, %v2145
    %v2172 = vpack.c.bf16 %v2148, %v2147
    %v2173 = vpack.c.bf16 %v2150, %v2149
    %v2174 = vpack.c.bf16 %v2152, %v2151
    %v2175 = vpack.c.bf16 %v2154, %v2153
    %v2176 = vpack.c.bf16 %v2156, %v2155
    %v2177 = vpack.c.bf16 %v2158, %v2157
    %v2178 = vpack.c.bf16 %v2160, %v2159
    %v2179 = vpack.c.bf16 %v2162, %v2161
    %v2180 = vpack.c.bf16 %v2164, %v2163
    %s2181 = scalar_lea.vmem [#allocation7], 384
    %v2182 = vld [vmem:[%s2181] sm:$0xf]
    %v2183 = vld [vmem:[%s2181 + $0x4] sm:$0xf]
    %v2184 = vld [vmem:[%s2181 + $0x8] sm:$0xf]
    %v2185 = vld [vmem:[%s2181 + $0xc] sm:$0xf]
    %v2186 = vld [vmem:[%s2181 + $0x10] sm:$0xf]
    %v2187 = vld [vmem:[%s2181 + $0x14] sm:$0xf]
    %v2188 = vld [vmem:[%s2181 + $0x18] sm:$0xf]
    %v2189 = vld [vmem:[%s2181 + $0x1c] sm:$0xf]
    %v2190 = vld [vmem:[%s2181 + $0x20] sm:$0xf]
    %v2191 = vld [vmem:[%s2181 + $0x24] sm:$0xf]
    %v2192 = vld [vmem:[%s2181 + $0x28] sm:$0xf]
    %v2193 = vld [vmem:[%s2181 + $0x2c] sm:$0xf]
    %v2194 = vld [vmem:[%s2181 + $0x30] sm:$0xf]
    %v2195 = vld [vmem:[%s2181 + $0x34] sm:$0xf]
    %v2196 = vld [vmem:[%s2181 + $0x38] sm:$0xf]
    %v2197 = vld [vmem:[%s2181 + $0x3c] sm:$0xf]
    %s2198 = scalar_lea.vmem %s4, 6
    %v2199 = vld [vmem:[%s2198] sm:$0x1]
    %v2201 = vlaneseq
    %v2202 = vshrl.u32 %v2201, 7
    %v2203 = vsub.s32 0, %v2202
    %v2204 = vrot.slane %v2199, %v2203
    %v2222 = vunpack.c.l.b16 %v2182
    %v2223 = vunpack.c.l.b16 %v2183
    %v2224 = vunpack.c.l.b16 %v2184
    %v2225 = vunpack.c.l.b16 %v2185
    %v2226 = vunpack.c.l.b16 %v2186
    %v2227 = vunpack.c.l.b16 %v2187
    %v2228 = vunpack.c.l.b16 %v2188
    %v2229 = vunpack.c.l.b16 %v2189
    %v2230 = vunpack.c.l.b16 %v2190
    %v2231 = vunpack.c.l.b16 %v2191
    %v2232 = vunpack.c.l.b16 %v2192
    %v2233 = vunpack.c.l.b16 %v2193
    %v2234 = vunpack.c.l.b16 %v2194
    %v2235 = vunpack.c.l.b16 %v2195
    %v2236 = vunpack.c.l.b16 %v2196
    %v2237 = vunpack.c.l.b16 %v2197
    %v2238 = vpack.c.b16 %v2223, %v2222
    %v2239 = vpack.c.b16 %v2225, %v2224
    %v2240 = vpack.c.b16 %v2227, %v2226
    %v2241 = vpack.c.b16 %v2229, %v2228
    %v2242 = vpack.c.b16 %v2231, %v2230
    %v2243 = vpack.c.b16 %v2233, %v2232
    %v2244 = vpack.c.b16 %v2235, %v2234
    %v2245 = vpack.c.b16 %v2237, %v2236
    %2254 = vmatprep.subr.bf16.mxu0 0
    %2255 = vmatpush1.bf16.msra.mxu0 %v2238
    %2256 = vmatprep.subr.bf16.mxu0 0
    %2257 = vmatpush1.bf16.msra.mxu0 %v2239
    %2258 = vmatprep.subr.bf16.mxu0 0
    %2259 = vmatpush1.bf16.msra.mxu0 %v2240
    %2260 = vmatprep.subr.bf16.mxu0 0
    %2261 = vmatpush1.bf16.msra.mxu0 %v2241
    %2262 = vmatprep.subr.bf16.mxu0 0
    %2263 = vmatpush1.bf16.msra.mxu0 %v2242
    %2264 = vmatprep.subr.bf16.mxu0 0
    %2265 = vmatpush1.bf16.msra.mxu0 %v2243
    %2266 = vmatprep.subr.bf16.mxu0 0
    %2267 = vmatpush1.bf16.msra.mxu0 %v2244
    %2268 = vmatprep.subr.bf16.mxu0 0
    %2269 = vmatpush1.bf16.msra.mxu0 %v2245
    %2270 = vmatprep.subr.bf16.mxu0 0
    %2271 = vmatpush1.bf16.msra.mxu0 0
    %2272 = vmatprep.subr.bf16.mxu0 0
    %2273 = vmatpush1.bf16.msra.mxu0 0
    %2274 = vmatprep.subr.bf16.mxu0 0
    %2275 = vmatpush1.bf16.msra.mxu0 0
    %2276 = vmatprep.subr.bf16.mxu0 0
    %2277 = vmatpush1.bf16.msra.mxu0 0
    %2278 = vmatprep.subr.bf16.mxu0 0
    %2279 = vmatpush1.bf16.msra.mxu0 0
    %2280 = vmatprep.subr.bf16.mxu0 0
    %2281 = vmatpush1.bf16.msra.mxu0 0
    %2282 = vmatprep.subr.bf16.mxu0 0
    %2283 = vmatpush1.bf16.msra.mxu0 0
    %2284 = vmatprep.subr.bf16.mxu0 0
    %2285 = vmatpush1.bf16.msra.mxu0 0
    %2286 = vmatprep.mubr.bf16.mxu0 0
    %2287 = vmatmul.mubr.bf16.gmra.mrb[0].mxu0 %v2165
    %v2288 = vpop.f32.mrb[0].mxu0
    %v2289 = vadd.f32 %v2204, %v2288
    %v2290 = vpop.f32.mrb[0].mxu0
    %v2291 = vpop.f32.mrb[0].mxu0
    %v2292 = vadd.f32 %v2204, %v2291
    %v2293 = vpop.f32.mrb[0].mxu0
    %2294 = vmatprep.mubr.bf16.mxu0 0
    %2295 = vmatmul.mubr.bf16.gmra.mrb[0].mxu0 %v2166
    %v2296 = vpop.f32.mrb[0].mxu0
    %v2297 = vadd.f32 %v2204, %v2296
    %v2298 = vpop.f32.mrb[0].mxu0
    %v2299 = vpop.f32.mrb[0].mxu0
    %v2300 = vadd.f32 %v2204, %v2299
    %v2301 = vpop.f32.mrb[0].mxu0
    %2302 = vmatprep.mubr.bf16.mxu0 0
    %2303 = vmatmul.mubr.bf16.gmra.mrb[0].mxu0 %v2167
    %v2304 = vpop.f32.mrb[0].mxu0
    %v2305 = vadd.f32 %v2204, %v2304
    %v2306 = vpop.f32.mrb[0].mxu0
    %v2307 = vpop.f32.mrb[0].mxu0
    %v2308 = vadd.f32 %v2204, %v2307
    %v2309 = vpop.f32.mrb[0].mxu0
    %2310 = vmatprep.mubr.bf16.mxu0 0
    %2311 = vmatmul.mubr.bf16.gmra.mrb[0].mxu0 %v2168
    %v2312 = vpop.f32.mrb[0].mxu0
    %v2313 = vadd.f32 %v2204, %v2312
    %v2314 = vpop.f32.mrb[0].mxu0
    %v2315 = vpop.f32.mrb[0].mxu0
    %v2316 = vadd.f32 %v2204, %v2315
    %v2317 = vpop.f32.mrb[0].mxu0
    %2318 = vmatprep.mubr.bf16.mxu0 0
    %2319 = vmatmul.mubr.bf16.gmra.mrb[0].mxu0 %v2169
    %v2320 = vpop.f32.mrb[0].mxu0
    %v2321 = vadd.f32 %v2204, %v2320
    %v2322 = vpop.f32.mrb[0].mxu0
    %v2323 = vpop.f32.mrb[0].mxu0
    %v2324 = vadd.f32 %v2204, %v2323
    %v2325 = vpop.f32.mrb[0].mxu0
    %2326 = vmatprep.mubr.bf16.mxu0 0
    %2327 = vmatmul.mubr.bf16.gmra.mrb[0].mxu0 %v2170
    %v2328 = vpop.f32.mrb[0].mxu0
    %v2329 = vadd.f32 %v2204, %v2328
    %v2330 = vpop.f32.mrb[0].mxu0
    %v2331 = vpop.f32.mrb[0].mxu0
    %v2332 = vadd.f32 %v2204, %v2331
    %v2333 = vpop.f32.mrb[0].mxu0
    %2334 = vmatprep.mubr.bf16.mxu0 0
    %2335 = vmatmul.mubr.bf16.gmra.mrb[0].mxu0 %v2171
    %v2336 = vpop.f32.mrb[0].mxu0
    %v2337 = vadd.f32 %v2204, %v2336
    %v2338 = vpop.f32.mrb[0].mxu0
    %v2339 = vpop.f32.mrb[0].mxu0
    %v2340 = vadd.f32 %v2204, %v2339
    %v2341 = vpop.f32.mrb[0].mxu0
    %2342 = vmatprep.mubr.bf16.mxu0 0
    %2343 = vmatmul.mubr.bf16.gmra.mrb[0].mxu0 %v2172
    %v2344 = vpop.f32.mrb[0].mxu0
    %v2345 = vadd.f32 %v2204, %v2344
    %v2346 = vpop.f32.mrb[0].mxu0
    %v2347 = vpop.f32.mrb[0].mxu0
    %v2348 = vadd.f32 %v2204, %v2347
    %v2349 = vpop.f32.mrb[0].mxu0
    %2350 = vmatprep.mubr.bf16.mxu0 0
    %2351 = vmatmul.mubr.bf16.gmra.mrb[0].mxu0 %v2173
    %v2352 = vpop.f32.mrb[0].mxu0
    %v2353 = vadd.f32 %v2204, %v2352
    %v2354 = vpop.f32.mrb[0].mxu0
    %v2355 = vpop.f32.mrb[0].mxu0
    %v2356 = vadd.f32 %v2204, %v2355
    %v2357 = vpop.f32.mrb[0].mxu0
    %2358 = vmatprep.mubr.bf16.mxu0 0
    %2359 = vmatmul.mubr.bf16.gmra.mrb[0].mxu0 %v2174
    %v2360 = vpop.f32.mrb[0].mxu0
    %v2361 = vadd.f32 %v2204, %v2360
    %v2362 = vpop.f32.mrb[0].mxu0
    %v2363 = vpop.f32.mrb[0].mxu0
    %v2364 = vadd.f32 %v2204, %v2363
    %v2365 = vpop.f32.mrb[0].mxu0
    %2366 = vmatprep.mubr.bf16.mxu0 0
    %2367 = vmatmul.mubr.bf16.gmra.mrb[0].mxu0 %v2175
    %v2368 = vpop.f32.mrb[0].mxu0
    %v2369 = vadd.f32 %v2204, %v2368
    %v2370 = vpop.f32.mrb[0].mxu0
    %v2371 = vpop.f32.mrb[0].mxu0
    %v2372 = vadd.f32 %v2204, %v2371
    %v2373 = vpop.f32.mrb[0].mxu0
    %2374 = vmatprep.mubr.bf16.mxu0 0
    %2375 = vmatmul.mubr.bf16.gmra.mrb[0].mxu0 %v2176
    %v2376 = vpop.f32.mrb[0].mxu0
    %v2377 = vadd.f32 %v2204, %v2376
    %v2378 = vpop.f32.mrb[0].mxu0
    %v2379 = vpop.f32.mrb[0].mxu0
    %v2380 = vadd.f32 %v2204, %v2379
    %v2381 = vpop.f32.mrb[0].mxu0
    %2382 = vmatprep.mubr.bf16.mxu0 0
    %2383 = vmatmul.mubr.bf16.gmra.mrb[0].mxu0 %v2177
    %v2384 = vpop.f32.mrb[0].mxu0
    %v2385 = vadd.f32 %v2204, %v2384
    %v2386 = vpop.f32.mrb[0].mxu0
    %v2387 = vpop.f32.mrb[0].mxu0
    %v2388 = vadd.f32 %v2204, %v2387
    %v2389 = vpop.f32.mrb[0].mxu0
    %2390 = vmatprep.mubr.bf16.mxu0 0
    %2391 = vmatmul.mubr.bf16.gmra.mrb[0].mxu0 %v2178
    %v2392 = vpop.f32.mrb[0].mxu0
    %v2393 = vadd.f32 %v2204, %v2392
    %v2394 = vpop.f32.mrb[0].mxu0
    %v2395 = vpop.f32.mrb[0].mxu0
    %v2396 = vadd.f32 %v2204, %v2395
    %v2397 = vpop.f32.mrb[0].mxu0
    %2398 = vmatprep.mubr.bf16.mxu0 0
    %2399 = vmatmul.mubr.bf16.gmra.mrb[0].mxu0 %v2179
    %v2400 = vpop.f32.mrb[0].mxu0
    %v2401 = vadd.f32 %v2204, %v2400
    %v2402 = vpop.f32.mrb[0].mxu0
    %v2403 = vpop.f32.mrb[0].mxu0
    %v2404 = vadd.f32 %v2204, %v2403
    %v2405 = vpop.f32.mrb[0].mxu0
    %2406 = vmatprep.mubr.bf16.mxu0 0
    %2407 = vmatmul.mubr.bf16.gmra.mrb[0].mxu0 %v2180
    %v2408 = vpop.f32.mrb[0].mxu0
    %v2409 = vadd.f32 %v2204, %v2408
    %v2410 = vpop.f32.mrb[0].mxu0
    %v2411 = vpop.f32.mrb[0].mxu0
    %v2412 = vadd.f32 %v2204, %v2411
    %v2413 = vpop.f32.mrb[0].mxu0
    %2414 = vdwg.mxu0
    %v2415 = vmax.f32 %v2289, 0.0
    %v2416 = vmax.f32 %v2292, 0.0
    %v2417 = vmax.f32 %v2297, 0.0
    %v2418 = vmax.f32 %v2300, 0.0
    %v2419 = vmax.f32 %v2305, 0.0
    %v2420 = vmax.f32 %v2308, 0.0
    %v2421 = vmax.f32 %v2313, 0.0
    %v2422 = vmax.f32 %v2316, 0.0
    %v2423 = vmax.f32 %v2321, 0.0
    %v2424 = vmax.f32 %v2324, 0.0
    %v2425 = vmax.f32 %v2329, 0.0
    %v2426 = vmax.f32 %v2332, 0.0
    %v2427 = vmax.f32 %v2337, 0.0
    %v2428 = vmax.f32 %v2340, 0.0
    %v2429 = vmax.f32 %v2345, 0.0
    %v2430 = vmax.f32 %v2348, 0.0
    %v2431 = vmax.f32 %v2353, 0.0
    %v2432 = vmax.f32 %v2356, 0.0
    %v2433 = vmax.f32 %v2361, 0.0
    %v2434 = vmax.f32 %v2364, 0.0
    %v2435 = vmax.f32 %v2369, 0.0
    %v2436 = vmax.f32 %v2372, 0.0
    %v2437 = vmax.f32 %v2377, 0.0
    %v2438 = vmax.f32 %v2380, 0.0
    %v2439 = vmax.f32 %v2385, 0.0
    %v2440 = vmax.f32 %v2388, 0.0
    %v2441 = vmax.f32 %v2393, 0.0
    %v2442 = vmax.f32 %v2396, 0.0
    %v2443 = vmax.f32 %v2401, 0.0
    %v2444 = vmax.f32 %v2404, 0.0
    %v2445 = vmax.f32 %v2409, 0.0
    %v2446 = vmax.f32 %v2412, 0.0
    %v2447 = vpack.c.bf16 %v2416, %v2415
    %v2448 = vpack.c.bf16 %v2418, %v2417
    %v2449 = vpack.c.bf16 %v2420, %v2419
    %v2450 = vpack.c.bf16 %v2422, %v2421
    %v2451 = vpack.c.bf16 %v2424, %v2423
    %v2452 = vpack.c.bf16 %v2426, %v2425
    %v2453 = vpack.c.bf16 %v2428, %v2427
    %v2454 = vpack.c.bf16 %v2430, %v2429
    %v2455 = vpack.c.bf16 %v2432, %v2431
    %v2456 = vpack.c.bf16 %v2434, %v2433
    %v2457 = vpack.c.bf16 %v2436, %v2435
    %v2458 = vpack.c.bf16 %v2438, %v2437
    %v2459 = vpack.c.bf16 %v2440, %v2439
    %v2460 = vpack.c.bf16 %v2442, %v2441
    %v2461 = vpack.c.bf16 %v2444, %v2443
    %v2462 = vpack.c.bf16 %v2446, %v2445
    %s2463 = scalar_lea.vmem [#allocation7], 448
    %v2464 = vld [vmem:[%s2463] sm:$0xf]
    %v2465 = vld [vmem:[%s2463 + $0x4] sm:$0xf]
    %v2466 = vld [vmem:[%s2463 + $0x8] sm:$0xf]
    %v2467 = vld [vmem:[%s2463 + $0xc] sm:$0xf]
    %v2468 = vld [vmem:[%s2463 + $0x10] sm:$0xf]
    %v2469 = vld [vmem:[%s2463 + $0x14] sm:$0xf]
    %v2470 = vld [vmem:[%s2463 + $0x18] sm:$0xf]
    %v2471 = vld [vmem:[%s2463 + $0x1c] sm:$0xf]
    %v2472 = vld [vmem:[%s2463 + $0x20] sm:$0xf]
    %v2473 = vld [vmem:[%s2463 + $0x24] sm:$0xf]
    %v2474 = vld [vmem:[%s2463 + $0x28] sm:$0xf]
    %v2475 = vld [vmem:[%s2463 + $0x2c] sm:$0xf]
    %v2476 = vld [vmem:[%s2463 + $0x30] sm:$0xf]
    %v2477 = vld [vmem:[%s2463 + $0x34] sm:$0xf]
    %v2478 = vld [vmem:[%s2463 + $0x38] sm:$0xf]
    %v2479 = vld [vmem:[%s2463 + $0x3c] sm:$0xf]
    %s2480 = scalar_lea.vmem %s4, 7
    %v2481 = vld [vmem:[%s2480] sm:$0x1]
    %v2483 = vlaneseq
    %v2484 = vshrl.u32 %v2483, 7
    %v2485 = vsub.s32 0, %v2484
    %v2486 = vrot.slane %v2481, %v2485
    %v2504 = vunpack.c.l.b16 %v2464
    %v2505 = vunpack.c.l.b16 %v2465
    %v2506 = vunpack.c.l.b16 %v2466
    %v2507 = vunpack.c.l.b16 %v2467
    %v2508 = vunpack.c.l.b16 %v2468
    %v2509 = vunpack.c.l.b16 %v2469
    %v2510 = vunpack.c.l.b16 %v2470
    %v2511 = vunpack.c.l.b16 %v2471
    %v2512 = vunpack.c.l.b16 %v2472
    %v2513 = vunpack.c.l.b16 %v2473
    %v2514 = vunpack.c.l.b16 %v2474
    %v2515 = vunpack.c.l.b16 %v2475
    %v2516 = vunpack.c.l.b16 %v2476
    %v2517 = vunpack.c.l.b16 %v2477
    %v2518 = vunpack.c.l.b16 %v2478
    %v2519 = vunpack.c.l.b16 %v2479
    %v2520 = vpack.c.b16 %v2505, %v2504
    %v2521 = vpack.c.b16 %v2507, %v2506
    %v2522 = vpack.c.b16 %v2509, %v2508
    %v2523 = vpack.c.b16 %v2511, %v2510
    %v2524 = vpack.c.b16 %v2513, %v2512
    %v2525 = vpack.c.b16 %v2515, %v2514
    %v2526 = vpack.c.b16 %v2517, %v2516
    %v2527 = vpack.c.b16 %v2519, %v2518
    %2536 = vmatprep.subr.bf16.mxu0 0
    %2537 = vmatpush1.bf16.msra.mxu0 %v2520
    %2538 = vmatprep.subr.bf16.mxu0 0
    %2539 = vmatpush1.bf16.msra.mxu0 %v2521
    %2540 = vmatprep.subr.bf16.mxu0 0
    %2541 = vmatpush1.bf16.msra.mxu0 %v2522
    %2542 = vmatprep.subr.bf16.mxu0 0
    %2543 = vmatpush1.bf16.msra.mxu0 %v2523
    %2544 = vmatprep.subr.bf16.mxu0 0
    %2545 = vmatpush1.bf16.msra.mxu0 %v2524
    %2546 = vmatprep.subr.bf16.mxu0 0
    %2547 = vmatpush1.bf16.msra.mxu0 %v2525
    %2548 = vmatprep.subr.bf16.mxu0 0
    %2549 = vmatpush1.bf16.msra.mxu0 %v2526
    %2550 = vmatprep.subr.bf16.mxu0 0
    %2551 = vmatpush1.bf16.msra.mxu0 %v2527
    %2552 = vmatprep.subr.bf16.mxu0 0
    %2553 = vmatpush1.bf16.msra.mxu0 0
    %2554 = vmatprep.subr.bf16.mxu0 0
    %2555 = vmatpush1.bf16.msra.mxu0 0
    %2556 = vmatprep.subr.bf16.mxu0 0
    %2557 = vmatpush1.bf16.msra.mxu0 0
    %2558 = vmatprep.subr.bf16.mxu0 0
    %2559 = vmatpush1.bf16.msra.mxu0 0
    %2560 = vmatprep.subr.bf16.mxu0 0
    %2561 = vmatpush1.bf16.msra.mxu0 0
    %2562 = vmatprep.subr.bf16.mxu0 0
    %2563 = vmatpush1.bf16.msra.mxu0 0
    %2564 = vmatprep.subr.bf16.mxu0 0
    %2565 = vmatpush1.bf16.msra.mxu0 0
    %2566 = vmatprep.subr.bf16.mxu0 0
    %2567 = vmatpush1.bf16.msra.mxu0 0
    %2568 = vmatprep.mubr.bf16.mxu0 0
    %2569 = vmatmul.mubr.bf16.gmra.mrb[0].mxu0 %v2447
    %v2570 = vpop.f32.mrb[0].mxu0
    %v2571 = vadd.f32 %v2486, %v2570
    %v2572 = vpop.f32.mrb[0].mxu0
    %v2573 = vpop.f32.mrb[0].mxu0
    %v2574 = vadd.f32 %v2486, %v2573
    %v2575 = vpop.f32.mrb[0].mxu0
    %2576 = vmatprep.mubr.bf16.mxu0 0
    %2577 = vmatmul.mubr.bf16.gmra.mrb[0].mxu0 %v2448
    %v2578 = vpop.f32.mrb[0].mxu0
    %v2579 = vadd.f32 %v2486, %v2578
    %v2580 = vpop.f32.mrb[0].mxu0
    %v2581 = vpop.f32.mrb[0].mxu0
    %v2582 = vadd.f32 %v2486, %v2581
    %v2583 = vpop.f32.mrb[0].mxu0
    %2584 = vmatprep.mubr.bf16.mxu0 0
    %2585 = vmatmul.mubr.bf16.gmra.mrb[0].mxu0 %v2449
    %v2586 = vpop.f32.mrb[0].mxu0
    %v2587 = vadd.f32 %v2486, %v2586
    %v2588 = vpop.f32.mrb[0].mxu0
    %v2589 = vpop.f32.mrb[0].mxu0
    %v2590 = vadd.f32 %v2486, %v2589
    %v2591 = vpop.f32.mrb[0].mxu0
    %2592 = vmatprep.mubr.bf16.mxu0 0
    %2593 = vmatmul.mubr.bf16.gmra.mrb[0].mxu0 %v2450
    %v2594 = vpop.f32.mrb[0].mxu0
    %v2595 = vadd.f32 %v2486, %v2594
    %v2596 = vpop.f32.mrb[0].mxu0
    %v2597 = vpop.f32.mrb[0].mxu0
    %v2598 = vadd.f32 %v2486, %v2597
    %v2599 = vpop.f32.mrb[0].mxu0
    %2600 = vmatprep.mubr.bf16.mxu0 0
    %2601 = vmatmul.mubr.bf16.gmra.mrb[0].mxu0 %v2451
    %v2602 = vpop.f32.mrb[0].mxu0
    %v2603 = vadd.f32 %v2486, %v2602
    %v2604 = vpop.f32.mrb[0].mxu0
    %v2605 = vpop.f32.mrb[0].mxu0
    %v2606 = vadd.f32 %v2486, %v2605
    %v2607 = vpop.f32.mrb[0].mxu0
    %2608 = vmatprep.mubr.bf16.mxu0 0
    %2609 = vmatmul.mubr.bf16.gmra.mrb[0].mxu0 %v2452
    %v2610 = vpop.f32.mrb[0].mxu0
    %v2611 = vadd.f32 %v2486, %v2610
    %v2612 = vpop.f32.mrb[0].mxu0
    %v2613 = vpop.f32.mrb[0].mxu0
    %v2614 = vadd.f32 %v2486, %v2613
    %v2615 = vpop.f32.mrb[0].mxu0
    %2616 = vmatprep.mubr.bf16.mxu0 0
    %2617 = vmatmul.mubr.bf16.gmra.mrb[0].mxu0 %v2453
    %v2618 = vpop.f32.mrb[0].mxu0
    %v2619 = vadd.f32 %v2486, %v2618
    %v2620 = vpop.f32.mrb[0].mxu0
    %v2621 = vpop.f32.mrb[0].mxu0
    %v2622 = vadd.f32 %v2486, %v2621
    %v2623 = vpop.f32.mrb[0].mxu0
    %2624 = vmatprep.mubr.bf16.mxu0 0
    %2625 = vmatmul.mubr.bf16.gmra.mrb[0].mxu0 %v2454
    %v2626 = vpop.f32.mrb[0].mxu0
    %v2627 = vadd.f32 %v2486, %v2626
    %v2628 = vpop.f32.mrb[0].mxu0
    %v2629 = vpop.f32.mrb[0].mxu0
    %v2630 = vadd.f32 %v2486, %v2629
    %v2631 = vpop.f32.mrb[0].mxu0
    %2632 = vmatprep.mubr.bf16.mxu0 0
    %2633 = vmatmul.mubr.bf16.gmra.mrb[0].mxu0 %v2455
    %v2634 = vpop.f32.mrb[0].mxu0
    %v2635 = vadd.f32 %v2486, %v2634
    %v2636 = vpop.f32.mrb[0].mxu0
    %v2637 = vpop.f32.mrb[0].mxu0
    %v2638 = vadd.f32 %v2486, %v2637
    %v2639 = vpop.f32.mrb[0].mxu0
    %2640 = vmatprep.mubr.bf16.mxu0 0
    %2641 = vmatmul.mubr.bf16.gmra.mrb[0].mxu0 %v2456
    %v2642 = vpop.f32.mrb[0].mxu0
    %v2643 = vadd.f32 %v2486, %v2642
    %v2644 = vpop.f32.mrb[0].mxu0
    %v2645 = vpop.f32.mrb[0].mxu0
    %v2646 = vadd.f32 %v2486, %v2645
    %v2647 = vpop.f32.mrb[0].mxu0
    %2648 = vmatprep.mubr.bf16.mxu0 0
    %2649 = vmatmul.mubr.bf16.gmra.mrb[0].mxu0 %v2457
    %v2650 = vpop.f32.mrb[0].mxu0
    %v2651 = vadd.f32 %v2486, %v2650
    %v2652 = vpop.f32.mrb[0].mxu0
    %v2653 = vpop.f32.mrb[0].mxu0
    %v2654 = vadd.f32 %v2486, %v2653
    %v2655 = vpop.f32.mrb[0].mxu0
    %2656 = vmatprep.mubr.bf16.mxu0 0
    %2657 = vmatmul.mubr.bf16.gmra.mrb[0].mxu0 %v2458
    %v2658 = vpop.f32.mrb[0].mxu0
    %v2659 = vadd.f32 %v2486, %v2658
    %v2660 = vpop.f32.mrb[0].mxu0
    %v2661 = vpop.f32.mrb[0].mxu0
    %v2662 = vadd.f32 %v2486, %v2661
    %v2663 = vpop.f32.mrb[0].mxu0
    %2664 = vmatprep.mubr.bf16.mxu0 0
    %2665 = vmatmul.mubr.bf16.gmra.mrb[0].mxu0 %v2459
    %v2666 = vpop.f32.mrb[0].mxu0
    %v2667 = vadd.f32 %v2486, %v2666
    %v2668 = vpop.f32.mrb[0].mxu0
    %v2669 = vpop.f32.mrb[0].mxu0
    %v2670 = vadd.f32 %v2486, %v2669
    %v2671 = vpop.f32.mrb[0].mxu0
    %2672 = vmatprep.mubr.bf16.mxu0 0
    %2673 = vmatmul.mubr.bf16.gmra.mrb[0].mxu0 %v2460
    %v2674 = vpop.f32.mrb[0].mxu0
    %v2675 = vadd.f32 %v2486, %v2674
    %v2676 = vpop.f32.mrb[0].mxu0
    %v2677 = vpop.f32.mrb[0].mxu0
    %v2678 = vadd.f32 %v2486, %v2677
    %v2679 = vpop.f32.mrb[0].mxu0
    %2680 = vmatprep.mubr.bf16.mxu0 0
    %2681 = vmatmul.mubr.bf16.gmra.mrb[0].mxu0 %v2461
    %v2682 = vpop.f32.mrb[0].mxu0
    %v2683 = vadd.f32 %v2486, %v2682
    %v2684 = vpop.f32.mrb[0].mxu0
    %v2685 = vpop.f32.mrb[0].mxu0
    %v2686 = vadd.f32 %v2486, %v2685
    %v2687 = vpop.f32.mrb[0].mxu0
    %2688 = vmatprep.mubr.bf16.mxu0 0
    %2689 = vmatmul.mubr.bf16.gmra.mrb[0].mxu0 %v2462
    %v2690 = vpop.f32.mrb[0].mxu0
    %v2691 = vadd.f32 %v2486, %v2690
    %v2692 = vpop.f32.mrb[0].mxu0
    %v2693 = vpop.f32.mrb[0].mxu0
    %v2694 = vadd.f32 %v2486, %v2693
    %v2695 = vpop.f32.mrb[0].mxu0
    %2696 = vdwg.mxu0
    %v2697 = vmax.f32 %v2571, 0.0
    %v2698 = vmax.f32 %v2574, 0.0
    %v2699 = vmax.f32 %v2579, 0.0
    %v2700 = vmax.f32 %v2582, 0.0
    %v2701 = vmax.f32 %v2587, 0.0
    %v2702 = vmax.f32 %v2590, 0.0
    %v2703 = vmax.f32 %v2595, 0.0
    %v2704 = vmax.f32 %v2598, 0.0
    %v2705 = vmax.f32 %v2603, 0.0
    %v2706 = vmax.f32 %v2606, 0.0
    %v2707 = vmax.f32 %v2611, 0.0
    %v2708 = vmax.f32 %v2614, 0.0
    %v2709 = vmax.f32 %v2619, 0.0
    %v2710 = vmax.f32 %v2622, 0.0
    %v2711 = vmax.f32 %v2627, 0.0
    %v2712 = vmax.f32 %v2630, 0.0
    %v2713 = vmax.f32 %v2635, 0.0
    %v2714 = vmax.f32 %v2638, 0.0
    %v2715 = vmax.f32 %v2643, 0.0
    %v2716 = vmax.f32 %v2646, 0.0
    %v2717 = vmax.f32 %v2651, 0.0
    %v2718 = vmax.f32 %v2654, 0.0
    %v2719 = vmax.f32 %v2659, 0.0
    %v2720 = vmax.f32 %v2662, 0.0
    %v2721 = vmax.f32 %v2667, 0.0
    %v2722 = vmax.f32 %v2670, 0.0
    %v2723 = vmax.f32 %v2675, 0.0
    %v2724 = vmax.f32 %v2678, 0.0
    %v2725 = vmax.f32 %v2683, 0.0
    %v2726 = vmax.f32 %v2686, 0.0
    %v2727 = vmax.f32 %v2691, 0.0
    %v2728 = vmax.f32 %v2694, 0.0
    %v2729 = vpack.c.bf16 %v2698, %v2697
    %v2730 = vpack.c.bf16 %v2700, %v2699
    %v2731 = vpack.c.bf16 %v2702, %v2701
    %v2732 = vpack.c.bf16 %v2704, %v2703
    %v2733 = vpack.c.bf16 %v2706, %v2705
    %v2734 = vpack.c.bf16 %v2708, %v2707
    %v2735 = vpack.c.bf16 %v2710, %v2709
    %v2736 = vpack.c.bf16 %v2712, %v2711
    %v2737 = vpack.c.bf16 %v2714, %v2713
    %v2738 = vpack.c.bf16 %v2716, %v2715
    %v2739 = vpack.c.bf16 %v2718, %v2717
    %v2740 = vpack.c.bf16 %v2720, %v2719
    %v2741 = vpack.c.bf16 %v2722, %v2721
    %v2742 = vpack.c.bf16 %v2724, %v2723
    %v2743 = vpack.c.bf16 %v2726, %v2725
    %v2744 = vpack.c.bf16 %v2728, %v2727
    %v2745 = vld [vmem:[#allocation8] sm:$0xf]
    %v2746 = vld [vmem:[#allocation8 + $0x4] sm:$0xf]
    %v2747 = vld [vmem:[#allocation8 + $0x8] sm:$0xf]
    %v2748 = vld [vmem:[#allocation8 + $0xc] sm:$0xf]
    %v2749 = vld [vmem:[#allocation8 + $0x10] sm:$0xf]
    %v2750 = vld [vmem:[#allocation8 + $0x14] sm:$0xf]
    %v2751 = vld [vmem:[#allocation8 + $0x18] sm:$0xf]
    %v2752 = vld [vmem:[#allocation8 + $0x1c] sm:$0xf]
    %v2753 = vld [vmem:[#allocation8 + $0x20] sm:$0xf]
    %v2754 = vld [vmem:[#allocation8 + $0x24] sm:$0xf]
    %v2755 = vld [vmem:[#allocation8 + $0x28] sm:$0xf]
    %v2756 = vld [vmem:[#allocation8 + $0x2c] sm:$0xf]
    %v2757 = vld [vmem:[#allocation8 + $0x30] sm:$0xf]
    %v2758 = vld [vmem:[#allocation8 + $0x34] sm:$0xf]
    %v2759 = vld [vmem:[#allocation8 + $0x38] sm:$0xf]
    %v2760 = vld [vmem:[#allocation8 + $0x3c] sm:$0xf]
    %v2761 = vld [vmem:[%s6] sm:$0x1]
    %v2763 = vlaneseq
    %v2764 = vshrl.u32 %v2763, 7
    %v2765 = vsub.s32 0, %v2764
    %v2766 = vrot.slane %v2761, %v2765
    %v2784 = vunpack.c.l.b16 %v2745
    %v2785 = vunpack.c.l.b16 %v2746
    %v2786 = vunpack.c.l.b16 %v2747
    %v2787 = vunpack.c.l.b16 %v2748
    %v2788 = vunpack.c.l.b16 %v2749
    %v2789 = vunpack.c.l.b16 %v2750
    %v2790 = vunpack.c.l.b16 %v2751
    %v2791 = vunpack.c.l.b16 %v2752
    %v2792 = vunpack.c.l.b16 %v2753
    %v2793 = vunpack.c.l.b16 %v2754
    %v2794 = vunpack.c.l.b16 %v2755
    %v2795 = vunpack.c.l.b16 %v2756
    %v2796 = vunpack.c.l.b16 %v2757
    %v2797 = vunpack.c.l.b16 %v2758
    %v2798 = vunpack.c.l.b16 %v2759
    %v2799 = vunpack.c.l.b16 %v2760
    %v2800 = vpack.c.b16 %v2785, %v2784
    %v2801 = vpack.c.b16 %v2787, %v2786
    %v2802 = vpack.c.b16 %v2789, %v2788
    %v2803 = vpack.c.b16 %v2791, %v2790
    %v2804 = vpack.c.b16 %v2793, %v2792
    %v2805 = vpack.c.b16 %v2795, %v2794
    %v2806 = vpack.c.b16 %v2797, %v2796
    %v2807 = vpack.c.b16 %v2799, %v2798
    %2816 = vmatprep.subr.bf16.mxu0 0
    %2817 = vmatpush1.bf16.msra.mxu0 %v2800
    %2818 = vmatprep.subr.bf16.mxu0 0
    %2819 = vmatpush1.bf16.msra.mxu0 %v2801
    %2820 = vmatprep.subr.bf16.mxu0 0
    %2821 = vmatpush1.bf16.msra.mxu0 %v2802
    %2822 = vmatprep.subr.bf16.mxu0 0
    %2823 = vmatpush1.bf16.msra.mxu0 %v2803
    %2824 = vmatprep.subr.bf16.mxu0 0
    %2825 = vmatpush1.bf16.msra.mxu0 %v2804
    %2826 = vmatprep.subr.bf16.mxu0 0
    %2827 = vmatpush1.bf16.msra.mxu0 %v2805
    %2828 = vmatprep.subr.bf16.mxu0 0
    %2829 = vmatpush1.bf16.msra.mxu0 %v2806
    %2830 = vmatprep.subr.bf16.mxu0 0
    %2831 = vmatpush1.bf16.msra.mxu0 %v2807
    %2832 = vmatprep.subr.bf16.mxu0 0
    %2833 = vmatpush1.bf16.msra.mxu0 0
    %2834 = vmatprep.subr.bf16.mxu0 0
    %2835 = vmatpush1.bf16.msra.mxu0 0
    %2836 = vmatprep.subr.bf16.mxu0 0
    %2837 = vmatpush1.bf16.msra.mxu0 0
    %2838 = vmatprep.subr.bf16.mxu0 0
    %2839 = vmatpush1.bf16.msra.mxu0 0
    %2840 = vmatprep.subr.bf16.mxu0 0
    %2841 = vmatpush1.bf16.msra.mxu0 0
    %2842 = vmatprep.subr.bf16.mxu0 0
    %2843 = vmatpush1.bf16.msra.mxu0 0
    %2844 = vmatprep.subr.bf16.mxu0 0
    %2845 = vmatpush1.bf16.msra.mxu0 0
    %2846 = vmatprep.subr.bf16.mxu0 0
    %2847 = vmatpush1.bf16.msra.mxu0 0
    %2848 = vmatprep.mubr.bf16.mxu0 0
    %2849 = vmatmul.mubr.bf16.gmra.mrb[0].mxu0 %v2729
    %v2850 = vpop.f32.mrb[0].mxu0
    %v2851 = vadd.f32 %v2766, %v2850
    %v2852 = vpop.f32.mrb[0].mxu0
    %v2853 = vpop.f32.mrb[0].mxu0
    %v2854 = vadd.f32 %v2766, %v2853
    %v2855 = vpop.f32.mrb[0].mxu0
    %2856 = vmatprep.mubr.bf16.mxu0 0
    %2857 = vmatmul.mubr.bf16.gmra.mrb[0].mxu0 %v2730
    %v2858 = vpop.f32.mrb[0].mxu0
    %v2859 = vadd.f32 %v2766, %v2858
    %v2860 = vpop.f32.mrb[0].mxu0
    %v2861 = vpop.f32.mrb[0].mxu0
    %v2862 = vadd.f32 %v2766, %v2861
    %v2863 = vpop.f32.mrb[0].mxu0
    %2864 = vmatprep.mubr.bf16.mxu0 0
    %2865 = vmatmul.mubr.bf16.gmra.mrb[0].mxu0 %v2731
    %v2866 = vpop.f32.mrb[0].mxu0
    %v2867 = vadd.f32 %v2766, %v2866
    %v2868 = vpop.f32.mrb[0].mxu0
    %v2869 = vpop.f32.mrb[0].mxu0
    %v2870 = vadd.f32 %v2766, %v2869
    %v2871 = vpop.f32.mrb[0].mxu0
    %2872 = vmatprep.mubr.bf16.mxu0 0
    %2873 = vmatmul.mubr.bf16.gmra.mrb[0].mxu0 %v2732
    %v2874 = vpop.f32.mrb[0].mxu0
    %v2875 = vadd.f32 %v2766, %v2874
    %v2876 = vpop.f32.mrb[0].mxu0
    %v2877 = vpop.f32.mrb[0].mxu0
    %v2878 = vadd.f32 %v2766, %v2877
    %v2879 = vpop.f32.mrb[0].mxu0
    %2880 = vmatprep.mubr.bf16.mxu0 0
    %2881 = vmatmul.mubr.bf16.gmra.mrb[0].mxu0 %v2733
    %v2882 = vpop.f32.mrb[0].mxu0
    %v2883 = vadd.f32 %v2766, %v2882
    %v2884 = vpop.f32.mrb[0].mxu0
    %v2885 = vpop.f32.mrb[0].mxu0
    %v2886 = vadd.f32 %v2766, %v2885
    %v2887 = vpop.f32.mrb[0].mxu0
    %2888 = vmatprep.mubr.bf16.mxu0 0
    %2889 = vmatmul.mubr.bf16.gmra.mrb[0].mxu0 %v2734
    %v2890 = vpop.f32.mrb[0].mxu0
    %v2891 = vadd.f32 %v2766, %v2890
    %v2892 = vpop.f32.mrb[0].mxu0
    %v2893 = vpop.f32.mrb[0].mxu0
    %v2894 = vadd.f32 %v2766, %v2893
    %v2895 = vpop.f32.mrb[0].mxu0
    %2896 = vmatprep.mubr.bf16.mxu0 0
    %2897 = vmatmul.mubr.bf16.gmra.mrb[0].mxu0 %v2735
    %v2898 = vpop.f32.mrb[0].mxu0
    %v2899 = vadd.f32 %v2766, %v2898
    %v2900 = vpop.f32.mrb[0].mxu0
    %v2901 = vpop.f32.mrb[0].mxu0
    %v2902 = vadd.f32 %v2766, %v2901
    %v2903 = vpop.f32.mrb[0].mxu0
    %2904 = vmatprep.mubr.bf16.mxu0 0
    %2905 = vmatmul.mubr.bf16.gmra.mrb[0].mxu0 %v2736
    %v2906 = vpop.f32.mrb[0].mxu0
    %v2907 = vadd.f32 %v2766, %v2906
    %v2908 = vpop.f32.mrb[0].mxu0
    %v2909 = vpop.f32.mrb[0].mxu0
    %v2910 = vadd.f32 %v2766, %v2909
    %v2911 = vpop.f32.mrb[0].mxu0
    %2912 = vmatprep.mubr.bf16.mxu0 0
    %2913 = vmatmul.mubr.bf16.gmra.mrb[0].mxu0 %v2737
    %v2914 = vpop.f32.mrb[0].mxu0
    %v2915 = vadd.f32 %v2766, %v2914
    %v2916 = vpop.f32.mrb[0].mxu0
    %v2917 = vpop.f32.mrb[0].mxu0
    %v2918 = vadd.f32 %v2766, %v2917
    %v2919 = vpop.f32.mrb[0].mxu0
    %2920 = vmatprep.mubr.bf16.mxu0 0
    %2921 = vmatmul.mubr.bf16.gmra.mrb[0].mxu0 %v2738
    %v2922 = vpop.f32.mrb[0].mxu0
    %v2923 = vadd.f32 %v2766, %v2922
    %v2924 = vpop.f32.mrb[0].mxu0
    %v2925 = vpop.f32.mrb[0].mxu0
    %v2926 = vadd.f32 %v2766, %v2925
    %v2927 = vpop.f32.mrb[0].mxu0
    %2928 = vmatprep.mubr.bf16.mxu0 0
    %2929 = vmatmul.mubr.bf16.gmra.mrb[0].mxu0 %v2739
    %v2930 = vpop.f32.mrb[0].mxu0
    %v2931 = vadd.f32 %v2766, %v2930
    %v2932 = vpop.f32.mrb[0].mxu0
    %v2933 = vpop.f32.mrb[0].mxu0
    %v2934 = vadd.f32 %v2766, %v2933
    %v2935 = vpop.f32.mrb[0].mxu0
    %2936 = vmatprep.mubr.bf16.mxu0 0
    %2937 = vmatmul.mubr.bf16.gmra.mrb[0].mxu0 %v2740
    %v2938 = vpop.f32.mrb[0].mxu0
    %v2939 = vadd.f32 %v2766, %v2938
    %v2940 = vpop.f32.mrb[0].mxu0
    %v2941 = vpop.f32.mrb[0].mxu0
    %v2942 = vadd.f32 %v2766, %v2941
    %v2943 = vpop.f32.mrb[0].mxu0
    %2944 = vmatprep.mubr.bf16.mxu0 0
    %2945 = vmatmul.mubr.bf16.gmra.mrb[0].mxu0 %v2741
    %v2946 = vpop.f32.mrb[0].mxu0
    %v2947 = vadd.f32 %v2766, %v2946
    %v2948 = vpop.f32.mrb[0].mxu0
    %v2949 = vpop.f32.mrb[0].mxu0
    %v2950 = vadd.f32 %v2766, %v2949
    %v2951 = vpop.f32.mrb[0].mxu0
    %2952 = vmatprep.mubr.bf16.mxu0 0
    %2953 = vmatmul.mubr.bf16.gmra.mrb[0].mxu0 %v2742
    %v2954 = vpop.f32.mrb[0].mxu0
    %v2955 = vadd.f32 %v2766, %v2954
    %v2956 = vpop.f32.mrb[0].mxu0
    %v2957 = vpop.f32.mrb[0].mxu0
    %v2958 = vadd.f32 %v2766, %v2957
    %v2959 = vpop.f32.mrb[0].mxu0
    %2960 = vmatprep.mubr.bf16.mxu0 0
    %2961 = vmatmul.mubr.bf16.gmra.mrb[0].mxu0 %v2743
    %v2962 = vpop.f32.mrb[0].mxu0
    %v2963 = vadd.f32 %v2766, %v2962
    %v2964 = vpop.f32.mrb[0].mxu0
    %v2965 = vpop.f32.mrb[0].mxu0
    %v2966 = vadd.f32 %v2766, %v2965
    %v2967 = vpop.f32.mrb[0].mxu0
    %2968 = vmatprep.mubr.bf16.mxu0 0
    %2969 = vmatmul.mubr.bf16.gmra.mrb[0].mxu0 %v2744
    %v2970 = vpop.f32.mrb[0].mxu0
    %v2971 = vadd.f32 %v2766, %v2970
    %v2972 = vpop.f32.mrb[0].mxu0
    %v2973 = vpop.f32.mrb[0].mxu0
    %v2974 = vadd.f32 %v2766, %v2973
    %v2975 = vpop.f32.mrb[0].mxu0
    %2976 = vdwg.mxu0
    %2977 = vst [vmem:[#allocation10] sm:$0xff] %v2851
    %2978 = vst [vmem:[#allocation10 + $0x8] sm:$0xff] %v2854
    %2979 = vst [vmem:[#allocation10 + $0x10] sm:$0xff] %v2859
    %2980 = vst [vmem:[#allocation10 + $0x18] sm:$0xff] %v2862
    %2981 = vst [vmem:[#allocation10 + $0x20] sm:$0xff] %v2867
    %2982 = vst [vmem:[#allocation10 + $0x28] sm:$0xff] %v2870
    %2983 = vst [vmem:[#allocation10 + $0x30] sm:$0xff] %v2875
    %2984 = vst [vmem:[#allocation10 + $0x38] sm:$0xff] %v2878
    %2985 = vst [vmem:[#allocation10 + $0x40] sm:$0xff] %v2883
    %2986 = vst [vmem:[#allocation10 + $0x48] sm:$0xff] %v2886
    %2987 = vst [vmem:[#allocation10 + $0x50] sm:$0xff] %v2891
    %2988 = vst [vmem:[#allocation10 + $0x58] sm:$0xff] %v2894
    %2989 = vst [vmem:[#allocation10 + $0x60] sm:$0xff] %v2899
    %2990 = vst [vmem:[#allocation10 + $0x68] sm:$0xff] %v2902
    %2991 = vst [vmem:[#allocation10 + $0x70] sm:$0xff] %v2907
    %2992 = vst [vmem:[#allocation10 + $0x78] sm:$0xff] %v2910
    %2993 = vst [vmem:[#allocation10 + $0x80] sm:$0xff] %v2915
    %2994 = vst [vmem:[#allocation10 + $0x88] sm:$0xff] %v2918
    %2995 = vst [vmem:[#allocation10 + $0x90] sm:$0xff] %v2923
    %2996 = vst [vmem:[#allocation10 + $0x98] sm:$0xff] %v2926
    %2997 = vst [vmem:[#allocation10 + $0xa0] sm:$0xff] %v2931
    %2998 = vst [vmem:[#allocation10 + $0xa8] sm:$0xff] %v2934
    %2999 = vst [vmem:[#allocation10 + $0xb0] sm:$0xff] %v2939
    %3000 = vst [vmem:[#allocation10 + $0xb8] sm:$0xff] %v2942
    %3001 = vst [vmem:[#allocation10 + $0xc0] sm:$0xff] %v2947
    %3002 = vst [vmem:[#allocation10 + $0xc8] sm:$0xff] %v2950
    %3003 = vst [vmem:[#allocation10 + $0xd0] sm:$0xff] %v2955
    %3004 = vst [vmem:[#allocation10 + $0xd8] sm:$0xff] %v2958
    %3005 = vst [vmem:[#allocation10 + $0xe0] sm:$0xff] %v2963
    %3006 = vst [vmem:[#allocation10 + $0xe8] sm:$0xff] %v2966
    %3007 = vst [vmem:[#allocation10 + $0xf0] sm:$0xff] %v2971
    %3008 = vst [vmem:[#allocation10 + $0xf8] sm:$0xff] %v2974
    // Predicated region
    $region46: #{tpu_custom_call.1} parent=1 // pred_check
      _
    $region47: #{tpu_custom_call.1} parent=1 // pred_check_branch
      %3010 = sbr.rel (0) target = $region49
    $region48: #{tpu_custom_call.1} parent=1 // pred_region
      %s3012 = ssub.s32 4096, 4096
      %3013 = vsyncadd [#allocation4], %s3012
      %s3014 = sshll.u32 [#allocation10], 4
      %s3015 = int_to_ptr.vmem [resolvable:$true] %s3014
      %3020 = dma.vmem_to_hbm [thread:$0]  %s3015, 4096, %s7, [#allocation4], 128, 128, 8
    $region49: #{tpu_custom_call.1} parent=1 // pred_fallthru
      _
    // Predicated region
    $region50: #{tpu_custom_call.1} parent=1 // pred_check
      _
    $region51: #{tpu_custom_call.1} parent=1 // pred_check_branch
      %3022 = sbr.rel (0) target = $region53
    $region52: #{tpu_custom_call.1} parent=1 // pred_region
      %3023 = dma.done [#allocation4], 4096
    $region53: #{tpu_custom_call.1} parent=1 // pred_fallthru
      _
    %3024 = vsyncpa [#allocation3], 1
    %3025 = vsyncpa [#allocation6], 1
    %3026 = vsyncpa [#allocation9], 1
    %3027 = vsyncpa [#allocation4], 1

</llo_original>
